<compile_context>
chip_gen: v6e
topology: v6e:2x2x1
jax: 0.10.0
libtpu: 0.0.40
codegen_flags: <defaults>
</compile_context>

<pallas_src>
import math
from functools import partial

import jax
import jax.numpy as jnp
from jax import lax
from jax.experimental import pallas as pl
from jax.experimental.pallas import tpu as pltpu

D_MODEL = 32
D_FF = 64
HEADS = 4
NUM_LAYERS = 2
EPS = 1e-6


# ---------------------------------------------------------------- helpers ---
def _layer_norm(x, g, b):
    # one-pass variance: var = E[x^2] - mu^2 (one cross-lane reduction fewer)
    mu = jnp.mean(x, axis=-1, keepdims=True)
    var = jnp.maximum(jnp.mean(x * x, axis=-1, keepdims=True) - mu * mu, 0.0)
    return (x - mu) * lax.rsqrt(var + EPS) * g + b


def _gelu(x):
    # BertSum uses the tanh approximation of GELU.
    c = math.sqrt(2.0 / math.pi)
    return 0.5 * x * (1.0 + jnp.tanh(c * (x + 0.044715 * x * x * x)))


# ----------------------------------------------------- fused forward kernel --
def _fused_kernel(tv_ref, maskc_ref, kbias_ref, pe_ref,
                  ln1_ref, wqkv_ref, bqkv_ref, wo_ref, bo_ref,
                  ln2_ref, w1_ref, b1_ref, w2_ref, b2_ref,
                  fln_ref, fw_ref, fb_ref,
                  o_ref, *, heads, num_layers):
    S, D = tv_ref.shape
    dh = D // heads
    scale = 1.0 / math.sqrt(dh)
    bf16 = jnp.bfloat16

    maskc = maskc_ref[...]                        # (S, 1), 1.0 = valid sentence
    kbias = kbias_ref[...][None, :, :]            # (1, 1, S) additive key-pad bias
    # prologue: zero padded sentences, add positional encoding
    x = tv_ref[...] * maskc + pe_ref[...]         # (S, D) f32

    for li in range(num_layers):                  # statically unrolled (L is small)
        if li != 0:
            ln1 = ln1_ref[li]
            xn = _layer_norm(x, ln1[0:1], ln1[1:2])
        else:
            xn = x

        # ---- fused QKV projection: one (S,D)x(D,3D) bf16 MXU matmul ----------
        qkv = jnp.dot(xn.astype(bf16), wqkv_ref[li],
                      preferred_element_type=jnp.float32) + bqkv_ref[li]   # (S,3D) f32
        qh = (qkv[:, 0 * D:1 * D] * scale).reshape(S, heads, dh).astype(bf16)
        kh = qkv[:, 1 * D:2 * D].reshape(S, heads, dh).astype(bf16)
        vh = qkv[:, 2 * D:3 * D].reshape(S, heads, dh).astype(bf16)

        # ---- attention scores / softmax in f32 --------------------------------
        s = jnp.einsum('qhd,khd->hqk', qh, kh,
                       preferred_element_type=jnp.float32) + kbias         # (H,S,S)
        p = jnp.exp(s - jnp.max(s, axis=-1, keepdims=True))
        p = p * pl.reciprocal(jnp.sum(p, axis=-1, keepdims=True), approx=True)
        ctx = jnp.einsum('hqk,khd->qhd', p.astype(bf16), vh,
                         preferred_element_type=jnp.float32)               # (S,H,dh)

        # ---- head merge + output projection as one (S,D)x(D,D) matmul ---------
        attn = jnp.dot(ctx.reshape(S, D).astype(bf16), wo_ref[li],
                       preferred_element_type=jnp.float32) + bo_ref[li]
        out = attn + x                            # dropout = identity (inference)

        # ---- PositionwiseFeedForward: LN -> gelu(W1) -> W2 -> residual --------
        ln2 = ln2_ref[li]
        hn = _layer_norm(out, ln2[0:1], ln2[1:2])
        inter = _gelu(jnp.dot(hn.astype(bf16), w1_ref[li],
                              preferred_element_type=jnp.float32) + b1_ref[li])
        ffn = jnp.dot(inter.astype(bf16), w2_ref[li],
                      preferred_element_type=jnp.float32) + b2_ref[li]
        x = ffn + out

    # ---- final LayerNorm + scoring linear + sigmoid, masked -------------------
    fln = fln_ref[...]
    xn = _layer_norm(x, fln[0:1], fln[1:2])
    logit = jnp.dot(xn, fw_ref[...], preferred_element_type=jnp.float32) + fb_ref[...]
    o_ref[...] = pl.reciprocal(1.0 + jnp.exp(-logit), approx=True) * maskc


def _full_spec(shape):
    zeros = (0,) * len(shape)
    return pl.BlockSpec(shape, lambda b: zeros)


# ------------------------------------------------ host-side parameter packing
def pack_params(params, *, compute_dtype=jnp.bfloat16):
    """Pack / relayout weights ONCE at model load (hoisted out of the forward)."""
    layers = params["layers"]

    def stack(fn):
        return jnp.stack([fn(lp) for lp in layers], axis=0)

    fin = params["final"]
    return {
        "ln1": stack(lambda lp: jnp.concatenate([lp["ln1_g"], lp["ln1_b"]], 0)),       # (L,2,D)
        "wqkv": stack(lambda lp: jnp.concatenate(
            [lp["wq"], lp["wk"], lp["wv"]], 1)).astype(compute_dtype),                  # (L,D,3D)
        "bqkv": stack(lambda lp: jnp.concatenate([lp["bq"], lp["bk"], lp["bv"]], 1)),    # (L,1,3D)
        "wo": stack(lambda lp: lp["wo"]).astype(compute_dtype),                          # (L,D,D)
        "bo": stack(lambda lp: lp["bo"]),                                                # (L,1,D)
        "ln2": stack(lambda lp: jnp.concatenate([lp["ln2_g"], lp["ln2_b"]], 0)),         # (L,2,D)
        "w1": stack(lambda lp: lp["w1"]).astype(compute_dtype),                          # (L,D,F)
        "b1": stack(lambda lp: lp["b1"]),                                                # (L,1,F)
        "w2": stack(lambda lp: lp["w2"]).astype(compute_dtype),                          # (L,F,D)
        "b2": stack(lambda lp: lp["b2"]),                                                # (L,1,D)
        "fln": jnp.concatenate([fin["ln_g"], fin["ln_b"]], 0),                           # (2,D)
        "fw": fin["wo_w"].reshape(-1, 1),                                                # (D,1)
        "fb": fin["wo_b"],                                                               # (1,1)
    }


# -------------------------------------------------------------- full model ---
def ext_transformer_encoder(top_vecs, mask_bool, packed, pe, *, heads=HEADS):
    B, S, D = top_vecs.shape
    L = packed["ln1"].shape[0]
    maskf = mask_bool.astype(jnp.float32)
    mask_col = maskf[:, :, None]                                  # (B,S,1) 1 = valid
    kbias = ((1.0 - maskf) * jnp.float32(-1e18))[:, None, :]      # (B,1,S) additive
    pe_s = pe[:S]

    weights = (packed["ln1"], packed["wqkv"], packed["bqkv"], packed["wo"],
               packed["bo"], packed["ln2"], packed["w1"], packed["b1"],
               packed["w2"], packed["b2"], packed["fln"], packed["fw"],
               packed["fb"])

    in_specs = [
        pl.BlockSpec((None, S, D), lambda b: (b, 0, 0)),   # top_vecs, per-batch slice
        pl.BlockSpec((None, S, 1), lambda b: (b, 0, 0)),   # mask column
        pl.BlockSpec((None, 1, S), lambda b: (b, 0, 0)),   # key-padding bias row
        pl.BlockSpec((S, D), lambda b: (0, 0)),            # positional encoding
    ] + [_full_spec(w.shape) for w in weights]             # weights resident (const idx)

    out = pl.pallas_call(
        partial(_fused_kernel, heads=heads, num_layers=L),
        out_shape=jax.ShapeDtypeStruct((B, S, 1), jnp.float32),
        grid=(B,),
        in_specs=in_specs,
        out_specs=pl.BlockSpec((None, S, 1), lambda b: (b, 0, 0)),
        compiler_params=pltpu.CompilerParams(
            dimension_semantics=("parallel",)),             # shards batch over v7x TCs
    )(top_vecs, mask_col, kbias, pe_s, *weights)
    return out.reshape(B, S)


# -------------------------------------------------------- parameters / pe ----
def make_pe(max_len, dim):
    position = jnp.arange(max_len, dtype=jnp.float32)[:, None]
    div_term = jnp.exp(jnp.arange(0, dim, 2, dtype=jnp.float32)
                       * -(math.log(10000.0) / dim))
    pe = jnp.zeros((max_len, dim), jnp.float32)
    pe = pe.at[:, 0::2].set(jnp.sin(position * div_term))
    pe = pe.at[:, 1::2].set(jnp.cos(position * div_term))
    return pe


def init_params(key, d_model, d_ff, num_layers):
    keys = jax.random.split(key, num_layers * 6 + 1)

    def dense(k, fan_in, fan_out):
        return jax.random.normal(k, (fan_in, fan_out), jnp.float32) * 0.02

    layers = []
    ki = 0
    for _ in range(num_layers):
        lp = {
            "ln1_g": jnp.ones((1, d_model), jnp.float32),
            "ln1_b": jnp.zeros((1, d_model), jnp.float32),
            "wq": dense(keys[ki + 0], d_model, d_model),
            "bq": jnp.zeros((1, d_model), jnp.float32),
            "wk": dense(keys[ki + 1], d_model, d_model),
            "bk": jnp.zeros((1, d_model), jnp.float32),
            "wv": dense(keys[ki + 2], d_model, d_model),
            "bv": jnp.zeros((1, d_model), jnp.float32),
            "wo": dense(keys[ki + 3], d_model, d_model),
            "bo": jnp.zeros((1, d_model), jnp.float32),
            "ln2_g": jnp.ones((1, d_model), jnp.float32),
            "ln2_b": jnp.zeros((1, d_model), jnp.float32),
            "w1": dense(keys[ki + 4], d_model, d_ff),
            "b1": jnp.zeros((1, d_ff), jnp.float32),
            "w2": dense(keys[ki + 5], d_ff, d_model),
            "b2": jnp.zeros((1, d_model), jnp.float32),
        }
        ki += 6
        layers.append(lp)
    final = {
        "ln_g": jnp.ones((1, d_model), jnp.float32),
        "ln_b": jnp.zeros((1, d_model), jnp.float32),
        "wo_w": jax.random.normal(keys[-1], (1, d_model), jnp.float32) * 0.02,
        "wo_b": jnp.zeros((1, 1), jnp.float32),
    }
    return {"layers": layers, "final": final}


# ------------------------------------------------------- pure-JAX reference --
def reference(top_vecs, mask_b, params, pe, heads):
    maskf = mask_b.astype(jnp.float32)
    B, S, D = top_vecs.shape
    x = top_vecs * maskf[:, :, None] + pe[:S][None]
    pad = 1.0 - maskf
    for i, p in enumerate(params["layers"]):
        xn = _layer_norm(x, p["ln1_g"][0], p["ln1_b"][0]) if i != 0 else x
        q = xn @ p["wq"] + p["bq"][0]
        k = xn @ p["wk"] + p["bk"][0]
        v = xn @ p["wv"] + p["bv"][0]
        dh = D // heads
        qh = q.reshape(B, S, heads, dh).transpose(0, 2, 1, 3) / math.sqrt(dh)
        kh = k.reshape(B, S, heads, dh).transpose(0, 2, 1, 3)
        vh = v.reshape(B, S, heads, dh).transpose(0, 2, 1, 3)
        s = jnp.einsum("bhqd,bhkd->bhqk", qh, kh)
        s = jnp.where(pad[:, None, None, :] > 0.5, -1e18, s)
        attn = jax.nn.softmax(s, axis=-1)
        ctx = jnp.einsum("bhqk,bhkd->bhqd", attn, vh)
        ctx = ctx.transpose(0, 2, 1, 3).reshape(B, S, D)
        out = ctx @ p["wo"] + p["bo"][0] + x
        hn = _layer_norm(out, p["ln2_g"][0], p["ln2_b"][0])
        inter = _gelu(hn @ p["w1"] + p["b1"][0])
        x = inter @ p["w2"] + p["b2"][0] + out
    f = params["final"]
    xn = _layer_norm(x, f["ln_g"][0], f["ln_b"][0])
    logit = jnp.sum(xn * f["wo_w"][0][None, None, :], axis=-1) + f["wo_b"][0, 0]
    return jax.nn.sigmoid(logit) * maskf


# --------------------------------------------------------------------- main --
if __name__ == "__main__":
    B, S = 2, 8
    key = jax.random.PRNGKey(0)
    k1, k2 = jax.random.split(key)

    top_vecs = jax.random.normal(k1, (B, S, D_MODEL), jnp.float32)
    lengths = jnp.array([S, 5])
    mask = jnp.arange(S)[None, :] < lengths[:, None]    # bool, True = valid sentence

    params = init_params(k2, D_MODEL, D_FF, NUM_LAYERS)
    packed = pack_params(params)          # one-time host-side weight packing
    pe = make_pe(5000, D_MODEL)

    out = ext_transformer_encoder(top_vecs, mask, packed, pe)
    out = jax.block_until_ready(out)

    ref = reference(top_vecs, mask, params, pe, HEADS)   # pure-f32 reference
    assert out.shape == (B, S)
    # bf16 matmul operands (f32 accumulation) -> looser tolerance than pure f32
    assert bool(jnp.allclose(out, ref, atol=2.5e-2, rtol=2.5e-2)), "mismatch vs reference"
    print("KERNEL_OK")
</pallas_src>

<mosaic_0001>
module attributes {stable_mosaic.version = 11 : i64} {
  func.func @_fused_kernel(%arg0: i32, %arg1: memref<1x8x32xf32, #tpu.memory_space<vmem>>, %arg2: memref<1x8x1xf32, #tpu.memory_space<vmem>>, %arg3: memref<1x1x8xf32, #tpu.memory_space<vmem>>, %arg4: memref<8x32xf32, #tpu.memory_space<vmem>>, %arg5: memref<2x2x32xf32, #tpu.memory_space<vmem>>, %arg6: memref<2x32x96xbf16, #tpu.memory_space<vmem>>, %arg7: memref<2x1x96xf32, #tpu.memory_space<vmem>>, %arg8: memref<2x32x32xbf16, #tpu.memory_space<vmem>>, %arg9: memref<2x1x32xf32, #tpu.memory_space<vmem>>, %arg10: memref<2x2x32xf32, #tpu.memory_space<vmem>>, %arg11: memref<2x32x64xbf16, #tpu.memory_space<vmem>>, %arg12: memref<2x1x64xf32, #tpu.memory_space<vmem>>, %arg13: memref<2x64x32xbf16, #tpu.memory_space<vmem>>, %arg14: memref<2x1x32xf32, #tpu.memory_space<vmem>>, %arg15: memref<2x32xf32, #tpu.memory_space<vmem>>, %arg16: memref<32x1xf32, #tpu.memory_space<vmem>>, %arg17: memref<1x1xf32, #tpu.memory_space<vmem>>, %arg18: memref<1x8x1xf32, #tpu.memory_space<vmem>>) attributes {dimension_semantics = [#tpu.dimension_semantics<parallel>], iteration_bounds = array<i64: 2>, scalar_prefetch = 0 : i64, scratch_operands = 0 : i64, tpu.core_type = #tpu.core_type<tc>, window_params = [{transform_indices = @transform_0, window_bounds = array<i64: 1, 8, 32>}, {transform_indices = @transform_1, window_bounds = array<i64: 1, 8, 1>}, {transform_indices = @transform_2, window_bounds = array<i64: 1, 1, 8>}, {pipeline_mode = #tpu.pipeline_mode<synchronous>, transform_indices = @transform_3, window_bounds = array<i64: 8, 32>}, {pipeline_mode = #tpu.pipeline_mode<synchronous>, transform_indices = @transform_4, window_bounds = array<i64: 2, 2, 32>}, {pipeline_mode = #tpu.pipeline_mode<synchronous>, transform_indices = @transform_5, window_bounds = array<i64: 2, 32, 96>}, {pipeline_mode = #tpu.pipeline_mode<synchronous>, transform_indices = @transform_6, window_bounds = array<i64: 2, 1, 96>}, {pipeline_mode = #tpu.pipeline_mode<synchronous>, transform_indices = @transform_7, window_bounds = array<i64: 2, 32, 32>}, {pipeline_mode = #tpu.pipeline_mode<synchronous>, transform_indices = @transform_8, window_bounds = array<i64: 2, 1, 32>}, {pipeline_mode = #tpu.pipeline_mode<synchronous>, transform_indices = @transform_9, window_bounds = array<i64: 2, 2, 32>}, {pipeline_mode = #tpu.pipeline_mode<synchronous>, transform_indices = @transform_10, window_bounds = array<i64: 2, 32, 64>}, {pipeline_mode = #tpu.pipeline_mode<synchronous>, transform_indices = @transform_11, window_bounds = array<i64: 2, 1, 64>}, {pipeline_mode = #tpu.pipeline_mode<synchronous>, transform_indices = @transform_12, window_bounds = array<i64: 2, 64, 32>}, {pipeline_mode = #tpu.pipeline_mode<synchronous>, transform_indices = @transform_13, window_bounds = array<i64: 2, 1, 32>}, {pipeline_mode = #tpu.pipeline_mode<synchronous>, transform_indices = @transform_14, window_bounds = array<i64: 2, 32>}, {pipeline_mode = #tpu.pipeline_mode<synchronous>, transform_indices = @transform_15, window_bounds = array<i64: 32, 1>}, {pipeline_mode = #tpu.pipeline_mode<synchronous>, transform_indices = @transform_16, window_bounds = array<i64: 1, 1>}, {transform_indices = @transform_17, window_bounds = array<i64: 1, 8, 1>}]} {
    %c0 = arith.constant 0 : index
    %c0_0 = arith.constant 0 : index
    %c0_1 = arith.constant 0 : index
    %0 = vector.load %arg2[%c0, %c0_0, %c0_1] : memref<1x8x1xf32, #tpu.memory_space<vmem>>, vector<1x8x1xf32>
    %1 = vector.shape_cast %0 : vector<1x8x1xf32> to vector<8x1xf32>
    %c0_2 = arith.constant 0 : index
    %c0_3 = arith.constant 0 : index
    %c0_4 = arith.constant 0 : index
    %2 = vector.load %arg3[%c0_2, %c0_3, %c0_4] : memref<1x1x8xf32, #tpu.memory_space<vmem>>, vector<1x1x8xf32>
    %3 = vector.shape_cast %2 : vector<1x1x8xf32> to vector<1x8xf32>
    %4 = vector.shape_cast %3 : vector<1x8xf32> to vector<1x1x8xf32>
    %c0_5 = arith.constant 0 : index
    %c0_6 = arith.constant 0 : index
    %c0_7 = arith.constant 0 : index
    %5 = vector.load %arg1[%c0_5, %c0_6, %c0_7] : memref<1x8x32xf32, #tpu.memory_space<vmem>>, vector<1x8x32xf32>
    %6 = vector.shape_cast %5 : vector<1x8x32xf32> to vector<8x32xf32>
    %7 = vector.broadcast %1 : vector<8x1xf32> to vector<8x32xf32>
    %8 = arith.mulf %6, %7 : vector<8x32xf32>
    %c0_8 = arith.constant 0 : index
    %c0_9 = arith.constant 0 : index
    %9 = vector.load %arg4[%c0_8, %c0_9] : memref<8x32xf32, #tpu.memory_space<vmem>>, vector<8x32xf32>
    %10 = arith.addf %8, %9 : vector<8x32xf32>
    %11 = arith.truncf %10 : vector<8x32xf32> to vector<8x32xbf16>
    %c0_10 = arith.constant 0 : index
    %c0_11 = arith.constant 0 : index
    %c0_12 = arith.constant 0 : index
    %12 = vector.load %arg6[%c0_10, %c0_11, %c0_12] : memref<2x32x96xbf16, #tpu.memory_space<vmem>>, vector<1x32x96xbf16>
    %13 = vector.shape_cast %12 : vector<1x32x96xbf16> to vector<32x96xbf16>
    %cst = arith.constant dense<0.000000e+00> : vector<8x96xf32>
    %14 = tpu.matmul %11, %13, %cst {dimension_numbers = #tpu.dot_dimension_numbers<[1], [0], [0], [1], [0, 0, 1, 1], [], []>} : vector<8x32xbf16>, vector<32x96xbf16>, vector<8x96xf32> -> vector<8x96xf32>
    %c0_13 = arith.constant 0 : index
    %c0_14 = arith.constant 0 : index
    %c0_15 = arith.constant 0 : index
    %15 = vector.load %arg7[%c0_13, %c0_14, %c0_15] : memref<2x1x96xf32, #tpu.memory_space<vmem>>, vector<1x1x96xf32>
    %16 = vector.shape_cast %15 : vector<1x1x96xf32> to vector<1x96xf32>
    %17 = vector.broadcast %16 : vector<1x96xf32> to vector<8x96xf32>
    %18 = arith.addf %14, %17 : vector<8x96xf32>
    %19 = vector.extract_strided_slice %18 {offsets = [0, 0], sizes = [8, 32], strides = [1, 1]} : vector<8x96xf32> to vector<8x32xf32>
    %cst_16 = arith.constant 0.353553385 : f32
    %20 = vector.broadcast %cst_16 : f32 to vector<8x32xf32>
    %21 = arith.mulf %19, %20 : vector<8x32xf32>
    %22 = vector.shape_cast %21 : vector<8x32xf32> to vector<8x4x8xf32>
    %23 = arith.truncf %22 : vector<8x4x8xf32> to vector<8x4x8xbf16>
    %24 = vector.extract_strided_slice %18 {offsets = [0, 32], sizes = [8, 32], strides = [1, 1]} : vector<8x96xf32> to vector<8x32xf32>
    %25 = vector.shape_cast %24 : vector<8x32xf32> to vector<8x4x8xf32>
    %26 = arith.truncf %25 : vector<8x4x8xf32> to vector<8x4x8xbf16>
    %27 = vector.extract_strided_slice %18 {offsets = [0, 64], sizes = [8, 32], strides = [1, 1]} : vector<8x96xf32> to vector<8x32xf32>
    %28 = vector.shape_cast %27 : vector<8x32xf32> to vector<8x4x8xf32>
    %29 = arith.truncf %28 : vector<8x4x8xf32> to vector<8x4x8xbf16>
    "tpu.trace_start"() <{level = 10 : i32, message = "qhd,khd->hqk"}> : () -> ()
    %cst_17 = arith.constant dense<0.000000e+00> : vector<4x8x8xf32>
    %30 = tpu.matmul %23, %26, %cst_17 {dimension_numbers = #tpu.dot_dimension_numbers<[2], [2], [0], [0], [0, 1, 0, 0, 1, 0], [1], [1]>} : vector<8x4x8xbf16>, vector<8x4x8xbf16>, vector<4x8x8xf32> -> vector<4x8x8xf32>
    "tpu.trace_stop"() : () -> ()
    %31 = vector.broadcast %4 : vector<1x1x8xf32> to vector<4x8x8xf32>
    %32 = arith.addf %30, %31 : vector<4x8x8xf32>
    %cst_18 = arith.constant dense<0xFF800000> : vector<4x8xf32>
    %33 = vector.multi_reduction <maximumf>, %32, %cst_18 [2] : vector<4x8x8xf32> to vector<4x8xf32>
    %34 = vector.shape_cast %33 : vector<4x8xf32> to vector<4x8x1xf32>
    %35 = vector.broadcast %34 : vector<4x8x1xf32> to vector<4x8x8xf32>
    %36 = arith.subf %32, %35 : vector<4x8x8xf32>
    %37 = math.exp %36 : vector<4x8x8xf32>
    %cst_19 = arith.constant dense<0.000000e+00> : vector<4x8xf32>
    %38 = vector.multi_reduction <add>, %37, %cst_19 [2] : vector<4x8x8xf32> to vector<4x8xf32>
    %39 = vector.shape_cast %38 : vector<4x8xf32> to vector<4x8x1xf32>
    %40 = tpu.reciprocal %39 {approx = true} : vector<4x8x1xf32> -> vector<4x8x1xf32>
    %41 = vector.broadcast %40 : vector<4x8x1xf32> to vector<4x8x8xf32>
    %42 = arith.mulf %37, %41 : vector<4x8x8xf32>
    %43 = arith.truncf %42 : vector<4x8x8xf32> to vector<4x8x8xbf16>
    "tpu.trace_start"() <{level = 10 : i32, message = "hqk,khd->qhd"}> : () -> ()
    %cst_20 = arith.constant dense<0.000000e+00> : vector<4x8x8xf32>
    %44 = tpu.matmul %29, %43, %cst_20 {dimension_numbers = #tpu.dot_dimension_numbers<[0], [2], [2], [1], [0, 1, 0, 2, 1, 1], [1], [0]>} : vector<8x4x8xbf16>, vector<4x8x8xbf16>, vector<4x8x8xf32> -> vector<4x8x8xf32>
    %45 = tpu.transpose %44, [2, 0, 1] : vector<4x8x8xf32> -> vector<8x4x8xf32>
    "tpu.trace_stop"() : () -> ()
    %46 = vector.shape_cast %45 : vector<8x4x8xf32> to vector<8x32xf32>
    %47 = arith.truncf %46 : vector<8x32xf32> to vector<8x32xbf16>
    %c0_21 = arith.constant 0 : index
    %c0_22 = arith.constant 0 : index
    %c0_23 = arith.constant 0 : index
    %48 = vector.load %arg8[%c0_21, %c0_22, %c0_23] : memref<2x32x32xbf16, #tpu.memory_space<vmem>>, vector<1x32x32xbf16>
    %49 = vector.shape_cast %48 : vector<1x32x32xbf16> to vector<32x32xbf16>
    %cst_24 = arith.constant dense<0.000000e+00> : vector<8x32xf32>
    %50 = tpu.matmul %47, %49, %cst_24 {dimension_numbers = #tpu.dot_dimension_numbers<[1], [0], [0], [1], [0, 0, 1, 1], [], []>} : vector<8x32xbf16>, vector<32x32xbf16>, vector<8x32xf32> -> vector<8x32xf32>
    %c0_25 = arith.constant 0 : index
    %c0_26 = arith.constant 0 : index
    %c0_27 = arith.constant 0 : index
    %51 = vector.load %arg9[%c0_25, %c0_26, %c0_27] : memref<2x1x32xf32, #tpu.memory_space<vmem>>, vector<1x1x32xf32>
    %52 = vector.shape_cast %51 : vector<1x1x32xf32> to vector<1x32xf32>
    %53 = vector.broadcast %52 : vector<1x32xf32> to vector<8x32xf32>
    %54 = arith.addf %50, %53 : vector<8x32xf32>
    %55 = arith.addf %54, %10 : vector<8x32xf32>
    %c0_28 = arith.constant 0 : index
    %c0_29 = arith.constant 0 : index
    %c0_30 = arith.constant 0 : index
    %56 = vector.load %arg10[%c0_28, %c0_29, %c0_30] : memref<2x2x32xf32, #tpu.memory_space<vmem>>, vector<1x2x32xf32>
    %57 = vector.shape_cast %56 : vector<1x2x32xf32> to vector<2x32xf32>
    %58 = vector.extract_strided_slice %57 {offsets = [0, 0], sizes = [1, 32], strides = [1, 1]} : vector<2x32xf32> to vector<1x32xf32>
    %59 = vector.extract_strided_slice %57 {offsets = [1, 0], sizes = [1, 32], strides = [1, 1]} : vector<2x32xf32> to vector<1x32xf32>
    %cst_31 = arith.constant dense<0.000000e+00> : vector<8xf32>
    %60 = vector.multi_reduction <add>, %55, %cst_31 [1] : vector<8x32xf32> to vector<8xf32>
    %61 = vector.shape_cast %60 : vector<8xf32> to vector<8x1xf32>
    %cst_32 = arith.constant 3.200000e+01 : f32
    %62 = vector.broadcast %cst_32 : f32 to vector<8x1xf32>
    %63 = arith.divf %61, %62 : vector<8x1xf32>
    %64 = arith.mulf %55, %55 : vector<8x32xf32>
    %cst_33 = arith.constant dense<0.000000e+00> : vector<8xf32>
    %65 = vector.multi_reduction <add>, %64, %cst_33 [1] : vector<8x32xf32> to vector<8xf32>
    %66 = vector.shape_cast %65 : vector<8xf32> to vector<8x1xf32>
    %cst_34 = arith.constant 3.200000e+01 : f32
    %67 = vector.broadcast %cst_34 : f32 to vector<8x1xf32>
    %68 = arith.divf %66, %67 : vector<8x1xf32>
    %69 = arith.mulf %63, %63 : vector<8x1xf32>
    %70 = arith.subf %68, %69 : vector<8x1xf32>
    %cst_35 = arith.constant 0.000000e+00 : f32
    %71 = vector.broadcast %cst_35 : f32 to vector<8x1xf32>
    %72 = arith.maximumf %70, %71 : vector<8x1xf32>
    %73 = vector.broadcast %63 : vector<8x1xf32> to vector<8x32xf32>
    %74 = arith.subf %55, %73 : vector<8x32xf32>
    %cst_36 = arith.constant 9.99999997E-7 : f32
    %75 = vector.broadcast %cst_36 : f32 to vector<8x1xf32>
    %76 = arith.addf %72, %75 : vector<8x1xf32>
    %77 = math.rsqrt %76 : vector<8x1xf32>
    %78 = vector.broadcast %77 : vector<8x1xf32> to vector<8x32xf32>
    %79 = arith.mulf %74, %78 : vector<8x32xf32>
    %80 = vector.broadcast %58 : vector<1x32xf32> to vector<8x32xf32>
    %81 = arith.mulf %79, %80 : vector<8x32xf32>
    %82 = vector.broadcast %59 : vector<1x32xf32> to vector<8x32xf32>
    %83 = arith.addf %81, %82 : vector<8x32xf32>
    %84 = arith.truncf %83 : vector<8x32xf32> to vector<8x32xbf16>
    %c0_37 = arith.constant 0 : index
    %c0_38 = arith.constant 0 : index
    %c0_39 = arith.constant 0 : index
    %85 = vector.load %arg11[%c0_37, %c0_38, %c0_39] : memref<2x32x64xbf16, #tpu.memory_space<vmem>>, vector<1x32x64xbf16>
    %86 = vector.shape_cast %85 : vector<1x32x64xbf16> to vector<32x64xbf16>
    %cst_40 = arith.constant dense<0.000000e+00> : vector<8x64xf32>
    %87 = tpu.matmul %84, %86, %cst_40 {dimension_numbers = #tpu.dot_dimension_numbers<[1], [0], [0], [1], [0, 0, 1, 1], [], []>} : vector<8x32xbf16>, vector<32x64xbf16>, vector<8x64xf32> -> vector<8x64xf32>
    %c0_41 = arith.constant 0 : index
    %c0_42 = arith.constant 0 : index
    %c0_43 = arith.constant 0 : index
    %88 = vector.load %arg12[%c0_41, %c0_42, %c0_43] : memref<2x1x64xf32, #tpu.memory_space<vmem>>, vector<1x1x64xf32>
    %89 = vector.shape_cast %88 : vector<1x1x64xf32> to vector<1x64xf32>
    %90 = vector.broadcast %89 : vector<1x64xf32> to vector<8x64xf32>
    %91 = arith.addf %87, %90 : vector<8x64xf32>
    %cst_44 = arith.constant 5.000000e-01 : f32
    %92 = vector.broadcast %cst_44 : f32 to vector<8x64xf32>
    %93 = arith.mulf %92, %91 : vector<8x64xf32>
    %cst_45 = arith.constant 4.471500e-02 : f32
    %94 = vector.broadcast %cst_45 : f32 to vector<8x64xf32>
    %95 = arith.mulf %94, %91 : vector<8x64xf32>
    %96 = arith.mulf %95, %91 : vector<8x64xf32>
    %97 = arith.mulf %96, %91 : vector<8x64xf32>
    %98 = arith.addf %91, %97 : vector<8x64xf32>
    %cst_46 = arith.constant 0.797884583 : f32
    %99 = vector.broadcast %cst_46 : f32 to vector<8x64xf32>
    %100 = arith.mulf %99, %98 : vector<8x64xf32>
    %101 = math.tanh %100 : vector<8x64xf32>
    %cst_47 = arith.constant 1.000000e+00 : f32
    %102 = vector.broadcast %cst_47 : f32 to vector<8x64xf32>
    %103 = arith.addf %102, %101 : vector<8x64xf32>
    %104 = arith.mulf %93, %103 : vector<8x64xf32>
    %105 = arith.truncf %104 : vector<8x64xf32> to vector<8x64xbf16>
    %c0_48 = arith.constant 0 : index
    %c0_49 = arith.constant 0 : index
    %c0_50 = arith.constant 0 : index
    %106 = vector.load %arg13[%c0_48, %c0_49, %c0_50] : memref<2x64x32xbf16, #tpu.memory_space<vmem>>, vector<1x64x32xbf16>
    %107 = vector.shape_cast %106 : vector<1x64x32xbf16> to vector<64x32xbf16>
    %cst_51 = arith.constant dense<0.000000e+00> : vector<8x32xf32>
    %108 = tpu.matmul %105, %107, %cst_51 {dimension_numbers = #tpu.dot_dimension_numbers<[1], [0], [0], [1], [0, 0, 1, 1], [], []>} : vector<8x64xbf16>, vector<64x32xbf16>, vector<8x32xf32> -> vector<8x32xf32>
    %c0_52 = arith.constant 0 : index
    %c0_53 = arith.constant 0 : index
    %c0_54 = arith.constant 0 : index
    %109 = vector.load %arg14[%c0_52, %c0_53, %c0_54] : memref<2x1x32xf32, #tpu.memory_space<vmem>>, vector<1x1x32xf32>
    %110 = vector.shape_cast %109 : vector<1x1x32xf32> to vector<1x32xf32>
    %111 = vector.broadcast %110 : vector<1x32xf32> to vector<8x32xf32>
    %112 = arith.addf %108, %111 : vector<8x32xf32>
    %113 = arith.addf %112, %55 : vector<8x32xf32>
    %c1 = arith.constant 1 : index
    %c0_55 = arith.constant 0 : index
    %c0_56 = arith.constant 0 : index
    %114 = vector.load %arg5[%c1, %c0_55, %c0_56] : memref<2x2x32xf32, #tpu.memory_space<vmem>>, vector<1x2x32xf32>
    %115 = vector.shape_cast %114 : vector<1x2x32xf32> to vector<2x32xf32>
    %116 = vector.extract_strided_slice %115 {offsets = [0, 0], sizes = [1, 32], strides = [1, 1]} : vector<2x32xf32> to vector<1x32xf32>
    %117 = vector.extract_strided_slice %115 {offsets = [1, 0], sizes = [1, 32], strides = [1, 1]} : vector<2x32xf32> to vector<1x32xf32>
    %cst_57 = arith.constant dense<0.000000e+00> : vector<8xf32>
    %118 = vector.multi_reduction <add>, %113, %cst_57 [1] : vector<8x32xf32> to vector<8xf32>
    %119 = vector.shape_cast %118 : vector<8xf32> to vector<8x1xf32>
    %cst_58 = arith.constant 3.200000e+01 : f32
    %120 = vector.broadcast %cst_58 : f32 to vector<8x1xf32>
    %121 = arith.divf %119, %120 : vector<8x1xf32>
    %122 = arith.mulf %113, %113 : vector<8x32xf32>
    %cst_59 = arith.constant dense<0.000000e+00> : vector<8xf32>
    %123 = vector.multi_reduction <add>, %122, %cst_59 [1] : vector<8x32xf32> to vector<8xf32>
    %124 = vector.shape_cast %123 : vector<8xf32> to vector<8x1xf32>
    %cst_60 = arith.constant 3.200000e+01 : f32
    %125 = vector.broadcast %cst_60 : f32 to vector<8x1xf32>
    %126 = arith.divf %124, %125 : vector<8x1xf32>
    %127 = arith.mulf %121, %121 : vector<8x1xf32>
    %128 = arith.subf %126, %127 : vector<8x1xf32>
    %cst_61 = arith.constant 0.000000e+00 : f32
    %129 = vector.broadcast %cst_61 : f32 to vector<8x1xf32>
    %130 = arith.maximumf %128, %129 : vector<8x1xf32>
    %131 = vector.broadcast %121 : vector<8x1xf32> to vector<8x32xf32>
    %132 = arith.subf %113, %131 : vector<8x32xf32>
    %cst_62 = arith.constant 9.99999997E-7 : f32
    %133 = vector.broadcast %cst_62 : f32 to vector<8x1xf32>
    %134 = arith.addf %130, %133 : vector<8x1xf32>
    %135 = math.rsqrt %134 : vector<8x1xf32>
    %136 = vector.broadcast %135 : vector<8x1xf32> to vector<8x32xf32>
    %137 = arith.mulf %132, %136 : vector<8x32xf32>
    %138 = vector.broadcast %116 : vector<1x32xf32> to vector<8x32xf32>
    %139 = arith.mulf %137, %138 : vector<8x32xf32>
    %140 = vector.broadcast %117 : vector<1x32xf32> to vector<8x32xf32>
    %141 = arith.addf %139, %140 : vector<8x32xf32>
    %142 = arith.truncf %141 : vector<8x32xf32> to vector<8x32xbf16>
    %c1_63 = arith.constant 1 : index
    %c0_64 = arith.constant 0 : index
    %c0_65 = arith.constant 0 : index
    %143 = vector.load %arg6[%c1_63, %c0_64, %c0_65] : memref<2x32x96xbf16, #tpu.memory_space<vmem>>, vector<1x32x96xbf16>
    %144 = vector.shape_cast %143 : vector<1x32x96xbf16> to vector<32x96xbf16>
    %cst_66 = arith.constant dense<0.000000e+00> : vector<8x96xf32>
    %145 = tpu.matmul %142, %144, %cst_66 {dimension_numbers = #tpu.dot_dimension_numbers<[1], [0], [0], [1], [0, 0, 1, 1], [], []>} : vector<8x32xbf16>, vector<32x96xbf16>, vector<8x96xf32> -> vector<8x96xf32>
    %c1_67 = arith.constant 1 : index
    %c0_68 = arith.constant 0 : index
    %c0_69 = arith.constant 0 : index
    %146 = vector.load %arg7[%c1_67, %c0_68, %c0_69] : memref<2x1x96xf32, #tpu.memory_space<vmem>>, vector<1x1x96xf32>
    %147 = vector.shape_cast %146 : vector<1x1x96xf32> to vector<1x96xf32>
    %148 = vector.broadcast %147 : vector<1x96xf32> to vector<8x96xf32>
    %149 = arith.addf %145, %148 : vector<8x96xf32>
    %150 = vector.extract_strided_slice %149 {offsets = [0, 0], sizes = [8, 32], strides = [1, 1]} : vector<8x96xf32> to vector<8x32xf32>
    %cst_70 = arith.constant 0.353553385 : f32
    %151 = vector.broadcast %cst_70 : f32 to vector<8x32xf32>
    %152 = arith.mulf %150, %151 : vector<8x32xf32>
    %153 = vector.shape_cast %152 : vector<8x32xf32> to vector<8x4x8xf32>
    %154 = arith.truncf %153 : vector<8x4x8xf32> to vector<8x4x8xbf16>
    %155 = vector.extract_strided_slice %149 {offsets = [0, 32], sizes = [8, 32], strides = [1, 1]} : vector<8x96xf32> to vector<8x32xf32>
    %156 = vector.shape_cast %155 : vector<8x32xf32> to vector<8x4x8xf32>
    %157 = arith.truncf %156 : vector<8x4x8xf32> to vector<8x4x8xbf16>
    %158 = vector.extract_strided_slice %149 {offsets = [0, 64], sizes = [8, 32], strides = [1, 1]} : vector<8x96xf32> to vector<8x32xf32>
    %159 = vector.shape_cast %158 : vector<8x32xf32> to vector<8x4x8xf32>
    %160 = arith.truncf %159 : vector<8x4x8xf32> to vector<8x4x8xbf16>
    "tpu.trace_start"() <{level = 10 : i32, message = "qhd,khd->hqk"}> : () -> ()
    %cst_71 = arith.constant dense<0.000000e+00> : vector<4x8x8xf32>
    %161 = tpu.matmul %154, %157, %cst_71 {dimension_numbers = #tpu.dot_dimension_numbers<[2], [2], [0], [0], [0, 1, 0, 0, 1, 0], [1], [1]>} : vector<8x4x8xbf16>, vector<8x4x8xbf16>, vector<4x8x8xf32> -> vector<4x8x8xf32>
    "tpu.trace_stop"() : () -> ()
    %162 = vector.broadcast %4 : vector<1x1x8xf32> to vector<4x8x8xf32>
    %163 = arith.addf %161, %162 : vector<4x8x8xf32>
    %cst_72 = arith.constant dense<0xFF800000> : vector<4x8xf32>
    %164 = vector.multi_reduction <maximumf>, %163, %cst_72 [2] : vector<4x8x8xf32> to vector<4x8xf32>
    %165 = vector.shape_cast %164 : vector<4x8xf32> to vector<4x8x1xf32>
    %166 = vector.broadcast %165 : vector<4x8x1xf32> to vector<4x8x8xf32>
    %167 = arith.subf %163, %166 : vector<4x8x8xf32>
    %168 = math.exp %167 : vector<4x8x8xf32>
    %cst_73 = arith.constant dense<0.000000e+00> : vector<4x8xf32>
    %169 = vector.multi_reduction <add>, %168, %cst_73 [2] : vector<4x8x8xf32> to vector<4x8xf32>
    %170 = vector.shape_cast %169 : vector<4x8xf32> to vector<4x8x1xf32>
    %171 = tpu.reciprocal %170 {approx = true} : vector<4x8x1xf32> -> vector<4x8x1xf32>
    %172 = vector.broadcast %171 : vector<4x8x1xf32> to vector<4x8x8xf32>
    %173 = arith.mulf %168, %172 : vector<4x8x8xf32>
    %174 = arith.truncf %173 : vector<4x8x8xf32> to vector<4x8x8xbf16>
    "tpu.trace_start"() <{level = 10 : i32, message = "hqk,khd->qhd"}> : () -> ()
    %cst_74 = arith.constant dense<0.000000e+00> : vector<4x8x8xf32>
    %175 = tpu.matmul %160, %174, %cst_74 {dimension_numbers = #tpu.dot_dimension_numbers<[0], [2], [2], [1], [0, 1, 0, 2, 1, 1], [1], [0]>} : vector<8x4x8xbf16>, vector<4x8x8xbf16>, vector<4x8x8xf32> -> vector<4x8x8xf32>
    %176 = tpu.transpose %175, [2, 0, 1] : vector<4x8x8xf32> -> vector<8x4x8xf32>
    "tpu.trace_stop"() : () -> ()
    %177 = vector.shape_cast %176 : vector<8x4x8xf32> to vector<8x32xf32>
    %178 = arith.truncf %177 : vector<8x32xf32> to vector<8x32xbf16>
    %c1_75 = arith.constant 1 : index
    %c0_76 = arith.constant 0 : index
    %c0_77 = arith.constant 0 : index
    %179 = vector.load %arg8[%c1_75, %c0_76, %c0_77] : memref<2x32x32xbf16, #tpu.memory_space<vmem>>, vector<1x32x32xbf16>
    %180 = vector.shape_cast %179 : vector<1x32x32xbf16> to vector<32x32xbf16>
    %cst_78 = arith.constant dense<0.000000e+00> : vector<8x32xf32>
    %181 = tpu.matmul %178, %180, %cst_78 {dimension_numbers = #tpu.dot_dimension_numbers<[1], [0], [0], [1], [0, 0, 1, 1], [], []>} : vector<8x32xbf16>, vector<32x32xbf16>, vector<8x32xf32> -> vector<8x32xf32>
    %c1_79 = arith.constant 1 : index
    %c0_80 = arith.constant 0 : index
    %c0_81 = arith.constant 0 : index
    %182 = vector.load %arg9[%c1_79, %c0_80, %c0_81] : memref<2x1x32xf32, #tpu.memory_space<vmem>>, vector<1x1x32xf32>
    %183 = vector.shape_cast %182 : vector<1x1x32xf32> to vector<1x32xf32>
    %184 = vector.broadcast %183 : vector<1x32xf32> to vector<8x32xf32>
    %185 = arith.addf %181, %184 : vector<8x32xf32>
    %186 = arith.addf %185, %113 : vector<8x32xf32>
    %c1_82 = arith.constant 1 : index
    %c0_83 = arith.constant 0 : index
    %c0_84 = arith.constant 0 : index
    %187 = vector.load %arg10[%c1_82, %c0_83, %c0_84] : memref<2x2x32xf32, #tpu.memory_space<vmem>>, vector<1x2x32xf32>
    %188 = vector.shape_cast %187 : vector<1x2x32xf32> to vector<2x32xf32>
    %189 = vector.extract_strided_slice %188 {offsets = [0, 0], sizes = [1, 32], strides = [1, 1]} : vector<2x32xf32> to vector<1x32xf32>
    %190 = vector.extract_strided_slice %188 {offsets = [1, 0], sizes = [1, 32], strides = [1, 1]} : vector<2x32xf32> to vector<1x32xf32>
    %cst_85 = arith.constant dense<0.000000e+00> : vector<8xf32>
    %191 = vector.multi_reduction <add>, %186, %cst_85 [1] : vector<8x32xf32> to vector<8xf32>
    %192 = vector.shape_cast %191 : vector<8xf32> to vector<8x1xf32>
    %cst_86 = arith.constant 3.200000e+01 : f32
    %193 = vector.broadcast %cst_86 : f32 to vector<8x1xf32>
    %194 = arith.divf %192, %193 : vector<8x1xf32>
    %195 = arith.mulf %186, %186 : vector<8x32xf32>
    %cst_87 = arith.constant dense<0.000000e+00> : vector<8xf32>
    %196 = vector.multi_reduction <add>, %195, %cst_87 [1] : vector<8x32xf32> to vector<8xf32>
    %197 = vector.shape_cast %196 : vector<8xf32> to vector<8x1xf32>
    %cst_88 = arith.constant 3.200000e+01 : f32
    %198 = vector.broadcast %cst_88 : f32 to vector<8x1xf32>
    %199 = arith.divf %197, %198 : vector<8x1xf32>
    %200 = arith.mulf %194, %194 : vector<8x1xf32>
    %201 = arith.subf %199, %200 : vector<8x1xf32>
    %cst_89 = arith.constant 0.000000e+00 : f32
    %202 = vector.broadcast %cst_89 : f32 to vector<8x1xf32>
    %203 = arith.maximumf %201, %202 : vector<8x1xf32>
    %204 = vector.broadcast %194 : vector<8x1xf32> to vector<8x32xf32>
    %205 = arith.subf %186, %204 : vector<8x32xf32>
    %cst_90 = arith.constant 9.99999997E-7 : f32
    %206 = vector.broadcast %cst_90 : f32 to vector<8x1xf32>
    %207 = arith.addf %203, %206 : vector<8x1xf32>
    %208 = math.rsqrt %207 : vector<8x1xf32>
    %209 = vector.broadcast %208 : vector<8x1xf32> to vector<8x32xf32>
    %210 = arith.mulf %205, %209 : vector<8x32xf32>
    %211 = vector.broadcast %189 : vector<1x32xf32> to vector<8x32xf32>
    %212 = arith.mulf %210, %211 : vector<8x32xf32>
    %213 = vector.broadcast %190 : vector<1x32xf32> to vector<8x32xf32>
    %214 = arith.addf %212, %213 : vector<8x32xf32>
    %215 = arith.truncf %214 : vector<8x32xf32> to vector<8x32xbf16>
    %c1_91 = arith.constant 1 : index
    %c0_92 = arith.constant 0 : index
    %c0_93 = arith.constant 0 : index
    %216 = vector.load %arg11[%c1_91, %c0_92, %c0_93] : memref<2x32x64xbf16, #tpu.memory_space<vmem>>, vector<1x32x64xbf16>
    %217 = vector.shape_cast %216 : vector<1x32x64xbf16> to vector<32x64xbf16>
    %cst_94 = arith.constant dense<0.000000e+00> : vector<8x64xf32>
    %218 = tpu.matmul %215, %217, %cst_94 {dimension_numbers = #tpu.dot_dimension_numbers<[1], [0], [0], [1], [0, 0, 1, 1], [], []>} : vector<8x32xbf16>, vector<32x64xbf16>, vector<8x64xf32> -> vector<8x64xf32>
    %c1_95 = arith.constant 1 : index
    %c0_96 = arith.constant 0 : index
    %c0_97 = arith.constant 0 : index
    %219 = vector.load %arg12[%c1_95, %c0_96, %c0_97] : memref<2x1x64xf32, #tpu.memory_space<vmem>>, vector<1x1x64xf32>
    %220 = vector.shape_cast %219 : vector<1x1x64xf32> to vector<1x64xf32>
    %221 = vector.broadcast %220 : vector<1x64xf32> to vector<8x64xf32>
    %222 = arith.addf %218, %221 : vector<8x64xf32>
    %cst_98 = arith.constant 5.000000e-01 : f32
    %223 = vector.broadcast %cst_98 : f32 to vector<8x64xf32>
    %224 = arith.mulf %223, %222 : vector<8x64xf32>
    %cst_99 = arith.constant 4.471500e-02 : f32
    %225 = vector.broadcast %cst_99 : f32 to vector<8x64xf32>
    %226 = arith.mulf %225, %222 : vector<8x64xf32>
    %227 = arith.mulf %226, %222 : vector<8x64xf32>
    %228 = arith.mulf %227, %222 : vector<8x64xf32>
    %229 = arith.addf %222, %228 : vector<8x64xf32>
    %cst_100 = arith.constant 0.797884583 : f32
    %230 = vector.broadcast %cst_100 : f32 to vector<8x64xf32>
    %231 = arith.mulf %230, %229 : vector<8x64xf32>
    %232 = math.tanh %231 : vector<8x64xf32>
    %cst_101 = arith.constant 1.000000e+00 : f32
    %233 = vector.broadcast %cst_101 : f32 to vector<8x64xf32>
    %234 = arith.addf %233, %232 : vector<8x64xf32>
    %235 = arith.mulf %224, %234 : vector<8x64xf32>
    %236 = arith.truncf %235 : vector<8x64xf32> to vector<8x64xbf16>
    %c1_102 = arith.constant 1 : index
    %c0_103 = arith.constant 0 : index
    %c0_104 = arith.constant 0 : index
    %237 = vector.load %arg13[%c1_102, %c0_103, %c0_104] : memref<2x64x32xbf16, #tpu.memory_space<vmem>>, vector<1x64x32xbf16>
    %238 = vector.shape_cast %237 : vector<1x64x32xbf16> to vector<64x32xbf16>
    %cst_105 = arith.constant dense<0.000000e+00> : vector<8x32xf32>
    %239 = tpu.matmul %236, %238, %cst_105 {dimension_numbers = #tpu.dot_dimension_numbers<[1], [0], [0], [1], [0, 0, 1, 1], [], []>} : vector<8x64xbf16>, vector<64x32xbf16>, vector<8x32xf32> -> vector<8x32xf32>
    %c1_106 = arith.constant 1 : index
    %c0_107 = arith.constant 0 : index
    %c0_108 = arith.constant 0 : index
    %240 = vector.load %arg14[%c1_106, %c0_107, %c0_108] : memref<2x1x32xf32, #tpu.memory_space<vmem>>, vector<1x1x32xf32>
    %241 = vector.shape_cast %240 : vector<1x1x32xf32> to vector<1x32xf32>
    %242 = vector.broadcast %241 : vector<1x32xf32> to vector<8x32xf32>
    %243 = arith.addf %239, %242 : vector<8x32xf32>
    %244 = arith.addf %243, %186 : vector<8x32xf32>
    %c0_109 = arith.constant 0 : index
    %c0_110 = arith.constant 0 : index
    %245 = vector.load %arg15[%c0_109, %c0_110] : memref<2x32xf32, #tpu.memory_space<vmem>>, vector<2x32xf32>
    %246 = vector.extract_strided_slice %245 {offsets = [0, 0], sizes = [1, 32], strides = [1, 1]} : vector<2x32xf32> to vector<1x32xf32>
    %247 = vector.extract_strided_slice %245 {offsets = [1, 0], sizes = [1, 32], strides = [1, 1]} : vector<2x32xf32> to vector<1x32xf32>
    %cst_111 = arith.constant dense<0.000000e+00> : vector<8xf32>
    %248 = vector.multi_reduction <add>, %244, %cst_111 [1] : vector<8x32xf32> to vector<8xf32>
    %249 = vector.shape_cast %248 : vector<8xf32> to vector<8x1xf32>
    %cst_112 = arith.constant 3.200000e+01 : f32
    %250 = vector.broadcast %cst_112 : f32 to vector<8x1xf32>
    %251 = arith.divf %249, %250 : vector<8x1xf32>
    %252 = arith.mulf %244, %244 : vector<8x32xf32>
    %cst_113 = arith.constant dense<0.000000e+00> : vector<8xf32>
    %253 = vector.multi_reduction <add>, %252, %cst_113 [1] : vector<8x32xf32> to vector<8xf32>
    %254 = vector.shape_cast %253 : vector<8xf32> to vector<8x1xf32>
    %cst_114 = arith.constant 3.200000e+01 : f32
    %255 = vector.broadcast %cst_114 : f32 to vector<8x1xf32>
    %256 = arith.divf %254, %255 : vector<8x1xf32>
    %257 = arith.mulf %251, %251 : vector<8x1xf32>
    %258 = arith.subf %256, %257 : vector<8x1xf32>
    %cst_115 = arith.constant 0.000000e+00 : f32
    %259 = vector.broadcast %cst_115 : f32 to vector<8x1xf32>
    %260 = arith.maximumf %258, %259 : vector<8x1xf32>
    %261 = vector.broadcast %251 : vector<8x1xf32> to vector<8x32xf32>
    %262 = arith.subf %244, %261 : vector<8x32xf32>
    %cst_116 = arith.constant 9.99999997E-7 : f32
    %263 = vector.broadcast %cst_116 : f32 to vector<8x1xf32>
    %264 = arith.addf %260, %263 : vector<8x1xf32>
    %265 = math.rsqrt %264 : vector<8x1xf32>
    %266 = vector.broadcast %265 : vector<8x1xf32> to vector<8x32xf32>
    %267 = arith.mulf %262, %266 : vector<8x32xf32>
    %268 = vector.broadcast %246 : vector<1x32xf32> to vector<8x32xf32>
    %269 = arith.mulf %267, %268 : vector<8x32xf32>
    %270 = vector.broadcast %247 : vector<1x32xf32> to vector<8x32xf32>
    %271 = arith.addf %269, %270 : vector<8x32xf32>
    %c0_117 = arith.constant 0 : index
    %c0_118 = arith.constant 0 : index
    %272 = vector.load %arg16[%c0_117, %c0_118] : memref<32x1xf32, #tpu.memory_space<vmem>>, vector<32x1xf32>
    %cst_119 = arith.constant dense<0.000000e+00> : vector<8x1xf32>
    %273 = tpu.matmul %271, %272, %cst_119 {dimension_numbers = #tpu.dot_dimension_numbers<[1], [0], [0], [1], [0, 0, 1, 1], [], []>} : vector<8x32xf32>, vector<32x1xf32>, vector<8x1xf32> -> vector<8x1xf32>
    %c0_120 = arith.constant 0 : index
    %c0_121 = arith.constant 0 : index
    %274 = vector.load %arg17[%c0_120, %c0_121] : memref<1x1xf32, #tpu.memory_space<vmem>>, vector<1x1xf32>
    %275 = vector.broadcast %274 : vector<1x1xf32> to vector<8x1xf32>
    %276 = arith.addf %273, %275 : vector<8x1xf32>
    %cst_122 = arith.constant 0.000000e+00 : f32
    %277 = vector.broadcast %cst_122 : f32 to vector<8x1xf32>
    %278 = arith.subf %277, %276 : vector<8x1xf32>
    %279 = math.exp %278 : vector<8x1xf32>
    %cst_123 = arith.constant 1.000000e+00 : f32
    %280 = vector.broadcast %cst_123 : f32 to vector<8x1xf32>
    %281 = arith.addf %280, %279 : vector<8x1xf32>
    %282 = tpu.reciprocal %281 {approx = true} : vector<8x1xf32> -> vector<8x1xf32>
    %283 = arith.mulf %282, %1 : vector<8x1xf32>
    %c0_124 = arith.constant 0 : index
    %c0_125 = arith.constant 0 : index
    %c0_126 = arith.constant 0 : index
    %284 = vector.load %arg18[%c0_124, %c0_125, %c0_126] : memref<1x8x1xf32, #tpu.memory_space<vmem>>, vector<1x8x1xf32>
    %285 = vector.shape_cast %284 : vector<1x8x1xf32> to vector<8x1xf32>
    %286 = vector.shape_cast %283 : vector<8x1xf32> to vector<1x8x1xf32>
    tpu.vector_store %arg18[%c0_124, %c0_125, %c0_126], %286 {strides = array<i32>} : memref<1x8x1xf32, #tpu.memory_space<vmem>>, vector<1x8x1xf32>,
    return
  }
  func.func @transform_0(%arg0: i32) -> (i32, i32, i32) {
    %c0_i32 = arith.constant 0 : i32
    %c0_i32_0 = arith.constant 0 : i32
    %c0_i32_1 = arith.constant 0 : i32
    return %arg0, %c0_i32, %c0_i32_0 : i32, i32, i32
  }
  func.func @transform_1(%arg0: i32) -> (i32, i32, i32) {
    %c0_i32 = arith.constant 0 : i32
    %c0_i32_0 = arith.constant 0 : i32
    %c0_i32_1 = arith.constant 0 : i32
    return %arg0, %c0_i32, %c0_i32_0 : i32, i32, i32
  }
  func.func @transform_2(%arg0: i32) -> (i32, i32, i32) {
    %c0_i32 = arith.constant 0 : i32
    %c0_i32_0 = arith.constant 0 : i32
    %c0_i32_1 = arith.constant 0 : i32
    return %arg0, %c0_i32, %c0_i32_0 : i32, i32, i32
  }
  func.func @transform_3(%arg0: i32) -> (i32, i32) {
    %c0_i32 = arith.constant 0 : i32
    %c0_i32_0 = arith.constant 0 : i32
    %c0_i32_1 = arith.constant 0 : i32
    return %c0_i32, %c0_i32_0 : i32, i32
  }
  func.func @transform_4(%arg0: i32) -> (i32, i32, i32) {
    %c0_i32 = arith.constant 0 : i32
    %c0_i32_0 = arith.constant 0 : i32
    %c0_i32_1 = arith.constant 0 : i32
    %c0_i32_2 = arith.constant 0 : i32
    return %c0_i32, %c0_i32_0, %c0_i32_1 : i32, i32, i32
  }
  func.func @transform_5(%arg0: i32) -> (i32, i32, i32) {
    %c0_i32 = arith.constant 0 : i32
    %c0_i32_0 = arith.constant 0 : i32
    %c0_i32_1 = arith.constant 0 : i32
    %c0_i32_2 = arith.constant 0 : i32
    return %c0_i32, %c0_i32_0, %c0_i32_1 : i32, i32, i32
  }
  func.func @transform_6(%arg0: i32) -> (i32, i32, i32) {
    %c0_i32 = arith.constant 0 : i32
    %c0_i32_0 = arith.constant 0 : i32
    %c0_i32_1 = arith.constant 0 : i32
    %c0_i32_2 = arith.constant 0 : i32
    return %c0_i32, %c0_i32_0, %c0_i32_1 : i32, i32, i32
  }
  func.func @transform_7(%arg0: i32) -> (i32, i32, i32) {
    %c0_i32 = arith.constant 0 : i32
    %c0_i32_0 = arith.constant 0 : i32
    %c0_i32_1 = arith.constant 0 : i32
    %c0_i32_2 = arith.constant 0 : i32
    return %c0_i32, %c0_i32_0, %c0_i32_1 : i32, i32, i32
  }
  func.func @transform_8(%arg0: i32) -> (i32, i32, i32) {
    %c0_i32 = arith.constant 0 : i32
    %c0_i32_0 = arith.constant 0 : i32
    %c0_i32_1 = arith.constant 0 : i32
    %c0_i32_2 = arith.constant 0 : i32
    return %c0_i32, %c0_i32_0, %c0_i32_1 : i32, i32, i32
  }
  func.func @transform_9(%arg0: i32) -> (i32, i32, i32) {
    %c0_i32 = arith.constant 0 : i32
    %c0_i32_0 = arith.constant 0 : i32
    %c0_i32_1 = arith.constant 0 : i32
    %c0_i32_2 = arith.constant 0 : i32
    return %c0_i32, %c0_i32_0, %c0_i32_1 : i32, i32, i32
  }
  func.func @transform_10(%arg0: i32) -> (i32, i32, i32) {
    %c0_i32 = arith.constant 0 : i32
    %c0_i32_0 = arith.constant 0 : i32
    %c0_i32_1 = arith.constant 0 : i32
    %c0_i32_2 = arith.constant 0 : i32
    return %c0_i32, %c0_i32_0, %c0_i32_1 : i32, i32, i32
  }
  func.func @transform_11(%arg0: i32) -> (i32, i32, i32) {
    %c0_i32 = arith.constant 0 : i32
    %c0_i32_0 = arith.constant 0 : i32
    %c0_i32_1 = arith.constant 0 : i32
    %c0_i32_2 = arith.constant 0 : i32
    return %c0_i32, %c0_i32_0, %c0_i32_1 : i32, i32, i32
  }
  func.func @transform_12(%arg0: i32) -> (i32, i32, i32) {
    %c0_i32 = arith.constant 0 : i32
    %c0_i32_0 = arith.constant 0 : i32
    %c0_i32_1 = arith.constant 0 : i32
    %c0_i32_2 = arith.constant 0 : i32
    return %c0_i32, %c0_i32_0, %c0_i32_1 : i32, i32, i32
  }
  func.func @transform_13(%arg0: i32) -> (i32, i32, i32) {
    %c0_i32 = arith.constant 0 : i32
    %c0_i32_0 = arith.constant 0 : i32
    %c0_i32_1 = arith.constant 0 : i32
    %c0_i32_2 = arith.constant 0 : i32
    return %c0_i32, %c0_i32_0, %c0_i32_1 : i32, i32, i32
  }
  func.func @transform_14(%arg0: i32) -> (i32, i32) {
    %c0_i32 = arith.constant 0 : i32
    %c0_i32_0 = arith.constant 0 : i32
    %c0_i32_1 = arith.constant 0 : i32
    return %c0_i32, %c0_i32_0 : i32, i32
  }
  func.func @transform_15(%arg0: i32) -> (i32, i32) {
    %c0_i32 = arith.constant 0 : i32
    %c0_i32_0 = arith.constant 0 : i32
    %c0_i32_1 = arith.constant 0 : i32
    return %c0_i32, %c0_i32_0 : i32, i32
  }
  func.func @transform_16(%arg0: i32) -> (i32, i32) {
    %c0_i32 = arith.constant 0 : i32
    %c0_i32_0 = arith.constant 0 : i32
    %c0_i32_1 = arith.constant 0 : i32
    return %c0_i32, %c0_i32_0 : i32, i32
  }
  func.func @transform_17(%arg0: i32) -> (i32, i32, i32) {
    %c0_i32 = arith.constant 0 : i32
    %c0_i32_0 = arith.constant 0 : i32
    %c0_i32_1 = arith.constant 0 : i32
    return %arg0, %c0_i32, %c0_i32_0 : i32, i32, i32
  }
}

</mosaic_0001>

<llo_original>
// kernel: tpu_custom_call.1
$region0: #{tpu_custom_call.1}
  #allocation0 [shape = 'u32[]', space=smem, size = 0x4, offset = 0x4, fixed_abs, tag = 'smem constant byte address 0x4 - core index']
  #allocation1 [shape = 'u32[144,128]{1,0:T(1,128)}', space=vmem, size = 0x12000, scoped, tag = 'internal scratch']
  #allocation2 [shape = 'f32[1,1]{1,0:T(1,128)S(1)}', space=vmem, size = 0x200, scoped, tag = 'scoped memory for tpu_custom_call.1']
  %s0 = inlined_call_operand.vmem [shape: f32[2,8,32], index: 0, kind: input, shape index: {}]
  %s1 = inlined_call_operand.vmem [shape: f32[2,8,1], index: 1, kind: input, shape index: {}]
  %s2 = inlined_call_operand.hbm [shape: f32[2,1,8], index: 2, kind: input, shape index: {}]
  %s3 = inlined_call_operand.vmem [shape: f32[8,32], index: 3, kind: input, shape index: {}]
  %s4 = inlined_call_operand.vmem [shape: f32[2,2,32], index: 4, kind: input, shape index: {}]
  %s5 = inlined_call_operand.vmem [shape: bf16[2,32,96], index: 5, kind: input, shape index: {}]
  %s6 = inlined_call_operand.hbm [shape: f32[2,1,96], index: 6, kind: input, shape index: {}]
  %s7 = inlined_call_operand.vmem [shape: bf16[2,32,32], index: 7, kind: input, shape index: {}]
  %s8 = inlined_call_operand.vmem [shape: f32[2,1,32], index: 8, kind: input, shape index: {}]
  %s9 = inlined_call_operand.vmem [shape: f32[2,2,32], index: 9, kind: input, shape index: {}]
  %s10 = inlined_call_operand.vmem [shape: bf16[2,32,64], index: 10, kind: input, shape index: {}]
  %s11 = inlined_call_operand.vmem [shape: f32[2,1,64], index: 11, kind: input, shape index: {}]
  %s12 = inlined_call_operand.vmem [shape: bf16[2,64,32], index: 12, kind: input, shape index: {}]
  %s13 = inlined_call_operand.vmem [shape: f32[2,1,32], index: 13, kind: input, shape index: {}]
  %s14 = inlined_call_operand.vmem [shape: f32[2,32], index: 14, kind: input, shape index: {}]
  %s15 = inlined_call_operand.vmem [shape: f32[32,1], index: 15, kind: input, shape index: {}]
  %s16 = inlined_call_operand.<no memory space> [shape: f32[1,1], index: 16, kind: input, shape index: {}]
  %s17 = inlined_call_operand.vmem [shape: f32[2,8,1], index: 17, kind: output, shape index: {}]
  %s18 = sld [smem:[#allocation0]]
  $region109: #{tpu_custom_call.1} parent=0
    _
  %s20 = ssub.s32 1, %s18
  %s21 = scalar_select 0, %s20, %s18
  %v22 = vstv %s16
  %23 = vst [vmem:[#allocation2] sm:$0x1] %v22
  $region1: #{tpu_custom_call.1} parent=0
    #allocation3 [shape = 'u8[1024]{0}', space=vmem, size = 0x400, scoped, tag = 'input window, operand 2']
    #allocation4 [shape = 's32[2]{0}', space=sflag, size = 0x8, scoped, tag = 'scoped memory for tpu_custom_call.1']
    #allocation5 [shape = 'u8[1024]{0}', space=vmem, size = 0x400, scoped, tag = 'input window, operand 6, single buffered']
    #allocation6 [shape = 's32[1]{0}', space=sflag, size = 0x4, scoped, tag = 'scoped memory for tpu_custom_call.1']
    %24 = vsyncpa [#allocation4], 0
    %s25 = scalar_lea.sflag [#allocation4], 1
    %26 = vsyncpa %s25, 0
    %27 = vsyncpa [#allocation6], 0
    loop: start=0, step=1, limit=4
    $region2: #{tpu_custom_call.1} parent=1 // loop_pre_header
      _
    $region3: #{tpu_custom_call.1} parent=1 // loop_header
      %s29 = sphi 0, %s33
      %p30 = scmp.ge.s32.totalorder %s29, 4
      %s39 = sphi 0, %s41
      %s42 = sphi 0, %s39
      %s43 = sphi 0, %s42
      %s59 = sphi 0, %s43
      %s65 = sphi 0, %s67
      %s68 = sphi 0, %s65
      %s69 = sphi 0, %s68
      %s85 = sphi 0, %s69
      %s91 = sphi 0, %s93
      %s94 = sphi 0, %s91
      %s95 = sphi 0, %s94
      %s111 = sphi 0, %s95
      %s115 = sphi 0, %s115
      %s117 = sphi 0, %s115
      %s118 = sphi 0, %s117
      %s132 = sphi 0, %s118
      %s136 = sphi 0, %s136
      %s138 = sphi 0, %s136
      %s139 = sphi 0, %s138
      %s153 = sphi 0, %s139
      %s157 = sphi 0, %s157
      %s159 = sphi 0, %s157
      %s160 = sphi 0, %s159
      %s174 = sphi 0, %s160
      %s178 = sphi 0, %s178
      %s180 = sphi 0, %s178
      %s181 = sphi 0, %s180
      %s195 = sphi 0, %s181
      %s199 = sphi 0, %s199
      %s201 = sphi 0, %s199
      %s202 = sphi 0, %s201
      %s216 = sphi 0, %s202
      %s220 = sphi 0, %s220
      %s222 = sphi 0, %s220
      %s223 = sphi 0, %s222
      %s237 = sphi 0, %s223
      %s241 = sphi 0, %s241
      %s243 = sphi 0, %s241
      %s244 = sphi 0, %s243
      %s258 = sphi 0, %s244
      %s262 = sphi 0, %s262
      %s264 = sphi 0, %s262
      %s265 = sphi 0, %s264
      %s279 = sphi 0, %s265
      %s283 = sphi 0, %s283
      %s285 = sphi 0, %s283
      %s286 = sphi 0, %s285
      %s300 = sphi 0, %s286
      %s304 = sphi 0, %s304
      %s306 = sphi 0, %s304
      %s307 = sphi 0, %s306
      %s321 = sphi 0, %s307
      %s325 = sphi 0, %s325
      %s327 = sphi 0, %s325
      %s328 = sphi 0, %s327
      %s342 = sphi 0, %s328
      %s346 = sphi 0, %s346
      %s348 = sphi 0, %s346
      %s349 = sphi 0, %s348
      %s363 = sphi 0, %s349
      %s367 = sphi 0, %s367
      %s369 = sphi 0, %s367
      %s370 = sphi 0, %s369
      %s384 = sphi 0, %s370
      %s388 = sphi 0, %s388
      %s390 = sphi 0, %s388
      %s391 = sphi 0, %s390
      %s405 = sphi 0, %s391
      %s411 = sphi 0, %s413
      %s414 = sphi 0, %s411
      %s415 = sphi 0, %s414
      %s431 = sphi 0, %s415
    $region4: #{tpu_custom_call.1} parent=1 // loop_header_branch
      %32 = sbr.rel (%p30) target = $region8
    $region5: #{tpu_custom_call.1} parent=1 // loop_body
      %s34 = ssub.s32 %s29, 1
      %s35 = ssub.s32 %s29, 2
      %s36 = sadd.s32 %s29, 1
      %s37 = ssub.s32 %s29, %s36
      %p38 = scmp.eq.s32.totalorder %s37, 0
      %s40 = sadd.s32 %s39, 1
      %s41 = scalar_select %p38, %s39, %s40
      %p44 = pneg %p38
      %p45 = scmp.eq.s32.totalorder %s29, 1
      %p46 = por %p44, %p45
      %p47 = scmp.ne.s32.totalorder %s39, %s42
      %p48 = scmp.eq.s32.totalorder %s29, 0
      %p49 = por %p47, %p48
      %p50 = scmp.ne.s32.totalorder %s39, %s42
      %p51 = scmp.eq.s32.totalorder %s34, 1
      %p52 = por %p50, %p51
      %p53 = scmp.ne.s32.totalorder %s42, %s43
      %p54 = scmp.eq.s32.totalorder %s34, 0
      %p55 = por %p53, %p54
      %p56 = scmp.ne.s32.totalorder %s42, %s43
      %p57 = scmp.eq.s32.totalorder %s35, 1
      %p58 = por %p56, %p57
      %p60 = scmp.ne.s32.totalorder %s43, %s59
      %p61 = scmp.eq.s32.totalorder %s35, 0
      %p62 = por %p60, %p61
      %s63 = ssub.s32 %s29, %s36
      %p64 = scmp.eq.s32.totalorder %s63, 0
      %s66 = sadd.s32 %s65, 1
      %s67 = scalar_select %p64, %s65, %s66
      %p70 = pneg %p64
      %p71 = scmp.eq.s32.totalorder %s29, 1
      %p72 = por %p70, %p71
      %p73 = scmp.ne.s32.totalorder %s65, %s68
      %p74 = scmp.eq.s32.totalorder %s29, 0
      %p75 = por %p73, %p74
      %p76 = scmp.ne.s32.totalorder %s65, %s68
      %p77 = scmp.eq.s32.totalorder %s34, 1
      %p78 = por %p76, %p77
      %p79 = scmp.ne.s32.totalorder %s68, %s69
      %p80 = scmp.eq.s32.totalorder %s34, 0
      %p81 = por %p79, %p80
      %p82 = scmp.ne.s32.totalorder %s68, %s69
      %p83 = scmp.eq.s32.totalorder %s35, 1
      %p84 = por %p82, %p83
      %p86 = scmp.ne.s32.totalorder %s69, %s85
      %p87 = scmp.eq.s32.totalorder %s35, 0
      %p88 = por %p86, %p87
      %s89 = ssub.s32 %s29, %s36
      %p90 = scmp.eq.s32.totalorder %s89, 0
      %s92 = sadd.s32 %s91, 1
      %s93 = scalar_select %p90, %s91, %s92
      %p96 = pneg %p90
      %p97 = scmp.eq.s32.totalorder %s29, 1
      %p98 = por %p96, %p97
      %p99 = scmp.ne.s32.totalorder %s91, %s94
      %p100 = scmp.eq.s32.totalorder %s29, 0
      %p101 = por %p99, %p100
      %p102 = scmp.ne.s32.totalorder %s91, %s94
      %p103 = scmp.eq.s32.totalorder %s34, 1
      %p104 = por %p102, %p103
      %p105 = scmp.ne.s32.totalorder %s94, %s95
      %p106 = scmp.eq.s32.totalorder %s34, 0
      %p107 = por %p105, %p106
      %p108 = scmp.ne.s32.totalorder %s94, %s95
      %p109 = scmp.eq.s32.totalorder %s35, 1
      %p110 = por %p108, %p109
      %p112 = scmp.ne.s32.totalorder %s95, %s111
      %p113 = scmp.eq.s32.totalorder %s35, 0
      %p114 = por %p112, %p113
      %s116 = sadd.s32 %s115, 1
      %p119 = scmp.eq.s32.totalorder %s29, 1
      %p120 = scmp.ne.s32.totalorder %s115, %s117
      %p121 = scmp.eq.s32.totalorder %s29, 0
      %p122 = por %p120, %p121
      %p123 = scmp.ne.s32.totalorder %s115, %s117
      %p124 = scmp.eq.s32.totalorder %s34, 1
      %p125 = por %p123, %p124
      %p126 = scmp.ne.s32.totalorder %s117, %s118
      %p127 = scmp.eq.s32.totalorder %s34, 0
      %p128 = por %p126, %p127
      %p129 = scmp.ne.s32.totalorder %s117, %s118
      %p130 = scmp.eq.s32.totalorder %s35, 1
      %p131 = por %p129, %p130
      %p133 = scmp.ne.s32.totalorder %s118, %s132
      %p134 = scmp.eq.s32.totalorder %s35, 0
      %p135 = por %p133, %p134
      %s137 = sadd.s32 %s136, 1
      %p140 = scmp.eq.s32.totalorder %s29, 1
      %p141 = scmp.ne.s32.totalorder %s136, %s138
      %p142 = scmp.eq.s32.totalorder %s29, 0
      %p143 = por %p141, %p142
      %p144 = scmp.ne.s32.totalorder %s136, %s138
      %p145 = scmp.eq.s32.totalorder %s34, 1
      %p146 = por %p144, %p145
      %p147 = scmp.ne.s32.totalorder %s138, %s139
      %p148 = scmp.eq.s32.totalorder %s34, 0
      %p149 = por %p147, %p148
      %p150 = scmp.ne.s32.totalorder %s138, %s139
      %p151 = scmp.eq.s32.totalorder %s35, 1
      %p152 = por %p150, %p151
      %p154 = scmp.ne.s32.totalorder %s139, %s153
      %p155 = scmp.eq.s32.totalorder %s35, 0
      %p156 = por %p154, %p155
      %s158 = sadd.s32 %s157, 1
      %p161 = scmp.eq.s32.totalorder %s29, 1
      %p162 = scmp.ne.s32.totalorder %s157, %s159
      %p163 = scmp.eq.s32.totalorder %s29, 0
      %p164 = por %p162, %p163
      %p165 = scmp.ne.s32.totalorder %s157, %s159
      %p166 = scmp.eq.s32.totalorder %s34, 1
      %p167 = por %p165, %p166
      %p168 = scmp.ne.s32.totalorder %s159, %s160
      %p169 = scmp.eq.s32.totalorder %s34, 0
      %p170 = por %p168, %p169
      %p171 = scmp.ne.s32.totalorder %s159, %s160
      %p172 = scmp.eq.s32.totalorder %s35, 1
      %p173 = por %p171, %p172
      %p175 = scmp.ne.s32.totalorder %s160, %s174
      %p176 = scmp.eq.s32.totalorder %s35, 0
      %p177 = por %p175, %p176
      %s179 = sadd.s32 %s178, 1
      %p182 = scmp.eq.s32.totalorder %s29, 1
      %p183 = scmp.ne.s32.totalorder %s178, %s180
      %p184 = scmp.eq.s32.totalorder %s29, 0
      %p185 = por %p183, %p184
      %p186 = scmp.ne.s32.totalorder %s178, %s180
      %p187 = scmp.eq.s32.totalorder %s34, 1
      %p188 = por %p186, %p187
      %p189 = scmp.ne.s32.totalorder %s180, %s181
      %p190 = scmp.eq.s32.totalorder %s34, 0
      %p191 = por %p189, %p190
      %p192 = scmp.ne.s32.totalorder %s180, %s181
      %p193 = scmp.eq.s32.totalorder %s35, 1
      %p194 = por %p192, %p193
      %p196 = scmp.ne.s32.totalorder %s181, %s195
      %p197 = scmp.eq.s32.totalorder %s35, 0
      %p198 = por %p196, %p197
      %s200 = sadd.s32 %s199, 1
      %p203 = scmp.eq.s32.totalorder %s29, 1
      %p204 = scmp.ne.s32.totalorder %s199, %s201
      %p205 = scmp.eq.s32.totalorder %s29, 0
      %p206 = por %p204, %p205
      %p207 = scmp.ne.s32.totalorder %s199, %s201
      %p208 = scmp.eq.s32.totalorder %s34, 1
      %p209 = por %p207, %p208
      %p210 = scmp.ne.s32.totalorder %s201, %s202
      %p211 = scmp.eq.s32.totalorder %s34, 0
      %p212 = por %p210, %p211
      %p213 = scmp.ne.s32.totalorder %s201, %s202
      %p214 = scmp.eq.s32.totalorder %s35, 1
      %p215 = por %p213, %p214
      %p217 = scmp.ne.s32.totalorder %s202, %s216
      %p218 = scmp.eq.s32.totalorder %s35, 0
      %p219 = por %p217, %p218
      %s221 = sadd.s32 %s220, 1
      %p224 = scmp.eq.s32.totalorder %s29, 1
      %p225 = scmp.ne.s32.totalorder %s220, %s222
      %p226 = scmp.eq.s32.totalorder %s29, 0
      %p227 = por %p225, %p226
      %p228 = scmp.ne.s32.totalorder %s220, %s222
      %p229 = scmp.eq.s32.totalorder %s34, 1
      %p230 = por %p228, %p229
      %p231 = scmp.ne.s32.totalorder %s222, %s223
      %p232 = scmp.eq.s32.totalorder %s34, 0
      %p233 = por %p231, %p232
      %p234 = scmp.ne.s32.totalorder %s222, %s223
      %p235 = scmp.eq.s32.totalorder %s35, 1
      %p236 = por %p234, %p235
      %p238 = scmp.ne.s32.totalorder %s223, %s237
      %p239 = scmp.eq.s32.totalorder %s35, 0
      %p240 = por %p238, %p239
      %s242 = sadd.s32 %s241, 1
      %p245 = scmp.eq.s32.totalorder %s29, 1
      %p246 = scmp.ne.s32.totalorder %s241, %s243
      %p247 = scmp.eq.s32.totalorder %s29, 0
      %p248 = por %p246, %p247
      %p249 = scmp.ne.s32.totalorder %s241, %s243
      %p250 = scmp.eq.s32.totalorder %s34, 1
      %p251 = por %p249, %p250
      %p252 = scmp.ne.s32.totalorder %s243, %s244
      %p253 = scmp.eq.s32.totalorder %s34, 0
      %p254 = por %p252, %p253
      %p255 = scmp.ne.s32.totalorder %s243, %s244
      %p256 = scmp.eq.s32.totalorder %s35, 1
      %p257 = por %p255, %p256
      %p259 = scmp.ne.s32.totalorder %s244, %s258
      %p260 = scmp.eq.s32.totalorder %s35, 0
      %p261 = por %p259, %p260
      %s263 = sadd.s32 %s262, 1
      %p266 = scmp.eq.s32.totalorder %s29, 1
      %p267 = scmp.ne.s32.totalorder %s262, %s264
      %p268 = scmp.eq.s32.totalorder %s29, 0
      %p269 = por %p267, %p268
      %p270 = scmp.ne.s32.totalorder %s262, %s264
      %p271 = scmp.eq.s32.totalorder %s34, 1
      %p272 = por %p270, %p271
      %p273 = scmp.ne.s32.totalorder %s264, %s265
      %p274 = scmp.eq.s32.totalorder %s34, 0
      %p275 = por %p273, %p274
      %p276 = scmp.ne.s32.totalorder %s264, %s265
      %p277 = scmp.eq.s32.totalorder %s35, 1
      %p278 = por %p276, %p277
      %p280 = scmp.ne.s32.totalorder %s265, %s279
      %p281 = scmp.eq.s32.totalorder %s35, 0
      %p282 = por %p280, %p281
      %s284 = sadd.s32 %s283, 1
      %p287 = scmp.eq.s32.totalorder %s29, 1
      %p288 = scmp.ne.s32.totalorder %s283, %s285
      %p289 = scmp.eq.s32.totalorder %s29, 0
      %p290 = por %p288, %p289
      %p291 = scmp.ne.s32.totalorder %s283, %s285
      %p292 = scmp.eq.s32.totalorder %s34, 1
      %p293 = por %p291, %p292
      %p294 = scmp.ne.s32.totalorder %s285, %s286
      %p295 = scmp.eq.s32.totalorder %s34, 0
      %p296 = por %p294, %p295
      %p297 = scmp.ne.s32.totalorder %s285, %s286
      %p298 = scmp.eq.s32.totalorder %s35, 1
      %p299 = por %p297, %p298
      %p301 = scmp.ne.s32.totalorder %s286, %s300
      %p302 = scmp.eq.s32.totalorder %s35, 0
      %p303 = por %p301, %p302
      %s305 = sadd.s32 %s304, 1
      %p308 = scmp.eq.s32.totalorder %s29, 1
      %p309 = scmp.ne.s32.totalorder %s304, %s306
      %p310 = scmp.eq.s32.totalorder %s29, 0
      %p311 = por %p309, %p310
      %p312 = scmp.ne.s32.totalorder %s304, %s306
      %p313 = scmp.eq.s32.totalorder %s34, 1
      %p314 = por %p312, %p313
      %p315 = scmp.ne.s32.totalorder %s306, %s307
      %p316 = scmp.eq.s32.totalorder %s34, 0
      %p317 = por %p315, %p316
      %p318 = scmp.ne.s32.totalorder %s306, %s307
      %p319 = scmp.eq.s32.totalorder %s35, 1
      %p320 = por %p318, %p319
      %p322 = scmp.ne.s32.totalorder %s307, %s321
      %p323 = scmp.eq.s32.totalorder %s35, 0
      %p324 = por %p322, %p323
      %s326 = sadd.s32 %s325, 1
      %p329 = scmp.eq.s32.totalorder %s29, 1
      %p330 = scmp.ne.s32.totalorder %s325, %s327
      %p331 = scmp.eq.s32.totalorder %s29, 0
      %p332 = por %p330, %p331
      %p333 = scmp.ne.s32.totalorder %s325, %s327
      %p334 = scmp.eq.s32.totalorder %s34, 1
      %p335 = por %p333, %p334
      %p336 = scmp.ne.s32.totalorder %s327, %s328
      %p337 = scmp.eq.s32.totalorder %s34, 0
      %p338 = por %p336, %p337
      %p339 = scmp.ne.s32.totalorder %s327, %s328
      %p340 = scmp.eq.s32.totalorder %s35, 1
      %p341 = por %p339, %p340
      %p343 = scmp.ne.s32.totalorder %s328, %s342
      %p344 = scmp.eq.s32.totalorder %s35, 0
      %p345 = por %p343, %p344
      %s347 = sadd.s32 %s346, 1
      %p350 = scmp.eq.s32.totalorder %s29, 1
      %p351 = scmp.ne.s32.totalorder %s346, %s348
      %p352 = scmp.eq.s32.totalorder %s29, 0
      %p353 = por %p351, %p352
      %p354 = scmp.ne.s32.totalorder %s346, %s348
      %p355 = scmp.eq.s32.totalorder %s34, 1
      %p356 = por %p354, %p355
      %p357 = scmp.ne.s32.totalorder %s348, %s349
      %p358 = scmp.eq.s32.totalorder %s34, 0
      %p359 = por %p357, %p358
      %p360 = scmp.ne.s32.totalorder %s348, %s349
      %p361 = scmp.eq.s32.totalorder %s35, 1
      %p362 = por %p360, %p361
      %p364 = scmp.ne.s32.totalorder %s349, %s363
      %p365 = scmp.eq.s32.totalorder %s35, 0
      %p366 = por %p364, %p365
      %s368 = sadd.s32 %s367, 1
      %p371 = scmp.eq.s32.totalorder %s29, 1
      %p372 = scmp.ne.s32.totalorder %s367, %s369
      %p373 = scmp.eq.s32.totalorder %s29, 0
      %p374 = por %p372, %p373
      %p375 = scmp.ne.s32.totalorder %s367, %s369
      %p376 = scmp.eq.s32.totalorder %s34, 1
      %p377 = por %p375, %p376
      %p378 = scmp.ne.s32.totalorder %s369, %s370
      %p379 = scmp.eq.s32.totalorder %s34, 0
      %p380 = por %p378, %p379
      %p381 = scmp.ne.s32.totalorder %s369, %s370
      %p382 = scmp.eq.s32.totalorder %s35, 1
      %p383 = por %p381, %p382
      %p385 = scmp.ne.s32.totalorder %s370, %s384
      %p386 = scmp.eq.s32.totalorder %s35, 0
      %p387 = por %p385, %p386
      %s389 = sadd.s32 %s388, 1
      %p392 = scmp.eq.s32.totalorder %s29, 1
      %p393 = scmp.ne.s32.totalorder %s388, %s390
      %p394 = scmp.eq.s32.totalorder %s29, 0
      %p395 = por %p393, %p394
      %p396 = scmp.ne.s32.totalorder %s388, %s390
      %p397 = scmp.eq.s32.totalorder %s34, 1
      %p398 = por %p396, %p397
      %p399 = scmp.ne.s32.totalorder %s390, %s391
      %p400 = scmp.eq.s32.totalorder %s34, 0
      %p401 = por %p399, %p400
      %p402 = scmp.ne.s32.totalorder %s390, %s391
      %p403 = scmp.eq.s32.totalorder %s35, 1
      %p404 = por %p402, %p403
      %p406 = scmp.ne.s32.totalorder %s391, %s405
      %p407 = scmp.eq.s32.totalorder %s35, 0
      %p408 = por %p406, %p407
      %s409 = ssub.s32 %s29, %s36
      %p410 = scmp.eq.s32.totalorder %s409, 0
      %s412 = sadd.s32 %s411, 1
      %s413 = scalar_select %p410, %s411, %s412
      %p416 = pneg %p410
      %p417 = scmp.eq.s32.totalorder %s29, 1
      %p418 = por %p416, %p417
      %p419 = scmp.ne.s32.totalorder %s411, %s414
      %p420 = scmp.eq.s32.totalorder %s29, 0
      %p421 = por %p419, %p420
      %p422 = scmp.ne.s32.totalorder %s411, %s414
      %p423 = scmp.eq.s32.totalorder %s34, 1
      %p424 = por %p422, %p423
      %p425 = scmp.ne.s32.totalorder %s414, %s415
      %p426 = scmp.eq.s32.totalorder %s34, 0
      %p427 = por %p425, %p426
      %p428 = scmp.ne.s32.totalorder %s414, %s415
      %p429 = scmp.eq.s32.totalorder %s35, 1
      %p430 = por %p428, %p429
      %p432 = scmp.ne.s32.totalorder %s415, %s431
      %p433 = scmp.eq.s32.totalorder %s35, 0
      %p434 = por %p432, %p433
      %p435 = scmp.le.s32.totalorder 1, %s29
      %p436 = scmp.lt.s32.totalorder %s29, 3
      %p437 = pnand %p435, %p436
      %p438 = pneg %p437
      // Predicated region
      $region9: #{tpu_custom_call.1} parent=5 // pred_check
        _
      $region10: #{tpu_custom_call.1} parent=5 // pred_check_branch
        %440 = sbr.rel (%p437) target = $region12
      $region11: #{tpu_custom_call.1} parent=5 // pred_region
        %s441 = ssub.s32 %s29, 1
        // Predicated region
        $region13: #{tpu_custom_call.1} parent=11 // pred_check
          %p442 = pneg %p128
        $region14: #{tpu_custom_call.1} parent=11 // pred_check_branch
          %444 = sbr.rel (%p442) target = $region16
        $region15: #{tpu_custom_call.1} parent=11 // pred_region
          _
        $region16: #{tpu_custom_call.1} parent=11 // pred_fallthru
          _
        // Predicated region
        $region17: #{tpu_custom_call.1} parent=11 // pred_check
          %p445 = pneg %p149
        $region18: #{tpu_custom_call.1} parent=11 // pred_check_branch
          %447 = sbr.rel (%p445) target = $region20
        $region19: #{tpu_custom_call.1} parent=11 // pred_region
          _
        $region20: #{tpu_custom_call.1} parent=11 // pred_fallthru
          _
        // Predicated region
        $region21: #{tpu_custom_call.1} parent=11 // pred_check
          %p448 = pneg %p170
        $region22: #{tpu_custom_call.1} parent=11 // pred_check_branch
          %450 = sbr.rel (%p448) target = $region24
        $region23: #{tpu_custom_call.1} parent=11 // pred_region
          _
        $region24: #{tpu_custom_call.1} parent=11 // pred_fallthru
          _
        // Predicated region
        $region25: #{tpu_custom_call.1} parent=11 // pred_check
          %p451 = pneg %p191
        $region26: #{tpu_custom_call.1} parent=11 // pred_check_branch
          %453 = sbr.rel (%p451) target = $region28
        $region27: #{tpu_custom_call.1} parent=11 // pred_region
          %s455 = ssub.s32 32, 32
          %456 = vsyncadd [#allocation6], %s455
          %s457 = sshll.u32 [#allocation5], 4
          %s458 = int_to_ptr.vmem [resolvable:$true] %s457
          %463 = dma.hbm_to_vmem [thread:$0]  %s6, 32, %s458, [#allocation6], 16, 16, 1
        $region28: #{tpu_custom_call.1} parent=11 // pred_fallthru
          _
        // Predicated region
        $region29: #{tpu_custom_call.1} parent=11 // pred_check
          %p464 = pneg %p212
        $region30: #{tpu_custom_call.1} parent=11 // pred_check_branch
          %466 = sbr.rel (%p464) target = $region32
        $region31: #{tpu_custom_call.1} parent=11 // pred_region
          _
        $region32: #{tpu_custom_call.1} parent=11 // pred_fallthru
          _
        // Predicated region
        $region33: #{tpu_custom_call.1} parent=11 // pred_check
          %p467 = pneg %p233
        $region34: #{tpu_custom_call.1} parent=11 // pred_check_branch
          %469 = sbr.rel (%p467) target = $region36
        $region35: #{tpu_custom_call.1} parent=11 // pred_region
          _
        $region36: #{tpu_custom_call.1} parent=11 // pred_fallthru
          _
        // Predicated region
        $region37: #{tpu_custom_call.1} parent=11 // pred_check
          %p470 = pneg %p254
        $region38: #{tpu_custom_call.1} parent=11 // pred_check_branch
          %472 = sbr.rel (%p470) target = $region40
        $region39: #{tpu_custom_call.1} parent=11 // pred_region
          _
        $region40: #{tpu_custom_call.1} parent=11 // pred_fallthru
          _
        // Predicated region
        $region41: #{tpu_custom_call.1} parent=11 // pred_check
          %p473 = pneg %p275
        $region42: #{tpu_custom_call.1} parent=11 // pred_check_branch
          %475 = sbr.rel (%p473) target = $region44
        $region43: #{tpu_custom_call.1} parent=11 // pred_region
          _
        $region44: #{tpu_custom_call.1} parent=11 // pred_fallthru
          _
        // Predicated region
        $region45: #{tpu_custom_call.1} parent=11 // pred_check
          %p476 = pneg %p296
        $region46: #{tpu_custom_call.1} parent=11 // pred_check_branch
          %478 = sbr.rel (%p476) target = $region48
        $region47: #{tpu_custom_call.1} parent=11 // pred_region
          _
        $region48: #{tpu_custom_call.1} parent=11 // pred_fallthru
          _
        // Predicated region
        $region49: #{tpu_custom_call.1} parent=11 // pred_check
          %p479 = pneg %p317
        $region50: #{tpu_custom_call.1} parent=11 // pred_check_branch
          %481 = sbr.rel (%p479) target = $region52
        $region51: #{tpu_custom_call.1} parent=11 // pred_region
          _
        $region52: #{tpu_custom_call.1} parent=11 // pred_fallthru
          _
        // Predicated region
        $region53: #{tpu_custom_call.1} parent=11 // pred_check
          %p482 = pneg %p338
        $region54: #{tpu_custom_call.1} parent=11 // pred_check_branch
          %484 = sbr.rel (%p482) target = $region56
        $region55: #{tpu_custom_call.1} parent=11 // pred_region
          _
        $region56: #{tpu_custom_call.1} parent=11 // pred_fallthru
          _
        // Predicated region
        $region57: #{tpu_custom_call.1} parent=11 // pred_check
          %p485 = pneg %p359
        $region58: #{tpu_custom_call.1} parent=11 // pred_check_branch
          %487 = sbr.rel (%p485) target = $region60
        $region59: #{tpu_custom_call.1} parent=11 // pred_region
          _
        $region60: #{tpu_custom_call.1} parent=11 // pred_fallthru
          _
        // Predicated region
        $region61: #{tpu_custom_call.1} parent=11 // pred_check
          %p488 = pneg %p380
        $region62: #{tpu_custom_call.1} parent=11 // pred_check_branch
          %490 = sbr.rel (%p488) target = $region64
        $region63: #{tpu_custom_call.1} parent=11 // pred_region
          _
        $region64: #{tpu_custom_call.1} parent=11 // pred_fallthru
          _
        // Predicated region
        $region65: #{tpu_custom_call.1} parent=11 // pred_check
          %p491 = pneg %p401
        $region66: #{tpu_custom_call.1} parent=11 // pred_check_branch
          %493 = sbr.rel (%p491) target = $region68
        $region67: #{tpu_custom_call.1} parent=11 // pred_region
          _
        $region68: #{tpu_custom_call.1} parent=11 // pred_fallthru
          _
      $region12: #{tpu_custom_call.1} parent=5 // pred_fallthru
        _
      %p494 = scmp.lt.s32.totalorder %s29, 2
      // Predicated region
      $region69: #{tpu_custom_call.1} parent=5 // pred_check
        %p495 = pneg %p494
      $region70: #{tpu_custom_call.1} parent=5 // pred_check_branch
        %497 = sbr.rel (%p495) target = $region72
      $region71: #{tpu_custom_call.1} parent=5 // pred_region
        // Predicated region
        $region73: #{tpu_custom_call.1} parent=71 // pred_check
          %p498 = pneg %p49
        $region74: #{tpu_custom_call.1} parent=71 // pred_check_branch
          %500 = sbr.rel (%p498) target = $region76
        $region75: #{tpu_custom_call.1} parent=71 // pred_region
          %p501 = scmp.lt.s32.totalorder %s29, 1
          %s502 = scalar_select %p501, %s29, 1
          %s503 = smul.addr %s502, 8
          %s504 = scalar_lea.vmem %s0, %s503
        $region76: #{tpu_custom_call.1} parent=71 // pred_fallthru
          _
        // Predicated region
        $region77: #{tpu_custom_call.1} parent=71 // pred_check
          %p505 = pneg %p75
        $region78: #{tpu_custom_call.1} parent=71 // pred_check_branch
          %507 = sbr.rel (%p505) target = $region80
        $region79: #{tpu_custom_call.1} parent=71 // pred_region
          %p508 = scmp.lt.s32.totalorder %s29, 1
          %s509 = scalar_select %p508, %s29, 1
          %s510 = smul.addr %s509, 8
          %s511 = scalar_lea.vmem %s1, %s510
        $region80: #{tpu_custom_call.1} parent=71 // pred_fallthru
          _
        // Predicated region
        $region81: #{tpu_custom_call.1} parent=71 // pred_check
          %p512 = pneg %p101
        $region82: #{tpu_custom_call.1} parent=71 // pred_check_branch
          %514 = sbr.rel (%p512) target = $region84
        $region83: #{tpu_custom_call.1} parent=71 // pred_region
          %s515 = sand.u32 %s91, 1
          %s516 = scalar_lea.sflag [#allocation4], %s515
          %s517 = sand.u32 %s91, 1
          %s518 = scalar_lea.vmem [#allocation3], %s517
          %s520 = ssub.s32 16, 16
          %521 = vsyncadd %s516, %s520
          %s522 = smul.addr %s29, 16
          %s523 = scalar_lea.hbm %s2, %s522
          %s525 = sshll.u32 %s518, 4
          %s526 = int_to_ptr.vmem [resolvable:$true] %s525
          %528 = dma.hbm_to_vmem [thread:$0]  %s523, 16, %s526, %s516
        $region84: #{tpu_custom_call.1} parent=71 // pred_fallthru
          _
      $region72: #{tpu_custom_call.1} parent=5 // pred_fallthru
        _
      %p529 = scmp.le.s32.totalorder 1, %s29
      %p530 = scmp.lt.s32.totalorder %s29, 3
      %p531 = pnand %p529, %p530
      %p532 = pneg %p531
      // Predicated region
      $region85: #{tpu_custom_call.1} parent=5 // pred_check
        _
      $region86: #{tpu_custom_call.1} parent=5 // pred_check_branch
        %534 = sbr.rel (%p531) target = $region88
      $region87: #{tpu_custom_call.1} parent=5 // pred_region
        %s535 = ssub.s32 %s29, 1
        %s536 = sand.u32 %s94, 1
        %s537 = scalar_lea.sflag [#allocation4], %s536
        %s538 = sand.u32 %s94, 1
        %s539 = scalar_lea.vmem [#allocation3], %s538
        // Predicated region
        $region89: #{tpu_custom_call.1} parent=87 // pred_check
          %p540 = pneg %p107
        $region90: #{tpu_custom_call.1} parent=87 // pred_check_branch
          %542 = sbr.rel (%p540) target = $region92
        $region91: #{tpu_custom_call.1} parent=87 // pred_region
          %543 = dma.done %s537, 16
        $region92: #{tpu_custom_call.1} parent=87 // pred_fallthru
          _
        // Predicated region
        $region93: #{tpu_custom_call.1} parent=87 // pred_check
          %p544 = pneg %p191
        $region94: #{tpu_custom_call.1} parent=87 // pred_check_branch
          %546 = sbr.rel (%p544) target = $region96
        $region95: #{tpu_custom_call.1} parent=87 // pred_region
          %547 = dma.done [#allocation6], 32
        $region96: #{tpu_custom_call.1} parent=87 // pred_fallthru
          _
        %p548 = scmp.lt.s32.totalorder %s34, 1
        %s549 = scalar_select %p548, %s34, 1
        %s550 = smul.addr %s549, 8
        %s551 = scalar_lea.vmem %s0, %s550
        %p552 = pneg %p55
        %p553 = pneg %p52
        %p554 = scmp.lt.s32.totalorder %s34, 1
        %s555 = scalar_select %p554, %s34, 1
        %s556 = smul.addr %s555, 8
        %s557 = scalar_lea.vmem %s1, %s556
        %p558 = pneg %p81
        %p559 = pneg %p78
        %s560 = sand.u32 %s94, 1
        %s561 = scalar_lea.sflag [#allocation4], %s560
        %s562 = sand.u32 %s94, 1
        %s563 = scalar_lea.vmem [#allocation3], %s562
        %p564 = pneg %p107
        %p565 = pneg %p104
        %p566 = pneg %p128
        %p567 = pneg %p125
        %p568 = pneg %p149
        %p569 = pneg %p146
        %p570 = pneg %p170
        %p571 = pneg %p167
        %p572 = pneg %p191
        %p573 = pneg %p188
        %p574 = pneg %p212
        %p575 = pneg %p209
        %p576 = pneg %p233
        %p577 = pneg %p230
        %p578 = pneg %p254
        %p579 = pneg %p251
        %p580 = pneg %p275
        %p581 = pneg %p272
        %p582 = pneg %p296
        %p583 = pneg %p293
        %p584 = pneg %p317
        %p585 = pneg %p314
        %p586 = pneg %p338
        %p587 = pneg %p335
        %p588 = pneg %p359
        %p589 = pneg %p356
        %p590 = pneg %p380
        %p591 = pneg %p377
        %p592 = pneg %p401
        %p593 = pneg %p398
        %p594 = pneg %p427
        %p595 = pneg %p424
        %p596 = scmp.lt.s32.totalorder %s34, 1
        %s597 = scalar_select %p596, %s34, 1
        %s598 = smul.addr %s597, 8
        %s599 = scalar_lea.vmem %s17, %s598
        %p600 = scmp.lt.s32.totalorder %s34, 1
        %s601 = scalar_select %p600, %s34, 1
        %s602 = smul.addr %s601, 8
        %s603 = scalar_lea.vmem %s0, %s602
        %p604 = scmp.lt.s32.totalorder %s34, 1
        %s605 = scalar_select %p604, %s34, 1
        %s606 = smul.addr %s605, 8
        %s607 = scalar_lea.vmem %s1, %s606
        %p608 = scmp.lt.s32.totalorder %s34, 1
        %s609 = scalar_select %p608, %s34, 1
        %s610 = smul.addr %s609, 8
        %s611 = scalar_lea.vmem %s17, %s610
        %v613 = vld [vmem:[%s607] sm:$0xff]
        %v614 = vld [vmem:[%s539] sm:$0x1]
        %v615 = vld [vmem:[%s603] sm:$0xff]
        %617 = vset.pattern.permute.xlu0 0
        %618 = vperm.xlu0 %617, %v613
        %v619 = vpop.permute.xlu0 %618
        %v621 = vmul.f32 %v615, %v619
        %v622 = vld [vmem:[%s3] sm:$0xff]
        %v623 = vadd.f32 %v621, %v622
        %v624 = vpack.c.bf16 %v623, %v623
        %v625 = vld [vmem:[%s5] sm:$0xf]
        %v626 = vld [vmem:[%s5 + $0x4] sm:$0xf]
        %v627 = vld [vmem:[%s5 + $0x8] sm:$0xf]
        %v628 = vld [vmem:[%s5 + $0xc] sm:$0xf]
        %v629 = vld [vmem:[#allocation5] sm:$0x1]
        %v631 = vlaneseq
        %v632 = vshrl.u32 %v631, 7
        %v633 = vsub.s32 0, %v632
        %v634 = vrot.slane %v629, %v633
        %v640 = vunpack.c.l.b16 %v625
        %v641 = vunpack.c.l.b16 %v626
        %v642 = vunpack.c.l.b16 %v627
        %v643 = vunpack.c.l.b16 %v628
        %v644 = vpack.c.b16 %v641, %v640
        %v645 = vpack.c.b16 %v643, %v642
        %vm648 = vcmask 261120
        %v650 = vsel %vm648, %v624, 0
        %652 = vmatprep.subr.bf16.mxu0 0
        %653 = vmatpush1.bf16.msra.mxu0 0
        %654 = vmatprep.subr.bf16.mxu0 0
        %655 = vmatpush1.bf16.msra.mxu0 0
        %656 = vmatprep.subr.bf16.mxu0 0
        %657 = vmatpush1.bf16.msra.mxu0 0
        %658 = vmatprep.subr.bf16.mxu0 0
        %659 = vmatpush1.bf16.msra.mxu0 0
        %660 = vmatprep.subr.bf16.mxu0 0
        %661 = vmatpush1.bf16.msra.mxu0 0
        %662 = vmatprep.subr.bf16.mxu0 0
        %663 = vmatpush1.bf16.msra.mxu0 0
        %664 = vmatprep.subr.bf16.mxu0 0
        %665 = vmatpush1.bf16.msra.mxu0 %v645
        %666 = vmatprep.subr.bf16.mxu0 0
        %667 = vmatpush1.bf16.msra.mxu0 %v644
        %668 = vmatprep.subr.bf16.mxu0 0
        %669 = vmatpush2.bf16.msra.mxu0 0
        %670 = vmatprep.subr.bf16.mxu0 0
        %671 = vmatpush2.bf16.msra.mxu0 0
        %672 = vmatprep.subr.bf16.mxu0 0
        %673 = vmatpush2.bf16.msra.mxu0 0
        %674 = vmatprep.subr.bf16.mxu0 0
        %675 = vmatpush2.bf16.msra.mxu0 0
        %676 = vmatprep.subr.bf16.mxu0 0
        %677 = vmatpush2.bf16.msra.mxu0 0
        %678 = vmatprep.subr.bf16.mxu0 0
        %679 = vmatpush2.bf16.msra.mxu0 0
        %680 = vmatprep.subr.bf16.mxu0 0
        %681 = vmatpush2.bf16.msra.mxu0 0
        %682 = vmatprep.subr.bf16.mxu0 0
        %683 = vmatpush2.bf16.msra.mxu0 0
        %684 = vmatprep.mubr.bf16.mxu0 0
        %685 = vmatmul.mubr.bf16.gmra.mxu0 %v650
        %v686 = vpop.f32.mrf.mxu0
        %v687 = vadd.f32 %v634, %v686
        %v688 = vpop.f32.mrf.mxu0
        %v689 = vpop.f32.mrf.mxu0
        %v690 = vpop.f32.mrf.mxu0
        %691 = vdwg.mxu0
        %v692 = vmul.f32 %v687, 0.35355338
        %694 = vrot.lane.b32.xlu0 %v692, 120
        %v695 = vpop.permute.xlu0 %694
        %697 = vrot.lane.b32.xlu0 %v692, 112
        %v698 = vpop.permute.xlu0 %697
        %700 = vrot.lane.b32.xlu0 %v692, 104
        %v701 = vpop.permute.xlu0 %700
        %v703 = vcombine.low %v692, %v698
        %v704 = vcombine.high %v692, %v698
        %v706 = vunpack.c.l.s4 1983009808
        %v707 = vunpack.c.0.s8 %v706
        %v708 = vlaneseq
        %v709 = vshrl.u32 %v708, 7
        %v710 = vsub.s32 %v707, %v709
        %v711 = vrot.slane %v703, %v710
        %v713 = vunpack.c.l.s4 1983009808
        %v714 = vunpack.c.0.s8 %v713
        %v715 = vlaneseq
        %v716 = vshrl.u32 %v715, 7
        %v717 = vsub.s32 %v714, %v716
        %v718 = vrot.slane %v704, %v717
        %v719 = vcombine.low %v695, %v701
        %v720 = vcombine.high %v695, %v701
        %v722 = vunpack.c.l.s4 1983009808
        %v723 = vunpack.c.0.s8 %v722
        %v724 = vlaneseq
        %v725 = vshrl.u32 %v724, 7
        %v726 = vsub.s32 %v723, %v725
        %v727 = vrot.slane %v719, %v726
        %v729 = vunpack.c.l.s4 1983009808
        %v730 = vunpack.c.0.s8 %v729
        %v731 = vlaneseq
        %v732 = vshrl.u32 %v731, 7
        %v733 = vsub.s32 %v730, %v732
        %v734 = vrot.slane %v720, %v733
        %v735 = vcombine.low %v711, %v727
        %v736 = vcombine.high %v711, %v727
        %v738 = vunpack.c.l.s4 1934713408
        %v739 = vunpack.c.0.s8 %v738
        %v740 = vlaneseq
        %v741 = vshrl.u32 %v740, 7
        %v742 = vsub.s32 %v739, %v741
        %v743 = vrot.slane %v735, %v742
        %v745 = vunpack.c.l.s4 1934713408
        %v746 = vunpack.c.0.s8 %v745
        %v747 = vlaneseq
        %v748 = vshrl.u32 %v747, 7
        %v749 = vsub.s32 %v746, %v748
        %v750 = vrot.slane %v736, %v749
        %v751 = vcombine.low %v718, %v734
        %v752 = vcombine.high %v718, %v734
        %v754 = vunpack.c.l.s4 1934713408
        %v755 = vunpack.c.0.s8 %v754
        %v756 = vlaneseq
        %v757 = vshrl.u32 %v756, 7
        %v758 = vsub.s32 %v755, %v757
        %v759 = vrot.slane %v751, %v758
        %v761 = vunpack.c.l.s4 1934713408
        %v762 = vunpack.c.0.s8 %v761
        %v763 = vlaneseq
        %v764 = vshrl.u32 %v763, 7
        %v765 = vsub.s32 %v762, %v764
        %v766 = vrot.slane %v752, %v765
        %v767 = vcombine.high %v743, 0.0
        %v768 = vcombine.high %v750, 0.0
        %v769 = vcombine.high %v759, 0.0
        %v770 = vcombine.high %v766, 0.0
        %v771 = vpack.c.bf16 %v743, %v743
        %v772 = vpack.c.bf16 %v767, %v767
        %v773 = vpack.c.bf16 %v750, %v750
        %v774 = vpack.c.bf16 %v768, %v768
        %v775 = vpack.c.bf16 %v759, %v759
        %v776 = vpack.c.bf16 %v769, %v769
        %v777 = vpack.c.bf16 %v766, %v766
        %v778 = vpack.c.bf16 %v770, %v770
        %780 = vrot.lane.b32.xlu0 %v687, 120
        %v781 = vpop.permute.xlu0 %780
        %782 = vrot.lane.b32.xlu0 %v687, 112
        %v783 = vpop.permute.xlu0 %782
        %784 = vrot.lane.b32.xlu0 %v687, 104
        %v785 = vpop.permute.xlu0 %784
        %786 = vrot.lane.b32.xlu0 %v687, 96
        %v787 = vpop.permute.xlu0 %786
        %788 = vrot.lane.b32.xlu0 %v781, 96
        %v789 = vpop.permute.xlu0 %788
        %790 = vrot.lane.b32.xlu0 %v783, 96
        %v791 = vpop.permute.xlu0 %790
        %792 = vrot.lane.b32.xlu0 %v785, 96
        %v793 = vpop.permute.xlu0 %792
        %v798 = vcombine.low %v787, %v791
        %v799 = vcombine.high %v787, %v791
        %v801 = vunpack.c.l.s4 1983009808
        %v802 = vunpack.c.0.s8 %v801
        %v803 = vlaneseq
        %v804 = vshrl.u32 %v803, 7
        %v805 = vsub.s32 %v802, %v804
        %v806 = vrot.slane %v798, %v805
        %v808 = vunpack.c.l.s4 1983009808
        %v809 = vunpack.c.0.s8 %v808
        %v810 = vlaneseq
        %v811 = vshrl.u32 %v810, 7
        %v812 = vsub.s32 %v809, %v811
        %v813 = vrot.slane %v799, %v812
        %v814 = vcombine.low %v789, %v793
        %v815 = vcombine.high %v789, %v793
        %v817 = vunpack.c.l.s4 1983009808
        %v818 = vunpack.c.0.s8 %v817
        %v819 = vlaneseq
        %v820 = vshrl.u32 %v819, 7
        %v821 = vsub.s32 %v818, %v820
        %v822 = vrot.slane %v814, %v821
        %v824 = vunpack.c.l.s4 1983009808
        %v825 = vunpack.c.0.s8 %v824
        %v826 = vlaneseq
        %v827 = vshrl.u32 %v826, 7
        %v828 = vsub.s32 %v825, %v827
        %v829 = vrot.slane %v815, %v828
        %v830 = vcombine.low %v806, %v822
        %v831 = vcombine.high %v806, %v822
        %v833 = vunpack.c.l.s4 1934713408
        %v834 = vunpack.c.0.s8 %v833
        %v835 = vlaneseq
        %v836 = vshrl.u32 %v835, 7
        %v837 = vsub.s32 %v834, %v836
        %v838 = vrot.slane %v830, %v837
        %v840 = vunpack.c.l.s4 1934713408
        %v841 = vunpack.c.0.s8 %v840
        %v842 = vlaneseq
        %v843 = vshrl.u32 %v842, 7
        %v844 = vsub.s32 %v841, %v843
        %v845 = vrot.slane %v831, %v844
        %v846 = vcombine.low %v813, %v829
        %v847 = vcombine.high %v813, %v829
        %v849 = vunpack.c.l.s4 1934713408
        %v850 = vunpack.c.0.s8 %v849
        %v851 = vlaneseq
        %v852 = vshrl.u32 %v851, 7
        %v853 = vsub.s32 %v850, %v852
        %v854 = vrot.slane %v846, %v853
        %v856 = vunpack.c.l.s4 1934713408
        %v857 = vunpack.c.0.s8 %v856
        %v858 = vlaneseq
        %v859 = vshrl.u32 %v858, 7
        %v860 = vsub.s32 %v857, %v859
        %v861 = vrot.slane %v847, %v860
        %v862 = vcombine.high %v838, 0.0
        %v863 = vcombine.high %v845, 0.0
        %v864 = vcombine.high %v854, 0.0
        %v865 = vcombine.high %v861, 0.0
        %v866 = vpack.c.bf16 %v838, %v838
        %v867 = vpack.c.bf16 %v862, %v862
        %v868 = vpack.c.bf16 %v845, %v845
        %v869 = vpack.c.bf16 %v863, %v863
        %v870 = vpack.c.bf16 %v854, %v854
        %v871 = vpack.c.bf16 %v864, %v864
        %v872 = vpack.c.bf16 %v861, %v861
        %v873 = vpack.c.bf16 %v865, %v865
        %874 = vrot.lane.b32.xlu0 %v687, 64
        %v875 = vpop.permute.xlu0 %874
        %876 = vrot.lane.b32.xlu0 %v781, 64
        %v877 = vpop.permute.xlu0 %876
        %878 = vrot.lane.b32.xlu0 %v783, 64
        %v879 = vpop.permute.xlu0 %878
        %880 = vrot.lane.b32.xlu0 %v785, 64
        %v881 = vpop.permute.xlu0 %880
        %v886 = vcombine.low %v875, %v879
        %v887 = vcombine.high %v875, %v879
        %v889 = vunpack.c.l.s4 1983009808
        %v890 = vunpack.c.0.s8 %v889
        %v891 = vlaneseq
        %v892 = vshrl.u32 %v891, 7
        %v893 = vsub.s32 %v890, %v892
        %v894 = vrot.slane %v886, %v893
        %v896 = vunpack.c.l.s4 1983009808
        %v897 = vunpack.c.0.s8 %v896
        %v898 = vlaneseq
        %v899 = vshrl.u32 %v898, 7
        %v900 = vsub.s32 %v897, %v899
        %v901 = vrot.slane %v887, %v900
        %v902 = vcombine.low %v877, %v881
        %v903 = vcombine.high %v877, %v881
        %v905 = vunpack.c.l.s4 1983009808
        %v906 = vunpack.c.0.s8 %v905
        %v907 = vlaneseq
        %v908 = vshrl.u32 %v907, 7
        %v909 = vsub.s32 %v906, %v908
        %v910 = vrot.slane %v902, %v909
        %v912 = vunpack.c.l.s4 1983009808
        %v913 = vunpack.c.0.s8 %v912
        %v914 = vlaneseq
        %v915 = vshrl.u32 %v914, 7
        %v916 = vsub.s32 %v913, %v915
        %v917 = vrot.slane %v903, %v916
        %v918 = vcombine.low %v894, %v910
        %v919 = vcombine.high %v894, %v910
        %v921 = vunpack.c.l.s4 1934713408
        %v922 = vunpack.c.0.s8 %v921
        %v923 = vlaneseq
        %v924 = vshrl.u32 %v923, 7
        %v925 = vsub.s32 %v922, %v924
        %v926 = vrot.slane %v918, %v925
        %v928 = vunpack.c.l.s4 1934713408
        %v929 = vunpack.c.0.s8 %v928
        %v930 = vlaneseq
        %v931 = vshrl.u32 %v930, 7
        %v932 = vsub.s32 %v929, %v931
        %v933 = vrot.slane %v919, %v932
        %v934 = vcombine.low %v901, %v917
        %v935 = vcombine.high %v901, %v917
        %v937 = vunpack.c.l.s4 1934713408
        %v938 = vunpack.c.0.s8 %v937
        %v939 = vlaneseq
        %v940 = vshrl.u32 %v939, 7
        %v941 = vsub.s32 %v938, %v940
        %v942 = vrot.slane %v934, %v941
        %v944 = vunpack.c.l.s4 1934713408
        %v945 = vunpack.c.0.s8 %v944
        %v946 = vlaneseq
        %v947 = vshrl.u32 %v946, 7
        %v948 = vsub.s32 %v945, %v947
        %v949 = vrot.slane %v935, %v948
        %v950 = vcombine.high %v926, 0.0
        %v951 = vcombine.high %v933, 0.0
        %v952 = vcombine.high %v942, 0.0
        %v953 = vcombine.high %v949, 0.0
        %v954 = vpack.c.bf16 %v926, %v926
        %v955 = vpack.c.bf16 %v950, %v950
        %v956 = vpack.c.bf16 %v933, %v933
        %v957 = vpack.c.bf16 %v951, %v951
        %v958 = vpack.c.bf16 %v942, %v942
        %v959 = vpack.c.bf16 %v952, %v952
        %v960 = vpack.c.bf16 %v949, %v949
        %v961 = vpack.c.bf16 %v953, %v953
        %v963 = vlaneseq
        %v964 = vshrl.u32 %v963, 7
        %v965 = vsub.s32 0, %v964
        %v966 = vrot.slane %v614, %v965
        %v968 = vcombine.low %v771, %v775
        %v970 = vunpack.c.l.s4 1983009808
        %v971 = vunpack.c.0.s8 %v970
        %v972 = vlaneseq
        %v973 = vshrl.u32 %v972, 7
        %v974 = vsub.s32 %v971, %v973
        %v975 = vrot.slane %v968, %v974
        %v976 = vcombine.low %v773, %v777
        %v978 = vunpack.c.l.s4 1983009808
        %v979 = vunpack.c.0.s8 %v978
        %v980 = vlaneseq
        %v981 = vshrl.u32 %v980, 7
        %v982 = vsub.s32 %v979, %v981
        %v983 = vrot.slane %v976, %v982
        %v984 = vcombine.low %v975, %v983
        %v986 = vunpack.c.l.s4 1934713408
        %v987 = vunpack.c.0.s8 %v986
        %v988 = vlaneseq
        %v989 = vshrl.u32 %v988, 7
        %v990 = vsub.s32 %v987, %v989
        %v991 = vrot.slane %v984, %v990
        %v992 = vcombine.high %v991, 0
        %v993 = vcombine.low %v772, %v776
        %v995 = vunpack.c.l.s4 1983009808
        %v996 = vunpack.c.0.s8 %v995
        %v997 = vlaneseq
        %v998 = vshrl.u32 %v997, 7
        %v999 = vsub.s32 %v996, %v998
        %v1000 = vrot.slane %v993, %v999
        %v1001 = vcombine.low %v774, %v778
        %v1003 = vunpack.c.l.s4 1983009808
        %v1004 = vunpack.c.0.s8 %v1003
        %v1005 = vlaneseq
        %v1006 = vshrl.u32 %v1005, 7
        %v1007 = vsub.s32 %v1004, %v1006
        %v1008 = vrot.slane %v1001, %v1007
        %v1009 = vcombine.low %v1000, %v1008
        %v1011 = vunpack.c.l.s4 1934713408
        %v1012 = vunpack.c.0.s8 %v1011
        %v1013 = vlaneseq
        %v1014 = vshrl.u32 %v1013, 7
        %v1015 = vsub.s32 %v1012, %v1014
        %v1016 = vrot.slane %v1009, %v1015
        %v1017 = vcombine.high %v1016, 0
        %v1020 = vpack.i.b16 %v1016, %v991
        %v1021 = vshrl.u32 %v991, 16
        %v1022 = vshrl.u32 %v1016, 16
        %v1023 = vpack.i.b16 %v1022, %v1021
        %v1026 = vpack.i.b16 %v1017, %v992
        %v1027 = vshrl.u32 %v992, 16
        %v1028 = vshrl.u32 %v1017, 16
        %v1029 = vpack.i.b16 %v1028, %v1027
        %1030 = vxpose.xlu0.c.b16.start [1/8] %v866, 128
        %1031 = vxpose.xlu0.c.b16.cont [2/8] 0, 128
        %1032 = vxpose.xlu0.c.b16.cont [3/8] 0, 128
        %1033 = vxpose.xlu0.c.b16.cont [4/8] 0, 128
        %1034 = vxpose.xlu0.c.b16.cont [5/8] 0, 128
        %1035 = vxpose.xlu0.c.b16.cont [6/8] 0, 128
        %1036 = vxpose.xlu0.c.b16.cont [7/8] 0, 128
        %1037 = vxpose.xlu0.c.b16.end [8/8] 0, 128
        %v1038 = vpop.trf.xlu0
        %v1039 = vpop.trf.xlu0
        %v1040 = vpop.trf.xlu0
        %v1041 = vpop.trf.xlu0
        %v1042 = vpop.trf.xlu0
        %v1043 = vpop.trf.xlu0
        %v1044 = vpop.trf.xlu0
        %v1045 = vpop.trf.xlu0
        %1046 = vxpose.xlu0.c.b16.start [1/8] %v867, 128
        %1047 = vxpose.xlu0.c.b16.cont [2/8] 0, 128
        %1048 = vxpose.xlu0.c.b16.cont [3/8] 0, 128
        %1049 = vxpose.xlu0.c.b16.cont [4/8] 0, 128
        %1050 = vxpose.xlu0.c.b16.cont [5/8] 0, 128
        %1051 = vxpose.xlu0.c.b16.cont [6/8] 0, 128
        %1052 = vxpose.xlu0.c.b16.cont [7/8] 0, 128
        %1053 = vxpose.xlu0.c.b16.end [8/8] 0, 128
        %v1054 = vpop.trf.xlu0
        %v1055 = vpop.trf.xlu0
        %v1056 = vpop.trf.xlu0
        %v1057 = vpop.trf.xlu0
        %v1058 = vpop.trf.xlu0
        %v1059 = vpop.trf.xlu0
        %v1060 = vpop.trf.xlu0
        %v1061 = vpop.trf.xlu0
        %1062 = vxpose.xlu0.c.b16.start [1/8] %v868, 128
        %1063 = vxpose.xlu0.c.b16.cont [2/8] 0, 128
        %1064 = vxpose.xlu0.c.b16.cont [3/8] 0, 128
        %1065 = vxpose.xlu0.c.b16.cont [4/8] 0, 128
        %1066 = vxpose.xlu0.c.b16.cont [5/8] 0, 128
        %1067 = vxpose.xlu0.c.b16.cont [6/8] 0, 128
        %1068 = vxpose.xlu0.c.b16.cont [7/8] 0, 128
        %1069 = vxpose.xlu0.c.b16.end [8/8] 0, 128
        %v1070 = vpop.trf.xlu0
        %v1071 = vpop.trf.xlu0
        %v1072 = vpop.trf.xlu0
        %v1073 = vpop.trf.xlu0
        %v1074 = vpop.trf.xlu0
        %v1075 = vpop.trf.xlu0
        %v1076 = vpop.trf.xlu0
        %v1077 = vpop.trf.xlu0
        %1078 = vxpose.xlu0.c.b16.start [1/8] %v869, 128
        %1079 = vxpose.xlu0.c.b16.cont [2/8] 0, 128
        %1080 = vxpose.xlu0.c.b16.cont [3/8] 0, 128
        %1081 = vxpose.xlu0.c.b16.cont [4/8] 0, 128
        %1082 = vxpose.xlu0.c.b16.cont [5/8] 0, 128
        %1083 = vxpose.xlu0.c.b16.cont [6/8] 0, 128
        %1084 = vxpose.xlu0.c.b16.cont [7/8] 0, 128
        %1085 = vxpose.xlu0.c.b16.end [8/8] 0, 128
        %v1086 = vpop.trf.xlu0
        %v1087 = vpop.trf.xlu0
        %v1088 = vpop.trf.xlu0
        %v1089 = vpop.trf.xlu0
        %v1090 = vpop.trf.xlu0
        %v1091 = vpop.trf.xlu0
        %v1092 = vpop.trf.xlu0
        %v1093 = vpop.trf.xlu0
        %1094 = vxpose.xlu0.c.b16.start [1/8] %v870, 128
        %1095 = vxpose.xlu0.c.b16.cont [2/8] 0, 128
        %1096 = vxpose.xlu0.c.b16.cont [3/8] 0, 128
        %1097 = vxpose.xlu0.c.b16.cont [4/8] 0, 128
        %1098 = vxpose.xlu0.c.b16.cont [5/8] 0, 128
        %1099 = vxpose.xlu0.c.b16.cont [6/8] 0, 128
        %1100 = vxpose.xlu0.c.b16.cont [7/8] 0, 128
        %1101 = vxpose.xlu0.c.b16.end [8/8] 0, 128
        %v1102 = vpop.trf.xlu0
        %v1103 = vpop.trf.xlu0
        %v1104 = vpop.trf.xlu0
        %v1105 = vpop.trf.xlu0
        %v1106 = vpop.trf.xlu0
        %v1107 = vpop.trf.xlu0
        %v1108 = vpop.trf.xlu0
        %v1109 = vpop.trf.xlu0
        %1110 = vxpose.xlu0.c.b16.start [1/8] %v871, 128
        %1111 = vxpose.xlu0.c.b16.cont [2/8] 0, 128
        %1112 = vxpose.xlu0.c.b16.cont [3/8] 0, 128
        %1113 = vxpose.xlu0.c.b16.cont [4/8] 0, 128
        %1114 = vxpose.xlu0.c.b16.cont [5/8] 0, 128
        %1115 = vxpose.xlu0.c.b16.cont [6/8] 0, 128
        %1116 = vxpose.xlu0.c.b16.cont [7/8] 0, 128
        %1117 = vxpose.xlu0.c.b16.end [8/8] 0, 128
        %v1118 = vpop.trf.xlu0
        %v1119 = vpop.trf.xlu0
        %v1120 = vpop.trf.xlu0
        %v1121 = vpop.trf.xlu0
        %v1122 = vpop.trf.xlu0
        %v1123 = vpop.trf.xlu0
        %v1124 = vpop.trf.xlu0
        %v1125 = vpop.trf.xlu0
        %1126 = vxpose.xlu0.c.b16.start [1/8] %v872, 128
        %1127 = vxpose.xlu0.c.b16.cont [2/8] 0, 128
        %1128 = vxpose.xlu0.c.b16.cont [3/8] 0, 128
        %1129 = vxpose.xlu0.c.b16.cont [4/8] 0, 128
        %1130 = vxpose.xlu0.c.b16.cont [5/8] 0, 128
        %1131 = vxpose.xlu0.c.b16.cont [6/8] 0, 128
        %1132 = vxpose.xlu0.c.b16.cont [7/8] 0, 128
        %1133 = vxpose.xlu0.c.b16.end [8/8] 0, 128
        %v1134 = vpop.trf.xlu0
        %v1135 = vpop.trf.xlu0
        %v1136 = vpop.trf.xlu0
        %v1137 = vpop.trf.xlu0
        %v1138 = vpop.trf.xlu0
        %v1139 = vpop.trf.xlu0
        %v1140 = vpop.trf.xlu0
        %v1141 = vpop.trf.xlu0
        %1142 = vxpose.xlu0.c.b16.start [1/8] %v873, 128
        %1143 = vxpose.xlu0.c.b16.cont [2/8] 0, 128
        %1144 = vxpose.xlu0.c.b16.cont [3/8] 0, 128
        %1145 = vxpose.xlu0.c.b16.cont [4/8] 0, 128
        %1146 = vxpose.xlu0.c.b16.cont [5/8] 0, 128
        %1147 = vxpose.xlu0.c.b16.cont [6/8] 0, 128
        %1148 = vxpose.xlu0.c.b16.cont [7/8] 0, 128
        %1149 = vxpose.xlu0.c.b16.end [8/8] 0, 128
        %v1150 = vpop.trf.xlu0
        %v1151 = vpop.trf.xlu0
        %v1152 = vpop.trf.xlu0
        %v1153 = vpop.trf.xlu0
        %v1154 = vpop.trf.xlu0
        %v1155 = vpop.trf.xlu0
        %v1156 = vpop.trf.xlu0
        %v1157 = vpop.trf.xlu0
        %v1158 = vcombine.low %v1038, %v1102
        %v1160 = vunpack.c.l.s4 1983009808
        %v1161 = vunpack.c.0.s8 %v1160
        %v1162 = vlaneseq
        %v1163 = vshrl.u32 %v1162, 7
        %v1164 = vsub.s32 %v1161, %v1163
        %v1165 = vrot.slane %v1158, %v1164
        %v1166 = vcombine.low %v1070, %v1134
        %v1168 = vunpack.c.l.s4 1983009808
        %v1169 = vunpack.c.0.s8 %v1168
        %v1170 = vlaneseq
        %v1171 = vshrl.u32 %v1170, 7
        %v1172 = vsub.s32 %v1169, %v1171
        %v1173 = vrot.slane %v1166, %v1172
        %v1174 = vcombine.low %v1165, %v1173
        %v1175 = vcombine.high %v1165, %v1173
        %v1177 = vunpack.c.l.s4 1934713408
        %v1178 = vunpack.c.0.s8 %v1177
        %v1179 = vlaneseq
        %v1180 = vshrl.u32 %v1179, 7
        %v1181 = vsub.s32 %v1178, %v1180
        %v1182 = vrot.slane %v1174, %v1181
        %v1184 = vunpack.c.l.s4 1934713408
        %v1185 = vunpack.c.0.s8 %v1184
        %v1186 = vlaneseq
        %v1187 = vshrl.u32 %v1186, 7
        %v1188 = vsub.s32 %v1185, %v1187
        %v1189 = vrot.slane %v1175, %v1188
        %v1190 = vcombine.high %v1182, 0
        %v1191 = vcombine.high %v1189, 0
        %v1192 = vcombine.low %v1054, %v1118
        %v1194 = vunpack.c.l.s4 1983009808
        %v1195 = vunpack.c.0.s8 %v1194
        %v1196 = vlaneseq
        %v1197 = vshrl.u32 %v1196, 7
        %v1198 = vsub.s32 %v1195, %v1197
        %v1199 = vrot.slane %v1192, %v1198
        %v1200 = vcombine.low %v1086, %v1150
        %v1202 = vunpack.c.l.s4 1983009808
        %v1203 = vunpack.c.0.s8 %v1202
        %v1204 = vlaneseq
        %v1205 = vshrl.u32 %v1204, 7
        %v1206 = vsub.s32 %v1203, %v1205
        %v1207 = vrot.slane %v1200, %v1206
        %v1208 = vcombine.low %v1199, %v1207
        %v1209 = vcombine.high %v1199, %v1207
        %v1211 = vunpack.c.l.s4 1934713408
        %v1212 = vunpack.c.0.s8 %v1211
        %v1213 = vlaneseq
        %v1214 = vshrl.u32 %v1213, 7
        %v1215 = vsub.s32 %v1212, %v1214
        %v1216 = vrot.slane %v1208, %v1215
        %v1218 = vunpack.c.l.s4 1934713408
        %v1219 = vunpack.c.0.s8 %v1218
        %v1220 = vlaneseq
        %v1221 = vshrl.u32 %v1220, 7
        %v1222 = vsub.s32 %v1219, %v1221
        %v1223 = vrot.slane %v1209, %v1222
        %v1224 = vcombine.high %v1216, 0
        %v1225 = vcombine.high %v1223, 0
        %v1228 = vpack.i.b16 %v1216, %v1182
        %v1230 = vshrl.u32 %v1182, 16
        %v1231 = vshrl.u32 %v1216, 16
        %v1232 = vpack.i.b16 %v1231, %v1230
        %v1236 = vpack.i.b16 %v1224, %v1190
        %v1238 = vshrl.u32 %v1190, 16
        %v1239 = vshrl.u32 %v1224, 16
        %v1240 = vpack.i.b16 %v1239, %v1238
        %v1244 = vpack.i.b16 %v1223, %v1189
        %v1246 = vshrl.u32 %v1189, 16
        %v1247 = vshrl.u32 %v1223, 16
        %v1248 = vpack.i.b16 %v1247, %v1246
        %v1252 = vpack.i.b16 %v1225, %v1191
        %v1254 = vshrl.u32 %v1191, 16
        %v1255 = vshrl.u32 %v1225, 16
        %v1256 = vpack.i.b16 %v1255, %v1254
        %1258 = vxpose.xlu0.c.b16.start [1/8] %v1228, 128
        %1259 = vxpose.xlu0.c.b16.cont [2/8] 0, 128
        %1260 = vxpose.xlu0.c.b16.cont [3/8] 0, 128
        %1261 = vxpose.xlu0.c.b16.cont [4/8] 0, 128
        %1262 = vxpose.xlu0.c.b16.cont [5/8] 0, 128
        %1263 = vxpose.xlu0.c.b16.cont [6/8] 0, 128
        %1264 = vxpose.xlu0.c.b16.cont [7/8] 0, 128
        %1265 = vxpose.xlu0.c.b16.end [8/8] 0, 128
        %v1266 = vpop.trf.xlu0
        %v1267 = vpop.trf.xlu0
        %v1268 = vpop.trf.xlu0
        %v1269 = vpop.trf.xlu0
        %v1270 = vpop.trf.xlu0
        %v1271 = vpop.trf.xlu0
        %v1272 = vpop.trf.xlu0
        %v1273 = vpop.trf.xlu0
        %1274 = vxpose.xlu0.c.b16.start [1/8] %v1232, 128
        %1275 = vxpose.xlu0.c.b16.cont [2/8] 0, 128
        %1276 = vxpose.xlu0.c.b16.cont [3/8] 0, 128
        %1277 = vxpose.xlu0.c.b16.cont [4/8] 0, 128
        %1278 = vxpose.xlu0.c.b16.cont [5/8] 0, 128
        %1279 = vxpose.xlu0.c.b16.cont [6/8] 0, 128
        %1280 = vxpose.xlu0.c.b16.cont [7/8] 0, 128
        %1281 = vxpose.xlu0.c.b16.end [8/8] 0, 128
        %v1282 = vpop.trf.xlu0
        %v1283 = vpop.trf.xlu0
        %v1284 = vpop.trf.xlu0
        %v1285 = vpop.trf.xlu0
        %v1286 = vpop.trf.xlu0
        %v1287 = vpop.trf.xlu0
        %v1288 = vpop.trf.xlu0
        %v1289 = vpop.trf.xlu0
        %1290 = vxpose.xlu0.c.b16.start [1/8] %v1236, 128
        %1291 = vxpose.xlu0.c.b16.cont [2/8] 0, 128
        %1292 = vxpose.xlu0.c.b16.cont [3/8] 0, 128
        %1293 = vxpose.xlu0.c.b16.cont [4/8] 0, 128
        %1294 = vxpose.xlu0.c.b16.cont [5/8] 0, 128
        %1295 = vxpose.xlu0.c.b16.cont [6/8] 0, 128
        %1296 = vxpose.xlu0.c.b16.cont [7/8] 0, 128
        %1297 = vxpose.xlu0.c.b16.end [8/8] 0, 128
        %v1298 = vpop.trf.xlu0
        %v1299 = vpop.trf.xlu0
        %v1300 = vpop.trf.xlu0
        %v1301 = vpop.trf.xlu0
        %v1302 = vpop.trf.xlu0
        %v1303 = vpop.trf.xlu0
        %v1304 = vpop.trf.xlu0
        %v1305 = vpop.trf.xlu0
        %1306 = vxpose.xlu0.c.b16.start [1/8] %v1240, 128
        %1307 = vxpose.xlu0.c.b16.cont [2/8] 0, 128
        %1308 = vxpose.xlu0.c.b16.cont [3/8] 0, 128
        %1309 = vxpose.xlu0.c.b16.cont [4/8] 0, 128
        %1310 = vxpose.xlu0.c.b16.cont [5/8] 0, 128
        %1311 = vxpose.xlu0.c.b16.cont [6/8] 0, 128
        %1312 = vxpose.xlu0.c.b16.cont [7/8] 0, 128
        %1313 = vxpose.xlu0.c.b16.end [8/8] 0, 128
        %v1314 = vpop.trf.xlu0
        %v1315 = vpop.trf.xlu0
        %v1316 = vpop.trf.xlu0
        %v1317 = vpop.trf.xlu0
        %v1318 = vpop.trf.xlu0
        %v1319 = vpop.trf.xlu0
        %v1320 = vpop.trf.xlu0
        %v1321 = vpop.trf.xlu0
        %1322 = vxpose.xlu0.c.b16.start [1/8] %v1244, 128
        %1323 = vxpose.xlu0.c.b16.cont [2/8] 0, 128
        %1324 = vxpose.xlu0.c.b16.cont [3/8] 0, 128
        %1325 = vxpose.xlu0.c.b16.cont [4/8] 0, 128
        %1326 = vxpose.xlu0.c.b16.cont [5/8] 0, 128
        %1327 = vxpose.xlu0.c.b16.cont [6/8] 0, 128
        %1328 = vxpose.xlu0.c.b16.cont [7/8] 0, 128
        %1329 = vxpose.xlu0.c.b16.end [8/8] 0, 128
        %v1330 = vpop.trf.xlu0
        %v1331 = vpop.trf.xlu0
        %v1332 = vpop.trf.xlu0
        %v1333 = vpop.trf.xlu0
        %v1334 = vpop.trf.xlu0
        %v1335 = vpop.trf.xlu0
        %v1336 = vpop.trf.xlu0
        %v1337 = vpop.trf.xlu0
        %1338 = vxpose.xlu0.c.b16.start [1/8] %v1248, 128
        %1339 = vxpose.xlu0.c.b16.cont [2/8] 0, 128
        %1340 = vxpose.xlu0.c.b16.cont [3/8] 0, 128
        %1341 = vxpose.xlu0.c.b16.cont [4/8] 0, 128
        %1342 = vxpose.xlu0.c.b16.cont [5/8] 0, 128
        %1343 = vxpose.xlu0.c.b16.cont [6/8] 0, 128
        %1344 = vxpose.xlu0.c.b16.cont [7/8] 0, 128
        %1345 = vxpose.xlu0.c.b16.end [8/8] 0, 128
        %v1346 = vpop.trf.xlu0
        %v1347 = vpop.trf.xlu0
        %v1348 = vpop.trf.xlu0
        %v1349 = vpop.trf.xlu0
        %v1350 = vpop.trf.xlu0
        %v1351 = vpop.trf.xlu0
        %v1352 = vpop.trf.xlu0
        %v1353 = vpop.trf.xlu0
        %1354 = vxpose.xlu0.c.b16.start [1/8] %v1252, 128
        %1355 = vxpose.xlu0.c.b16.cont [2/8] 0, 128
        %1356 = vxpose.xlu0.c.b16.cont [3/8] 0, 128
        %1357 = vxpose.xlu0.c.b16.cont [4/8] 0, 128
        %1358 = vxpose.xlu0.c.b16.cont [5/8] 0, 128
        %1359 = vxpose.xlu0.c.b16.cont [6/8] 0, 128
        %1360 = vxpose.xlu0.c.b16.cont [7/8] 0, 128
        %1361 = vxpose.xlu0.c.b16.end [8/8] 0, 128
        %v1362 = vpop.trf.xlu0
        %v1363 = vpop.trf.xlu0
        %v1364 = vpop.trf.xlu0
        %v1365 = vpop.trf.xlu0
        %v1366 = vpop.trf.xlu0
        %v1367 = vpop.trf.xlu0
        %v1368 = vpop.trf.xlu0
        %v1369 = vpop.trf.xlu0
        %1370 = vxpose.xlu0.c.b16.start [1/8] %v1256, 128
        %1371 = vxpose.xlu0.c.b16.cont [2/8] 0, 128
        %1372 = vxpose.xlu0.c.b16.cont [3/8] 0, 128
        %1373 = vxpose.xlu0.c.b16.cont [4/8] 0, 128
        %1374 = vxpose.xlu0.c.b16.cont [5/8] 0, 128
        %1375 = vxpose.xlu0.c.b16.cont [6/8] 0, 128
        %1376 = vxpose.xlu0.c.b16.cont [7/8] 0, 128
        %1377 = vxpose.xlu0.c.b16.end [8/8] 0, 128
        %v1378 = vpop.trf.xlu0
        %v1379 = vpop.trf.xlu0
        %v1380 = vpop.trf.xlu0
        %v1381 = vpop.trf.xlu0
        %v1382 = vpop.trf.xlu0
        %v1383 = vpop.trf.xlu0
        %v1384 = vpop.trf.xlu0
        %v1385 = vpop.trf.xlu0
        %v1386 = vcombine.low %v1266, %v1330
        %v1388 = vunpack.c.l.s4 1983009808
        %v1389 = vunpack.c.0.s8 %v1388
        %v1390 = vlaneseq
        %v1391 = vshrl.u32 %v1390, 7
        %v1392 = vsub.s32 %v1389, %v1391
        %v1393 = vrot.slane %v1386, %v1392
        %v1394 = vcombine.low %v1298, %v1362
        %v1396 = vunpack.c.l.s4 1983009808
        %v1397 = vunpack.c.0.s8 %v1396
        %v1398 = vlaneseq
        %v1399 = vshrl.u32 %v1398, 7
        %v1400 = vsub.s32 %v1397, %v1399
        %v1401 = vrot.slane %v1394, %v1400
        %v1402 = vcombine.low %v1393, %v1401
        %v1404 = vunpack.c.l.s4 1934713408
        %v1405 = vunpack.c.0.s8 %v1404
        %v1406 = vlaneseq
        %v1407 = vshrl.u32 %v1406, 7
        %v1408 = vsub.s32 %v1405, %v1407
        %v1409 = vrot.slane %v1402, %v1408
        %v1410 = vcombine.high %v1409, 0
        %v1411 = vcombine.low %v1282, %v1346
        %v1413 = vunpack.c.l.s4 1983009808
        %v1414 = vunpack.c.0.s8 %v1413
        %v1415 = vlaneseq
        %v1416 = vshrl.u32 %v1415, 7
        %v1417 = vsub.s32 %v1414, %v1416
        %v1418 = vrot.slane %v1411, %v1417
        %v1419 = vcombine.low %v1314, %v1378
        %v1421 = vunpack.c.l.s4 1983009808
        %v1422 = vunpack.c.0.s8 %v1421
        %v1423 = vlaneseq
        %v1424 = vshrl.u32 %v1423, 7
        %v1425 = vsub.s32 %v1422, %v1424
        %v1426 = vrot.slane %v1419, %v1425
        %v1427 = vcombine.low %v1418, %v1426
        %v1429 = vunpack.c.l.s4 1934713408
        %v1430 = vunpack.c.0.s8 %v1429
        %v1431 = vlaneseq
        %v1432 = vshrl.u32 %v1431, 7
        %v1433 = vsub.s32 %v1430, %v1432
        %v1434 = vrot.slane %v1427, %v1433
        %v1435 = vcombine.high %v1434, 0
        %v1438 = vpack.i.b16 %v1434, %v1409
        %v1439 = vshrl.u32 %v1409, 16
        %v1440 = vshrl.u32 %v1434, 16
        %v1441 = vpack.i.b16 %v1440, %v1439
        %v1444 = vpack.i.b16 %v1435, %v1410
        %v1445 = vshrl.u32 %v1410, 16
        %v1446 = vshrl.u32 %v1435, 16
        %v1447 = vpack.i.b16 %v1446, %v1445
        %vm1448 = vcmask 64512
        %v1450 = vsel %vm1448, %v1020, 0
        %vm1452 = vcmask 1043456
        %v1454 = vsel %vm1452, %v1438, 0
        %1456 = vmatprep.subr.bf16.mxu0 0
        %1457 = vmatpush1.bf16.msra.mxu0 0
        %1458 = vmatprep.subr.bf16.mxu0 0
        %1459 = vmatpush1.bf16.msra.mxu0 0
        %1460 = vmatprep.subr.bf16.mxu0 0
        %1461 = vmatpush1.bf16.msra.mxu0 0
        %1462 = vmatprep.subr.bf16.mxu0 0
        %1463 = vmatpush1.bf16.msra.mxu0 0
        %1464 = vmatprep.subr.bf16.mxu0 0
        %1465 = vmatpush1.bf16.msra.mxu0 0
        %1466 = vmatprep.subr.bf16.mxu0 0
        %1467 = vmatpush1.bf16.msra.mxu0 0
        %1468 = vmatprep.subr.bf16.mxu0 0
        %1469 = vmatpush1.bf16.msra.mxu0 0
        %1470 = vmatprep.subr.bf16.mxu0 0
        %1471 = vmatpush1.bf16.msra.mxu0 %v1454
        %1472 = vmatprep.subr.bf16.mxu0 0
        %1473 = vmatpush2.bf16.msra.mxu0 0
        %1474 = vmatprep.subr.bf16.mxu0 0
        %1475 = vmatpush2.bf16.msra.mxu0 0
        %1476 = vmatprep.subr.bf16.mxu0 0
        %1477 = vmatpush2.bf16.msra.mxu0 0
        %1478 = vmatprep.subr.bf16.mxu0 0
        %1479 = vmatpush2.bf16.msra.mxu0 0
        %1480 = vmatprep.subr.bf16.mxu0 0
        %1481 = vmatpush2.bf16.msra.mxu0 0
        %1482 = vmatprep.subr.bf16.mxu0 0
        %1483 = vmatpush2.bf16.msra.mxu0 0
        %1484 = vmatprep.subr.bf16.mxu0 0
        %1485 = vmatpush2.bf16.msra.mxu0 0
        %1486 = vmatprep.subr.bf16.mxu0 0
        %1487 = vmatpush2.bf16.msra.mxu0 0
        %1488 = vmatprep.mubr.bf16.mxu0 0
        %1489 = vmatmul.mubr.bf16.gmra.mxu0 %v1450
        %v1490 = vpop.f32.mrf.mxu0
        %v1491 = vadd.f32 %v966, %v1490
        %v1492 = vpop.f32.mrf.mxu0
        %v1493 = vpop.f32.mrf.mxu0
        %v1494 = vpop.f32.mrf.mxu0
        %1495 = vdwg.mxu0
        %v1497 = vsel %vm1448, %v1023, 0
        %v1500 = vsel %vm1452, %v1441, 0
        %1502 = vmatprep.subr.bf16.mxu0 0
        %1503 = vmatpush1.bf16.msra.mxu0 0
        %1504 = vmatprep.subr.bf16.mxu0 0
        %1505 = vmatpush1.bf16.msra.mxu0 0
        %1506 = vmatprep.subr.bf16.mxu0 0
        %1507 = vmatpush1.bf16.msra.mxu0 0
        %1508 = vmatprep.subr.bf16.mxu0 0
        %1509 = vmatpush1.bf16.msra.mxu0 0
        %1510 = vmatprep.subr.bf16.mxu0 0
        %1511 = vmatpush1.bf16.msra.mxu0 0
        %1512 = vmatprep.subr.bf16.mxu0 0
        %1513 = vmatpush1.bf16.msra.mxu0 0
        %1514 = vmatprep.subr.bf16.mxu0 0
        %1515 = vmatpush1.bf16.msra.mxu0 0
        %1516 = vmatprep.subr.bf16.mxu0 0
        %1517 = vmatpush1.bf16.msra.mxu0 %v1500
        %1518 = vmatprep.subr.bf16.mxu0 0
        %1519 = vmatpush2.bf16.msra.mxu0 0
        %1520 = vmatprep.subr.bf16.mxu0 0
        %1521 = vmatpush2.bf16.msra.mxu0 0
        %1522 = vmatprep.subr.bf16.mxu0 0
        %1523 = vmatpush2.bf16.msra.mxu0 0
        %1524 = vmatprep.subr.bf16.mxu0 0
        %1525 = vmatpush2.bf16.msra.mxu0 0
        %1526 = vmatprep.subr.bf16.mxu0 0
        %1527 = vmatpush2.bf16.msra.mxu0 0
        %1528 = vmatprep.subr.bf16.mxu0 0
        %1529 = vmatpush2.bf16.msra.mxu0 0
        %1530 = vmatprep.subr.bf16.mxu0 0
        %1531 = vmatpush2.bf16.msra.mxu0 0
        %1532 = vmatprep.subr.bf16.mxu0 0
        %1533 = vmatpush2.bf16.msra.mxu0 0
        %1534 = vmatprep.mubr.bf16.mxu0 0
        %1535 = vmatmul.mubr.bf16.gmra.mxu0 %v1497
        %v1536 = vpop.f32.mrf.mxu0
        %v1537 = vadd.f32 %v966, %v1536
        %v1538 = vpop.f32.mrf.mxu0
        %v1539 = vpop.f32.mrf.mxu0
        %v1540 = vpop.f32.mrf.mxu0
        %1541 = vdwg.mxu0
        %v1543 = vsel %vm1448, %v1026, 0
        %v1546 = vsel %vm1452, %v1444, 0
        %1548 = vmatprep.subr.bf16.mxu0 0
        %1549 = vmatpush1.bf16.msra.mxu0 0
        %1550 = vmatprep.subr.bf16.mxu0 0
        %1551 = vmatpush1.bf16.msra.mxu0 0
        %1552 = vmatprep.subr.bf16.mxu0 0
        %1553 = vmatpush1.bf16.msra.mxu0 0
        %1554 = vmatprep.subr.bf16.mxu0 0
        %1555 = vmatpush1.bf16.msra.mxu0 0
        %1556 = vmatprep.subr.bf16.mxu0 0
        %1557 = vmatpush1.bf16.msra.mxu0 0
        %1558 = vmatprep.subr.bf16.mxu0 0
        %1559 = vmatpush1.bf16.msra.mxu0 0
        %1560 = vmatprep.subr.bf16.mxu0 0
        %1561 = vmatpush1.bf16.msra.mxu0 0
        %1562 = vmatprep.subr.bf16.mxu0 0
        %1563 = vmatpush1.bf16.msra.mxu0 %v1546
        %1564 = vmatprep.subr.bf16.mxu0 0
        %1565 = vmatpush2.bf16.msra.mxu0 0
        %1566 = vmatprep.subr.bf16.mxu0 0
        %1567 = vmatpush2.bf16.msra.mxu0 0
        %1568 = vmatprep.subr.bf16.mxu0 0
        %1569 = vmatpush2.bf16.msra.mxu0 0
        %1570 = vmatprep.subr.bf16.mxu0 0
        %1571 = vmatpush2.bf16.msra.mxu0 0
        %1572 = vmatprep.subr.bf16.mxu0 0
        %1573 = vmatpush2.bf16.msra.mxu0 0
        %1574 = vmatprep.subr.bf16.mxu0 0
        %1575 = vmatpush2.bf16.msra.mxu0 0
        %1576 = vmatprep.subr.bf16.mxu0 0
        %1577 = vmatpush2.bf16.msra.mxu0 0
        %1578 = vmatprep.subr.bf16.mxu0 0
        %1579 = vmatpush2.bf16.msra.mxu0 0
        %1580 = vmatprep.mubr.bf16.mxu0 0
        %1581 = vmatmul.mubr.bf16.gmra.mxu0 %v1543
        %v1582 = vpop.f32.mrf.mxu0
        %v1583 = vadd.f32 %v966, %v1582
        %v1584 = vpop.f32.mrf.mxu0
        %v1585 = vpop.f32.mrf.mxu0
        %v1586 = vpop.f32.mrf.mxu0
        %1587 = vdwg.mxu0
        %v1589 = vsel %vm1448, %v1029, 0
        %v1592 = vsel %vm1452, %v1447, 0
        %1594 = vmatprep.subr.bf16.mxu0 0
        %1595 = vmatpush1.bf16.msra.mxu0 0
        %1596 = vmatprep.subr.bf16.mxu0 0
        %1597 = vmatpush1.bf16.msra.mxu0 0
        %1598 = vmatprep.subr.bf16.mxu0 0
        %1599 = vmatpush1.bf16.msra.mxu0 0
        %1600 = vmatprep.subr.bf16.mxu0 0
        %1601 = vmatpush1.bf16.msra.mxu0 0
        %1602 = vmatprep.subr.bf16.mxu0 0
        %1603 = vmatpush1.bf16.msra.mxu0 0
        %1604 = vmatprep.subr.bf16.mxu0 0
        %1605 = vmatpush1.bf16.msra.mxu0 0
        %1606 = vmatprep.subr.bf16.mxu0 0
        %1607 = vmatpush1.bf16.msra.mxu0 0
        %1608 = vmatprep.subr.bf16.mxu0 0
        %1609 = vmatpush1.bf16.msra.mxu0 %v1592
        %1610 = vmatprep.subr.bf16.mxu0 0
        %1611 = vmatpush2.bf16.msra.mxu0 0
        %1612 = vmatprep.subr.bf16.mxu0 0
        %1613 = vmatpush2.bf16.msra.mxu0 0
        %1614 = vmatprep.subr.bf16.mxu0 0
        %1615 = vmatpush2.bf16.msra.mxu0 0
        %1616 = vmatprep.subr.bf16.mxu0 0
        %1617 = vmatpush2.bf16.msra.mxu0 0
        %1618 = vmatprep.subr.bf16.mxu0 0
        %1619 = vmatpush2.bf16.msra.mxu0 0
        %1620 = vmatprep.subr.bf16.mxu0 0
        %1621 = vmatpush2.bf16.msra.mxu0 0
        %1622 = vmatprep.subr.bf16.mxu0 0
        %1623 = vmatpush2.bf16.msra.mxu0 0
        %1624 = vmatprep.subr.bf16.mxu0 0
        %1625 = vmatpush2.bf16.msra.mxu0 0
        %1626 = vmatprep.mubr.bf16.mxu0 0
        %1627 = vmatmul.mubr.bf16.gmra.mxu0 %v1589
        %v1628 = vpop.f32.mrf.mxu0
        %v1629 = vadd.f32 %v966, %v1628
        %v1630 = vpop.f32.mrf.mxu0
        %v1631 = vpop.f32.mrf.mxu0
        %v1632 = vpop.f32.mrf.mxu0
        %1633 = vdwg.mxu0
        %v1634 = vsel %vm1448, %v1491, -inf
        %1635 = vmax.xlane.f32.xlu0 %v1634
        %v1636 = vpop.xlane.xlu0 %1635
        %v1637 = vsel %vm1448, %v1537, -inf
        %1638 = vmax.xlane.f32.xlu0 %v1637
        %v1639 = vpop.xlane.xlu0 %1638
        %v1640 = vsel %vm1448, %v1583, -inf
        %1641 = vmax.xlane.f32.xlu0 %v1640
        %v1642 = vpop.xlane.xlu0 %1641
        %v1643 = vsel %vm1448, %v1629, -inf
        %1644 = vmax.xlane.f32.xlu0 %v1643
        %v1645 = vpop.xlane.xlu0 %1644
        %v1646 = vsub.f32 %v1491, %v1636
        %v1647 = vsub.f32 %v1537, %v1639
        %v1648 = vsub.f32 %v1583, %v1642
        %v1649 = vsub.f32 %v1629, %v1645
        %v1650 = vmul.f32 %v1646, 1.442695
        %v1651 = vpow.pop %v1650
        %v1652 = vmul.f32 %v1647, 1.442695
        %v1653 = vpow.pop %v1652
        %v1654 = vmul.f32 %v1648, 1.442695
        %v1655 = vpow.pop %v1654
        %v1656 = vmul.f32 %v1649, 1.442695
        %v1657 = vpow.pop %v1656
        %v1658 = vsel %vm1448, %v1651, 0.0
        %1659 = vadd.xlane.f32.xlu0 %v1658
        %v1660 = vpop.xlane.xlu0 %1659
        %v1661 = vsel %vm1448, %v1653, 0.0
        %1662 = vadd.xlane.f32.xlu0 %v1661
        %v1663 = vpop.xlane.xlu0 %1662
        %v1664 = vsel %vm1448, %v1655, 0.0
        %1665 = vadd.xlane.f32.xlu0 %v1664
        %v1666 = vpop.xlane.xlu0 %1665
        %v1667 = vsel %vm1448, %v1657, 0.0
        %1668 = vadd.xlane.f32.xlu0 %v1667
        %v1669 = vpop.xlane.xlu0 %1668
        %v1670 = vrcp.pop %v1660
        %v1671 = vrcp.pop %v1663
        %v1672 = vrcp.pop %v1666
        %v1673 = vrcp.pop %v1669
        %v1674 = vmul.f32 %v1651, %v1670
        %v1675 = vmul.f32 %v1653, %v1671
        %v1676 = vmul.f32 %v1655, %v1672
        %v1677 = vmul.f32 %v1657, %v1673
        %v1678 = vpack.c.bf16 %v1674, %v1674
        %v1679 = vpack.c.bf16 %v1675, %v1675
        %v1680 = vpack.c.bf16 %v1676, %v1676
        %v1681 = vpack.c.bf16 %v1677, %v1677
        %1682 = vxpose.xlu0.c.b16.start [1/8] %v954, 128
        %1683 = vxpose.xlu0.c.b16.cont [2/8] 0, 128
        %1684 = vxpose.xlu0.c.b16.cont [3/8] 0, 128
        %1685 = vxpose.xlu0.c.b16.cont [4/8] 0, 128
        %1686 = vxpose.xlu0.c.b16.cont [5/8] 0, 128
        %1687 = vxpose.xlu0.c.b16.cont [6/8] 0, 128
        %1688 = vxpose.xlu0.c.b16.cont [7/8] 0, 128
        %1689 = vxpose.xlu0.c.b16.end [8/8] 0, 128
        %v1690 = vpop.trf.xlu0
        %v1691 = vpop.trf.xlu0
        %v1692 = vpop.trf.xlu0
        %v1693 = vpop.trf.xlu0
        %v1694 = vpop.trf.xlu0
        %v1695 = vpop.trf.xlu0
        %v1696 = vpop.trf.xlu0
        %v1697 = vpop.trf.xlu0
        %1698 = vxpose.xlu0.c.b16.start [1/8] %v955, 128
        %1699 = vxpose.xlu0.c.b16.cont [2/8] 0, 128
        %1700 = vxpose.xlu0.c.b16.cont [3/8] 0, 128
        %1701 = vxpose.xlu0.c.b16.cont [4/8] 0, 128
        %1702 = vxpose.xlu0.c.b16.cont [5/8] 0, 128
        %1703 = vxpose.xlu0.c.b16.cont [6/8] 0, 128
        %1704 = vxpose.xlu0.c.b16.cont [7/8] 0, 128
        %1705 = vxpose.xlu0.c.b16.end [8/8] 0, 128
        %v1706 = vpop.trf.xlu0
        %v1707 = vpop.trf.xlu0
        %v1708 = vpop.trf.xlu0
        %v1709 = vpop.trf.xlu0
        %v1710 = vpop.trf.xlu0
        %v1711 = vpop.trf.xlu0
        %v1712 = vpop.trf.xlu0
        %v1713 = vpop.trf.xlu0
        %1714 = vxpose.xlu0.c.b16.start [1/8] %v956, 128
        %1715 = vxpose.xlu0.c.b16.cont [2/8] 0, 128
        %1716 = vxpose.xlu0.c.b16.cont [3/8] 0, 128
        %1717 = vxpose.xlu0.c.b16.cont [4/8] 0, 128
        %1718 = vxpose.xlu0.c.b16.cont [5/8] 0, 128
        %1719 = vxpose.xlu0.c.b16.cont [6/8] 0, 128
        %1720 = vxpose.xlu0.c.b16.cont [7/8] 0, 128
        %1721 = vxpose.xlu0.c.b16.end [8/8] 0, 128
        %v1722 = vpop.trf.xlu0
        %v1723 = vpop.trf.xlu0
        %v1724 = vpop.trf.xlu0
        %v1725 = vpop.trf.xlu0
        %v1726 = vpop.trf.xlu0
        %v1727 = vpop.trf.xlu0
        %v1728 = vpop.trf.xlu0
        %v1729 = vpop.trf.xlu0
        %1730 = vxpose.xlu0.c.b16.start [1/8] %v957, 128
        %1731 = vxpose.xlu0.c.b16.cont [2/8] 0, 128
        %1732 = vxpose.xlu0.c.b16.cont [3/8] 0, 128
        %1733 = vxpose.xlu0.c.b16.cont [4/8] 0, 128
        %1734 = vxpose.xlu0.c.b16.cont [5/8] 0, 128
        %1735 = vxpose.xlu0.c.b16.cont [6/8] 0, 128
        %1736 = vxpose.xlu0.c.b16.cont [7/8] 0, 128
        %1737 = vxpose.xlu0.c.b16.end [8/8] 0, 128
        %v1738 = vpop.trf.xlu0
        %v1739 = vpop.trf.xlu0
        %v1740 = vpop.trf.xlu0
        %v1741 = vpop.trf.xlu0
        %v1742 = vpop.trf.xlu0
        %v1743 = vpop.trf.xlu0
        %v1744 = vpop.trf.xlu0
        %v1745 = vpop.trf.xlu0
        %1746 = vxpose.xlu0.c.b16.start [1/8] %v958, 128
        %1747 = vxpose.xlu0.c.b16.cont [2/8] 0, 128
        %1748 = vxpose.xlu0.c.b16.cont [3/8] 0, 128
        %1749 = vxpose.xlu0.c.b16.cont [4/8] 0, 128
        %1750 = vxpose.xlu0.c.b16.cont [5/8] 0, 128
        %1751 = vxpose.xlu0.c.b16.cont [6/8] 0, 128
        %1752 = vxpose.xlu0.c.b16.cont [7/8] 0, 128
        %1753 = vxpose.xlu0.c.b16.end [8/8] 0, 128
        %v1754 = vpop.trf.xlu0
        %v1755 = vpop.trf.xlu0
        %v1756 = vpop.trf.xlu0
        %v1757 = vpop.trf.xlu0
        %v1758 = vpop.trf.xlu0
        %v1759 = vpop.trf.xlu0
        %v1760 = vpop.trf.xlu0
        %v1761 = vpop.trf.xlu0
        %1762 = vxpose.xlu0.c.b16.start [1/8] %v959, 128
        %1763 = vxpose.xlu0.c.b16.cont [2/8] 0, 128
        %1764 = vxpose.xlu0.c.b16.cont [3/8] 0, 128
        %1765 = vxpose.xlu0.c.b16.cont [4/8] 0, 128
        %1766 = vxpose.xlu0.c.b16.cont [5/8] 0, 128
        %1767 = vxpose.xlu0.c.b16.cont [6/8] 0, 128
        %1768 = vxpose.xlu0.c.b16.cont [7/8] 0, 128
        %1769 = vxpose.xlu0.c.b16.end [8/8] 0, 128
        %v1770 = vpop.trf.xlu0
        %v1771 = vpop.trf.xlu0
        %v1772 = vpop.trf.xlu0
        %v1773 = vpop.trf.xlu0
        %v1774 = vpop.trf.xlu0
        %v1775 = vpop.trf.xlu0
        %v1776 = vpop.trf.xlu0
        %v1777 = vpop.trf.xlu0
        %1778 = vxpose.xlu0.c.b16.start [1/8] %v960, 128
        %1779 = vxpose.xlu0.c.b16.cont [2/8] 0, 128
        %1780 = vxpose.xlu0.c.b16.cont [3/8] 0, 128
        %1781 = vxpose.xlu0.c.b16.cont [4/8] 0, 128
        %1782 = vxpose.xlu0.c.b16.cont [5/8] 0, 128
        %1783 = vxpose.xlu0.c.b16.cont [6/8] 0, 128
        %1784 = vxpose.xlu0.c.b16.cont [7/8] 0, 128
        %1785 = vxpose.xlu0.c.b16.end [8/8] 0, 128
        %v1786 = vpop.trf.xlu0
        %v1787 = vpop.trf.xlu0
        %v1788 = vpop.trf.xlu0
        %v1789 = vpop.trf.xlu0
        %v1790 = vpop.trf.xlu0
        %v1791 = vpop.trf.xlu0
        %v1792 = vpop.trf.xlu0
        %v1793 = vpop.trf.xlu0
        %1794 = vxpose.xlu0.c.b16.start [1/8] %v961, 128
        %1795 = vxpose.xlu0.c.b16.cont [2/8] 0, 128
        %1796 = vxpose.xlu0.c.b16.cont [3/8] 0, 128
        %1797 = vxpose.xlu0.c.b16.cont [4/8] 0, 128
        %1798 = vxpose.xlu0.c.b16.cont [5/8] 0, 128
        %1799 = vxpose.xlu0.c.b16.cont [6/8] 0, 128
        %1800 = vxpose.xlu0.c.b16.cont [7/8] 0, 128
        %1801 = vxpose.xlu0.c.b16.end [8/8] 0, 128
        %v1802 = vpop.trf.xlu0
        %v1803 = vpop.trf.xlu0
        %v1804 = vpop.trf.xlu0
        %v1805 = vpop.trf.xlu0
        %v1806 = vpop.trf.xlu0
        %v1807 = vpop.trf.xlu0
        %v1808 = vpop.trf.xlu0
        %v1809 = vpop.trf.xlu0
        %v1810 = vcombine.low %v1690, %v1754
        %v1812 = vunpack.c.l.s4 1983009808
        %v1813 = vunpack.c.0.s8 %v1812
        %v1814 = vlaneseq
        %v1815 = vshrl.u32 %v1814, 7
        %v1816 = vsub.s32 %v1813, %v1815
        %v1817 = vrot.slane %v1810, %v1816
        %v1818 = vcombine.low %v1722, %v1786
        %v1820 = vunpack.c.l.s4 1983009808
        %v1821 = vunpack.c.0.s8 %v1820
        %v1822 = vlaneseq
        %v1823 = vshrl.u32 %v1822, 7
        %v1824 = vsub.s32 %v1821, %v1823
        %v1825 = vrot.slane %v1818, %v1824
        %v1826 = vcombine.low %v1817, %v1825
        %v1827 = vcombine.high %v1817, %v1825
        %v1829 = vunpack.c.l.s4 1934713408
        %v1830 = vunpack.c.0.s8 %v1829
        %v1831 = vlaneseq
        %v1832 = vshrl.u32 %v1831, 7
        %v1833 = vsub.s32 %v1830, %v1832
        %v1834 = vrot.slane %v1826, %v1833
        %v1836 = vunpack.c.l.s4 1934713408
        %v1837 = vunpack.c.0.s8 %v1836
        %v1838 = vlaneseq
        %v1839 = vshrl.u32 %v1838, 7
        %v1840 = vsub.s32 %v1837, %v1839
        %v1841 = vrot.slane %v1827, %v1840
        %v1842 = vcombine.high %v1834, 0
        %v1843 = vcombine.high %v1841, 0
        %v1844 = vcombine.low %v1706, %v1770
        %v1846 = vunpack.c.l.s4 1983009808
        %v1847 = vunpack.c.0.s8 %v1846
        %v1848 = vlaneseq
        %v1849 = vshrl.u32 %v1848, 7
        %v1850 = vsub.s32 %v1847, %v1849
        %v1851 = vrot.slane %v1844, %v1850
        %v1852 = vcombine.low %v1738, %v1802
        %v1854 = vunpack.c.l.s4 1983009808
        %v1855 = vunpack.c.0.s8 %v1854
        %v1856 = vlaneseq
        %v1857 = vshrl.u32 %v1856, 7
        %v1858 = vsub.s32 %v1855, %v1857
        %v1859 = vrot.slane %v1852, %v1858
        %v1860 = vcombine.low %v1851, %v1859
        %v1861 = vcombine.high %v1851, %v1859
        %v1863 = vunpack.c.l.s4 1934713408
        %v1864 = vunpack.c.0.s8 %v1863
        %v1865 = vlaneseq
        %v1866 = vshrl.u32 %v1865, 7
        %v1867 = vsub.s32 %v1864, %v1866
        %v1868 = vrot.slane %v1860, %v1867
        %v1870 = vunpack.c.l.s4 1934713408
        %v1871 = vunpack.c.0.s8 %v1870
        %v1872 = vlaneseq
        %v1873 = vshrl.u32 %v1872, 7
        %v1874 = vsub.s32 %v1871, %v1873
        %v1875 = vrot.slane %v1861, %v1874
        %v1876 = vcombine.high %v1868, 0
        %v1877 = vcombine.high %v1875, 0
        %v1880 = vpack.i.b16 %v1868, %v1834
        %v1882 = vshrl.u32 %v1834, 16
        %v1883 = vshrl.u32 %v1868, 16
        %v1884 = vpack.i.b16 %v1883, %v1882
        %v1888 = vpack.i.b16 %v1876, %v1842
        %v1890 = vshrl.u32 %v1842, 16
        %v1891 = vshrl.u32 %v1876, 16
        %v1892 = vpack.i.b16 %v1891, %v1890
        %v1896 = vpack.i.b16 %v1875, %v1841
        %v1898 = vshrl.u32 %v1841, 16
        %v1899 = vshrl.u32 %v1875, 16
        %v1900 = vpack.i.b16 %v1899, %v1898
        %v1904 = vpack.i.b16 %v1877, %v1843
        %v1906 = vshrl.u32 %v1843, 16
        %v1907 = vshrl.u32 %v1877, 16
        %v1908 = vpack.i.b16 %v1907, %v1906
        %1910 = vxpose.xlu0.c.b16.start [1/8] %v1880, 128
        %1911 = vxpose.xlu0.c.b16.cont [2/8] 0, 128
        %1912 = vxpose.xlu0.c.b16.cont [3/8] 0, 128
        %1913 = vxpose.xlu0.c.b16.cont [4/8] 0, 128
        %1914 = vxpose.xlu0.c.b16.cont [5/8] 0, 128
        %1915 = vxpose.xlu0.c.b16.cont [6/8] 0, 128
        %1916 = vxpose.xlu0.c.b16.cont [7/8] 0, 128
        %1917 = vxpose.xlu0.c.b16.end [8/8] 0, 128
        %v1918 = vpop.trf.xlu0
        %v1919 = vpop.trf.xlu0
        %v1920 = vpop.trf.xlu0
        %v1921 = vpop.trf.xlu0
        %v1922 = vpop.trf.xlu0
        %v1923 = vpop.trf.xlu0
        %v1924 = vpop.trf.xlu0
        %v1925 = vpop.trf.xlu0
        %1926 = vxpose.xlu0.c.b16.start [1/8] %v1884, 128
        %1927 = vxpose.xlu0.c.b16.cont [2/8] 0, 128
        %1928 = vxpose.xlu0.c.b16.cont [3/8] 0, 128
        %1929 = vxpose.xlu0.c.b16.cont [4/8] 0, 128
        %1930 = vxpose.xlu0.c.b16.cont [5/8] 0, 128
        %1931 = vxpose.xlu0.c.b16.cont [6/8] 0, 128
        %1932 = vxpose.xlu0.c.b16.cont [7/8] 0, 128
        %1933 = vxpose.xlu0.c.b16.end [8/8] 0, 128
        %v1934 = vpop.trf.xlu0
        %v1935 = vpop.trf.xlu0
        %v1936 = vpop.trf.xlu0
        %v1937 = vpop.trf.xlu0
        %v1938 = vpop.trf.xlu0
        %v1939 = vpop.trf.xlu0
        %v1940 = vpop.trf.xlu0
        %v1941 = vpop.trf.xlu0
        %1942 = vxpose.xlu0.c.b16.start [1/8] %v1888, 128
        %1943 = vxpose.xlu0.c.b16.cont [2/8] 0, 128
        %1944 = vxpose.xlu0.c.b16.cont [3/8] 0, 128
        %1945 = vxpose.xlu0.c.b16.cont [4/8] 0, 128
        %1946 = vxpose.xlu0.c.b16.cont [5/8] 0, 128
        %1947 = vxpose.xlu0.c.b16.cont [6/8] 0, 128
        %1948 = vxpose.xlu0.c.b16.cont [7/8] 0, 128
        %1949 = vxpose.xlu0.c.b16.end [8/8] 0, 128
        %v1950 = vpop.trf.xlu0
        %v1951 = vpop.trf.xlu0
        %v1952 = vpop.trf.xlu0
        %v1953 = vpop.trf.xlu0
        %v1954 = vpop.trf.xlu0
        %v1955 = vpop.trf.xlu0
        %v1956 = vpop.trf.xlu0
        %v1957 = vpop.trf.xlu0
        %1958 = vxpose.xlu0.c.b16.start [1/8] %v1892, 128
        %1959 = vxpose.xlu0.c.b16.cont [2/8] 0, 128
        %1960 = vxpose.xlu0.c.b16.cont [3/8] 0, 128
        %1961 = vxpose.xlu0.c.b16.cont [4/8] 0, 128
        %1962 = vxpose.xlu0.c.b16.cont [5/8] 0, 128
        %1963 = vxpose.xlu0.c.b16.cont [6/8] 0, 128
        %1964 = vxpose.xlu0.c.b16.cont [7/8] 0, 128
        %1965 = vxpose.xlu0.c.b16.end [8/8] 0, 128
        %v1966 = vpop.trf.xlu0
        %v1967 = vpop.trf.xlu0
        %v1968 = vpop.trf.xlu0
        %v1969 = vpop.trf.xlu0
        %v1970 = vpop.trf.xlu0
        %v1971 = vpop.trf.xlu0
        %v1972 = vpop.trf.xlu0
        %v1973 = vpop.trf.xlu0
        %1974 = vxpose.xlu0.c.b16.start [1/8] %v1896, 128
        %1975 = vxpose.xlu0.c.b16.cont [2/8] 0, 128
        %1976 = vxpose.xlu0.c.b16.cont [3/8] 0, 128
        %1977 = vxpose.xlu0.c.b16.cont [4/8] 0, 128
        %1978 = vxpose.xlu0.c.b16.cont [5/8] 0, 128
        %1979 = vxpose.xlu0.c.b16.cont [6/8] 0, 128
        %1980 = vxpose.xlu0.c.b16.cont [7/8] 0, 128
        %1981 = vxpose.xlu0.c.b16.end [8/8] 0, 128
        %v1982 = vpop.trf.xlu0
        %v1983 = vpop.trf.xlu0
        %v1984 = vpop.trf.xlu0
        %v1985 = vpop.trf.xlu0
        %v1986 = vpop.trf.xlu0
        %v1987 = vpop.trf.xlu0
        %v1988 = vpop.trf.xlu0
        %v1989 = vpop.trf.xlu0
        %1990 = vxpose.xlu0.c.b16.start [1/8] %v1900, 128
        %1991 = vxpose.xlu0.c.b16.cont [2/8] 0, 128
        %1992 = vxpose.xlu0.c.b16.cont [3/8] 0, 128
        %1993 = vxpose.xlu0.c.b16.cont [4/8] 0, 128
        %1994 = vxpose.xlu0.c.b16.cont [5/8] 0, 128
        %1995 = vxpose.xlu0.c.b16.cont [6/8] 0, 128
        %1996 = vxpose.xlu0.c.b16.cont [7/8] 0, 128
        %1997 = vxpose.xlu0.c.b16.end [8/8] 0, 128
        %v1998 = vpop.trf.xlu0
        %v1999 = vpop.trf.xlu0
        %v2000 = vpop.trf.xlu0
        %v2001 = vpop.trf.xlu0
        %v2002 = vpop.trf.xlu0
        %v2003 = vpop.trf.xlu0
        %v2004 = vpop.trf.xlu0
        %v2005 = vpop.trf.xlu0
        %2006 = vxpose.xlu0.c.b16.start [1/8] %v1904, 128
        %2007 = vxpose.xlu0.c.b16.cont [2/8] 0, 128
        %2008 = vxpose.xlu0.c.b16.cont [3/8] 0, 128
        %2009 = vxpose.xlu0.c.b16.cont [4/8] 0, 128
        %2010 = vxpose.xlu0.c.b16.cont [5/8] 0, 128
        %2011 = vxpose.xlu0.c.b16.cont [6/8] 0, 128
        %2012 = vxpose.xlu0.c.b16.cont [7/8] 0, 128
        %2013 = vxpose.xlu0.c.b16.end [8/8] 0, 128
        %v2014 = vpop.trf.xlu0
        %v2015 = vpop.trf.xlu0
        %v2016 = vpop.trf.xlu0
        %v2017 = vpop.trf.xlu0
        %v2018 = vpop.trf.xlu0
        %v2019 = vpop.trf.xlu0
        %v2020 = vpop.trf.xlu0
        %v2021 = vpop.trf.xlu0
        %2022 = vxpose.xlu0.c.b16.start [1/8] %v1908, 128
        %2023 = vxpose.xlu0.c.b16.cont [2/8] 0, 128
        %2024 = vxpose.xlu0.c.b16.cont [3/8] 0, 128
        %2025 = vxpose.xlu0.c.b16.cont [4/8] 0, 128
        %2026 = vxpose.xlu0.c.b16.cont [5/8] 0, 128
        %2027 = vxpose.xlu0.c.b16.cont [6/8] 0, 128
        %2028 = vxpose.xlu0.c.b16.cont [7/8] 0, 128
        %2029 = vxpose.xlu0.c.b16.end [8/8] 0, 128
        %v2030 = vpop.trf.xlu0
        %v2031 = vpop.trf.xlu0
        %v2032 = vpop.trf.xlu0
        %v2033 = vpop.trf.xlu0
        %v2034 = vpop.trf.xlu0
        %v2035 = vpop.trf.xlu0
        %v2036 = vpop.trf.xlu0
        %v2037 = vpop.trf.xlu0
        %v2038 = vcombine.low %v1918, %v1982
        %v2040 = vunpack.c.l.s4 1983009808
        %v2041 = vunpack.c.0.s8 %v2040
        %v2042 = vlaneseq
        %v2043 = vshrl.u32 %v2042, 7
        %v2044 = vsub.s32 %v2041, %v2043
        %v2045 = vrot.slane %v2038, %v2044
        %v2046 = vcombine.low %v1950, %v2014
        %v2048 = vunpack.c.l.s4 1983009808
        %v2049 = vunpack.c.0.s8 %v2048
        %v2050 = vlaneseq
        %v2051 = vshrl.u32 %v2050, 7
        %v2052 = vsub.s32 %v2049, %v2051
        %v2053 = vrot.slane %v2046, %v2052
        %v2054 = vcombine.low %v2045, %v2053
        %v2056 = vunpack.c.l.s4 1934713408
        %v2057 = vunpack.c.0.s8 %v2056
        %v2058 = vlaneseq
        %v2059 = vshrl.u32 %v2058, 7
        %v2060 = vsub.s32 %v2057, %v2059
        %v2061 = vrot.slane %v2054, %v2060
        %v2062 = vcombine.high %v2061, 0
        %v2063 = vcombine.low %v1934, %v1998
        %v2065 = vunpack.c.l.s4 1983009808
        %v2066 = vunpack.c.0.s8 %v2065
        %v2067 = vlaneseq
        %v2068 = vshrl.u32 %v2067, 7
        %v2069 = vsub.s32 %v2066, %v2068
        %v2070 = vrot.slane %v2063, %v2069
        %v2071 = vcombine.low %v1966, %v2030
        %v2073 = vunpack.c.l.s4 1983009808
        %v2074 = vunpack.c.0.s8 %v2073
        %v2075 = vlaneseq
        %v2076 = vshrl.u32 %v2075, 7
        %v2077 = vsub.s32 %v2074, %v2076
        %v2078 = vrot.slane %v2071, %v2077
        %v2079 = vcombine.low %v2070, %v2078
        %v2081 = vunpack.c.l.s4 1934713408
        %v2082 = vunpack.c.0.s8 %v2081
        %v2083 = vlaneseq
        %v2084 = vshrl.u32 %v2083, 7
        %v2085 = vsub.s32 %v2082, %v2084
        %v2086 = vrot.slane %v2079, %v2085
        %v2087 = vcombine.high %v2086, 0
        %v2090 = vpack.i.b16 %v2086, %v2061
        %v2091 = vshrl.u32 %v2061, 16
        %v2092 = vshrl.u32 %v2086, 16
        %v2093 = vpack.i.b16 %v2092, %v2091
        %v2096 = vpack.i.b16 %v2087, %v2062
        %v2097 = vshrl.u32 %v2062, 16
        %v2098 = vshrl.u32 %v2087, 16
        %v2099 = vpack.i.b16 %v2098, %v2097
        %v2101 = vsel %vm1448, %v2090, 0
        %v2104 = vsel %vm1448, %v1678, 0
        %2106 = vmatprep.subr.bf16.mxu0 0
        %2107 = vmatpush1.bf16.xpose.msra.mxu0 0
        %2108 = vmatprep.subr.bf16.mxu0 0
        %2109 = vmatpush1.bf16.xpose.msra.mxu0 0
        %2110 = vmatprep.subr.bf16.mxu0 0
        %2111 = vmatpush1.bf16.xpose.msra.mxu0 0
        %2112 = vmatprep.subr.bf16.mxu0 0
        %2113 = vmatpush1.bf16.xpose.msra.mxu0 0
        %2114 = vmatprep.subr.bf16.mxu0 0
        %2115 = vmatpush1.bf16.xpose.msra.mxu0 0
        %2116 = vmatprep.subr.bf16.mxu0 0
        %2117 = vmatpush1.bf16.xpose.msra.mxu0 0
        %2118 = vmatprep.subr.bf16.mxu0 0
        %2119 = vmatpush1.bf16.xpose.msra.mxu0 0
        %2120 = vmatprep.subr.bf16.mxu0 0
        %2121 = vmatpush1.bf16.xpose.msra.mxu0 %v2104
        %2122 = vmatprep.subr.bf16.mxu0 0
        %2123 = vmatpush2.bf16.xpose.msra.mxu0 0
        %2124 = vmatprep.subr.bf16.mxu0 0
        %2125 = vmatpush2.bf16.xpose.msra.mxu0 0
        %2126 = vmatprep.subr.bf16.mxu0 0
        %2127 = vmatpush2.bf16.xpose.msra.mxu0 0
        %2128 = vmatprep.subr.bf16.mxu0 0
        %2129 = vmatpush2.bf16.xpose.msra.mxu0 0
        %2130 = vmatprep.subr.bf16.mxu0 0
        %2131 = vmatpush2.bf16.xpose.msra.mxu0 0
        %2132 = vmatprep.subr.bf16.mxu0 0
        %2133 = vmatpush2.bf16.xpose.msra.mxu0 0
        %2134 = vmatprep.subr.bf16.mxu0 0
        %2135 = vmatpush2.bf16.xpose.msra.mxu0 0
        %2136 = vmatprep.subr.bf16.mxu0 0
        %2137 = vmatpush2.bf16.xpose.msra.mxu0 0
        %2138 = vmatprep.mubr.bf16.mxu0 0
        %2139 = vmatmul.mubr.bf16.gmra.mxu0 %v2101
        %v2140 = vpop.f32.mrf.mxu0
        %v2141 = vadd.f32 0.0, %v2140
        %v2142 = vpop.f32.mrf.mxu0
        %v2143 = vpop.f32.mrf.mxu0
        %v2144 = vpop.f32.mrf.mxu0
        %2145 = vdwg.mxu0
        %v2147 = vsel %vm1448, %v2093, 0
        %v2150 = vsel %vm1448, %v1679, 0
        %2152 = vmatprep.subr.bf16.mxu0 0
        %2153 = vmatpush1.bf16.xpose.msra.mxu0 0
        %2154 = vmatprep.subr.bf16.mxu0 0
        %2155 = vmatpush1.bf16.xpose.msra.mxu0 0
        %2156 = vmatprep.subr.bf16.mxu0 0
        %2157 = vmatpush1.bf16.xpose.msra.mxu0 0
        %2158 = vmatprep.subr.bf16.mxu0 0
        %2159 = vmatpush1.bf16.xpose.msra.mxu0 0
        %2160 = vmatprep.subr.bf16.mxu0 0
        %2161 = vmatpush1.bf16.xpose.msra.mxu0 0
        %2162 = vmatprep.subr.bf16.mxu0 0
        %2163 = vmatpush1.bf16.xpose.msra.mxu0 0
        %2164 = vmatprep.subr.bf16.mxu0 0
        %2165 = vmatpush1.bf16.xpose.msra.mxu0 0
        %2166 = vmatprep.subr.bf16.mxu0 0
        %2167 = vmatpush1.bf16.xpose.msra.mxu0 %v2150
        %2168 = vmatprep.subr.bf16.mxu0 0
        %2169 = vmatpush2.bf16.xpose.msra.mxu0 0
        %2170 = vmatprep.subr.bf16.mxu0 0
        %2171 = vmatpush2.bf16.xpose.msra.mxu0 0
        %2172 = vmatprep.subr.bf16.mxu0 0
        %2173 = vmatpush2.bf16.xpose.msra.mxu0 0
        %2174 = vmatprep.subr.bf16.mxu0 0
        %2175 = vmatpush2.bf16.xpose.msra.mxu0 0
        %2176 = vmatprep.subr.bf16.mxu0 0
        %2177 = vmatpush2.bf16.xpose.msra.mxu0 0
        %2178 = vmatprep.subr.bf16.mxu0 0
        %2179 = vmatpush2.bf16.xpose.msra.mxu0 0
        %2180 = vmatprep.subr.bf16.mxu0 0
        %2181 = vmatpush2.bf16.xpose.msra.mxu0 0
        %2182 = vmatprep.subr.bf16.mxu0 0
        %2183 = vmatpush2.bf16.xpose.msra.mxu0 0
        %2184 = vmatprep.mubr.bf16.mxu0 0
        %2185 = vmatmul.mubr.bf16.gmra.mxu0 %v2147
        %v2186 = vpop.f32.mrf.mxu0
        %v2187 = vadd.f32 0.0, %v2186
        %v2188 = vpop.f32.mrf.mxu0
        %v2189 = vpop.f32.mrf.mxu0
        %v2190 = vpop.f32.mrf.mxu0
        %2191 = vdwg.mxu0
        %v2193 = vsel %vm1448, %v2096, 0
        %v2196 = vsel %vm1448, %v1680, 0
        %2198 = vmatprep.subr.bf16.mxu0 0
        %2199 = vmatpush1.bf16.xpose.msra.mxu0 0
        %2200 = vmatprep.subr.bf16.mxu0 0
        %2201 = vmatpush1.bf16.xpose.msra.mxu0 0
        %2202 = vmatprep.subr.bf16.mxu0 0
        %2203 = vmatpush1.bf16.xpose.msra.mxu0 0
        %2204 = vmatprep.subr.bf16.mxu0 0
        %2205 = vmatpush1.bf16.xpose.msra.mxu0 0
        %2206 = vmatprep.subr.bf16.mxu0 0
        %2207 = vmatpush1.bf16.xpose.msra.mxu0 0
        %2208 = vmatprep.subr.bf16.mxu0 0
        %2209 = vmatpush1.bf16.xpose.msra.mxu0 0
        %2210 = vmatprep.subr.bf16.mxu0 0
        %2211 = vmatpush1.bf16.xpose.msra.mxu0 0
        %2212 = vmatprep.subr.bf16.mxu0 0
        %2213 = vmatpush1.bf16.xpose.msra.mxu0 %v2196
        %2214 = vmatprep.subr.bf16.mxu0 0
        %2215 = vmatpush2.bf16.xpose.msra.mxu0 0
        %2216 = vmatprep.subr.bf16.mxu0 0
        %2217 = vmatpush2.bf16.xpose.msra.mxu0 0
        %2218 = vmatprep.subr.bf16.mxu0 0
        %2219 = vmatpush2.bf16.xpose.msra.mxu0 0
        %2220 = vmatprep.subr.bf16.mxu0 0
        %2221 = vmatpush2.bf16.xpose.msra.mxu0 0
        %2222 = vmatprep.subr.bf16.mxu0 0
        %2223 = vmatpush2.bf16.xpose.msra.mxu0 0
        %2224 = vmatprep.subr.bf16.mxu0 0
        %2225 = vmatpush2.bf16.xpose.msra.mxu0 0
        %2226 = vmatprep.subr.bf16.mxu0 0
        %2227 = vmatpush2.bf16.xpose.msra.mxu0 0
        %2228 = vmatprep.subr.bf16.mxu0 0
        %2229 = vmatpush2.bf16.xpose.msra.mxu0 0
        %2230 = vmatprep.mubr.bf16.mxu0 0
        %2231 = vmatmul.mubr.bf16.gmra.mxu0 %v2193
        %v2232 = vpop.f32.mrf.mxu0
        %v2233 = vadd.f32 0.0, %v2232
        %v2234 = vpop.f32.mrf.mxu0
        %v2235 = vpop.f32.mrf.mxu0
        %v2236 = vpop.f32.mrf.mxu0
        %2237 = vdwg.mxu0
        %v2239 = vsel %vm1448, %v2099, 0
        %v2242 = vsel %vm1448, %v1681, 0
        %2244 = vmatprep.subr.bf16.mxu0 0
        %2245 = vmatpush1.bf16.xpose.msra.mxu0 0
        %2246 = vmatprep.subr.bf16.mxu0 0
        %2247 = vmatpush1.bf16.xpose.msra.mxu0 0
        %2248 = vmatprep.subr.bf16.mxu0 0
        %2249 = vmatpush1.bf16.xpose.msra.mxu0 0
        %2250 = vmatprep.subr.bf16.mxu0 0
        %2251 = vmatpush1.bf16.xpose.msra.mxu0 0
        %2252 = vmatprep.subr.bf16.mxu0 0
        %2253 = vmatpush1.bf16.xpose.msra.mxu0 0
        %2254 = vmatprep.subr.bf16.mxu0 0
        %2255 = vmatpush1.bf16.xpose.msra.mxu0 0
        %2256 = vmatprep.subr.bf16.mxu0 0
        %2257 = vmatpush1.bf16.xpose.msra.mxu0 0
        %2258 = vmatprep.subr.bf16.mxu0 0
        %2259 = vmatpush1.bf16.xpose.msra.mxu0 %v2242
        %2260 = vmatprep.subr.bf16.mxu0 0
        %2261 = vmatpush2.bf16.xpose.msra.mxu0 0
        %2262 = vmatprep.subr.bf16.mxu0 0
        %2263 = vmatpush2.bf16.xpose.msra.mxu0 0
        %2264 = vmatprep.subr.bf16.mxu0 0
        %2265 = vmatpush2.bf16.xpose.msra.mxu0 0
        %2266 = vmatprep.subr.bf16.mxu0 0
        %2267 = vmatpush2.bf16.xpose.msra.mxu0 0
        %2268 = vmatprep.subr.bf16.mxu0 0
        %2269 = vmatpush2.bf16.xpose.msra.mxu0 0
        %2270 = vmatprep.subr.bf16.mxu0 0
        %2271 = vmatpush2.bf16.xpose.msra.mxu0 0
        %2272 = vmatprep.subr.bf16.mxu0 0
        %2273 = vmatpush2.bf16.xpose.msra.mxu0 0
        %2274 = vmatprep.subr.bf16.mxu0 0
        %2275 = vmatpush2.bf16.xpose.msra.mxu0 0
        %2276 = vmatprep.mubr.bf16.mxu0 0
        %2277 = vmatmul.mubr.bf16.gmra.mxu0 %v2239
        %v2278 = vpop.f32.mrf.mxu0
        %v2279 = vadd.f32 0.0, %v2278
        %v2280 = vpop.f32.mrf.mxu0
        %v2281 = vpop.f32.mrf.mxu0
        %v2282 = vpop.f32.mrf.mxu0
        %2283 = vdwg.mxu0
        %2284 = vxpose.xlu0.b32.start [1/16] %v2141, 128
        %2285 = vxpose.xlu0.b32.cont [2/16] 0.0, 128
        %2286 = vxpose.xlu0.b32.cont [3/16] 0.0, 128
        %2287 = vxpose.xlu0.b32.cont [4/16] 0.0, 128
        %2288 = vxpose.xlu0.b32.cont [5/16] 0.0, 128
        %2289 = vxpose.xlu0.b32.cont [6/16] 0.0, 128
        %2290 = vxpose.xlu0.b32.cont [7/16] 0.0, 128
        %2291 = vxpose.xlu0.b32.cont [8/16] 0.0, 128
        %2292 = vxpose.xlu0.b32.cont [9/16] 0.0, 128
        %2293 = vxpose.xlu0.b32.cont [10/16] 0.0, 128
        %2294 = vxpose.xlu0.b32.cont [11/16] 0.0, 128
        %2295 = vxpose.xlu0.b32.cont [12/16] 0.0, 128
        %2296 = vxpose.xlu0.b32.cont [13/16] 0.0, 128
        %2297 = vxpose.xlu0.b32.cont [14/16] 0.0, 128
        %2298 = vxpose.xlu0.b32.cont [15/16] 0.0, 128
        %2299 = vxpose.xlu0.b32.end [16/16] 0.0, 128
        %v2300 = vpop.trf.xlu0
        %v2301 = vpop.trf.xlu0
        %v2302 = vpop.trf.xlu0
        %v2303 = vpop.trf.xlu0
        %v2304 = vpop.trf.xlu0
        %v2305 = vpop.trf.xlu0
        %v2306 = vpop.trf.xlu0
        %v2307 = vpop.trf.xlu0
        %v2308 = vpop.trf.xlu0
        %v2309 = vpop.trf.xlu0
        %v2310 = vpop.trf.xlu0
        %v2311 = vpop.trf.xlu0
        %v2312 = vpop.trf.xlu0
        %v2313 = vpop.trf.xlu0
        %v2314 = vpop.trf.xlu0
        %v2315 = vpop.trf.xlu0
        %2316 = vxpose.xlu0.b32.start [1/16] %v2187, 128
        %2317 = vxpose.xlu0.b32.cont [2/16] 0.0, 128
        %2318 = vxpose.xlu0.b32.cont [3/16] 0.0, 128
        %2319 = vxpose.xlu0.b32.cont [4/16] 0.0, 128
        %2320 = vxpose.xlu0.b32.cont [5/16] 0.0, 128
        %2321 = vxpose.xlu0.b32.cont [6/16] 0.0, 128
        %2322 = vxpose.xlu0.b32.cont [7/16] 0.0, 128
        %2323 = vxpose.xlu0.b32.cont [8/16] 0.0, 128
        %2324 = vxpose.xlu0.b32.cont [9/16] 0.0, 128
        %2325 = vxpose.xlu0.b32.cont [10/16] 0.0, 128
        %2326 = vxpose.xlu0.b32.cont [11/16] 0.0, 128
        %2327 = vxpose.xlu0.b32.cont [12/16] 0.0, 128
        %2328 = vxpose.xlu0.b32.cont [13/16] 0.0, 128
        %2329 = vxpose.xlu0.b32.cont [14/16] 0.0, 128
        %2330 = vxpose.xlu0.b32.cont [15/16] 0.0, 128
        %2331 = vxpose.xlu0.b32.end [16/16] 0.0, 128
        %v2332 = vpop.trf.xlu0
        %v2333 = vpop.trf.xlu0
        %v2334 = vpop.trf.xlu0
        %v2335 = vpop.trf.xlu0
        %v2336 = vpop.trf.xlu0
        %v2337 = vpop.trf.xlu0
        %v2338 = vpop.trf.xlu0
        %v2339 = vpop.trf.xlu0
        %v2340 = vpop.trf.xlu0
        %v2341 = vpop.trf.xlu0
        %v2342 = vpop.trf.xlu0
        %v2343 = vpop.trf.xlu0
        %v2344 = vpop.trf.xlu0
        %v2345 = vpop.trf.xlu0
        %v2346 = vpop.trf.xlu0
        %v2347 = vpop.trf.xlu0
        %2348 = vxpose.xlu0.b32.start [1/16] %v2233, 128
        %2349 = vxpose.xlu0.b32.cont [2/16] 0.0, 128
        %2350 = vxpose.xlu0.b32.cont [3/16] 0.0, 128
        %2351 = vxpose.xlu0.b32.cont [4/16] 0.0, 128
        %2352 = vxpose.xlu0.b32.cont [5/16] 0.0, 128
        %2353 = vxpose.xlu0.b32.cont [6/16] 0.0, 128
        %2354 = vxpose.xlu0.b32.cont [7/16] 0.0, 128
        %2355 = vxpose.xlu0.b32.cont [8/16] 0.0, 128
        %2356 = vxpose.xlu0.b32.cont [9/16] 0.0, 128
        %2357 = vxpose.xlu0.b32.cont [10/16] 0.0, 128
        %2358 = vxpose.xlu0.b32.cont [11/16] 0.0, 128
        %2359 = vxpose.xlu0.b32.cont [12/16] 0.0, 128
        %2360 = vxpose.xlu0.b32.cont [13/16] 0.0, 128
        %2361 = vxpose.xlu0.b32.cont [14/16] 0.0, 128
        %2362 = vxpose.xlu0.b32.cont [15/16] 0.0, 128
        %2363 = vxpose.xlu0.b32.end [16/16] 0.0, 128
        %v2364 = vpop.trf.xlu0
        %v2365 = vpop.trf.xlu0
        %v2366 = vpop.trf.xlu0
        %v2367 = vpop.trf.xlu0
        %v2368 = vpop.trf.xlu0
        %v2369 = vpop.trf.xlu0
        %v2370 = vpop.trf.xlu0
        %v2371 = vpop.trf.xlu0
        %v2372 = vpop.trf.xlu0
        %v2373 = vpop.trf.xlu0
        %v2374 = vpop.trf.xlu0
        %v2375 = vpop.trf.xlu0
        %v2376 = vpop.trf.xlu0
        %v2377 = vpop.trf.xlu0
        %v2378 = vpop.trf.xlu0
        %v2379 = vpop.trf.xlu0
        %2380 = vxpose.xlu0.b32.start [1/16] %v2279, 128
        %2381 = vxpose.xlu0.b32.cont [2/16] 0.0, 128
        %2382 = vxpose.xlu0.b32.cont [3/16] 0.0, 128
        %2383 = vxpose.xlu0.b32.cont [4/16] 0.0, 128
        %2384 = vxpose.xlu0.b32.cont [5/16] 0.0, 128
        %2385 = vxpose.xlu0.b32.cont [6/16] 0.0, 128
        %2386 = vxpose.xlu0.b32.cont [7/16] 0.0, 128
        %2387 = vxpose.xlu0.b32.cont [8/16] 0.0, 128
        %2388 = vxpose.xlu0.b32.cont [9/16] 0.0, 128
        %2389 = vxpose.xlu0.b32.cont [10/16] 0.0, 128
        %2390 = vxpose.xlu0.b32.cont [11/16] 0.0, 128
        %2391 = vxpose.xlu0.b32.cont [12/16] 0.0, 128
        %2392 = vxpose.xlu0.b32.cont [13/16] 0.0, 128
        %2393 = vxpose.xlu0.b32.cont [14/16] 0.0, 128
        %2394 = vxpose.xlu0.b32.cont [15/16] 0.0, 128
        %2395 = vxpose.xlu0.b32.end [16/16] 0.0, 128
        %v2396 = vpop.trf.xlu0
        %v2397 = vpop.trf.xlu0
        %v2398 = vpop.trf.xlu0
        %v2399 = vpop.trf.xlu0
        %v2400 = vpop.trf.xlu0
        %v2401 = vpop.trf.xlu0
        %v2402 = vpop.trf.xlu0
        %v2403 = vpop.trf.xlu0
        %v2404 = vpop.trf.xlu0
        %v2405 = vpop.trf.xlu0
        %v2406 = vpop.trf.xlu0
        %v2407 = vpop.trf.xlu0
        %v2408 = vpop.trf.xlu0
        %v2409 = vpop.trf.xlu0
        %v2410 = vpop.trf.xlu0
        %v2411 = vpop.trf.xlu0
        %v2412 = vcombine.low %v2300, %v2364
        %v2413 = vcombine.high %v2300, %v2364
        %v2415 = vunpack.c.l.s4 1983009808
        %v2416 = vunpack.c.0.s8 %v2415
        %v2417 = vlaneseq
        %v2418 = vshrl.u32 %v2417, 7
        %v2419 = vsub.s32 %v2416, %v2418
        %v2420 = vrot.slane %v2412, %v2419
        %v2422 = vunpack.c.l.s4 1983009808
        %v2423 = vunpack.c.0.s8 %v2422
        %v2424 = vlaneseq
        %v2425 = vshrl.u32 %v2424, 7
        %v2426 = vsub.s32 %v2423, %v2425
        %v2427 = vrot.slane %v2413, %v2426
        %v2428 = vcombine.low %v2332, %v2396
        %v2429 = vcombine.high %v2332, %v2396
        %v2431 = vunpack.c.l.s4 1983009808
        %v2432 = vunpack.c.0.s8 %v2431
        %v2433 = vlaneseq
        %v2434 = vshrl.u32 %v2433, 7
        %v2435 = vsub.s32 %v2432, %v2434
        %v2436 = vrot.slane %v2428, %v2435
        %v2438 = vunpack.c.l.s4 1983009808
        %v2439 = vunpack.c.0.s8 %v2438
        %v2440 = vlaneseq
        %v2441 = vshrl.u32 %v2440, 7
        %v2442 = vsub.s32 %v2439, %v2441
        %v2443 = vrot.slane %v2429, %v2442
        %v2444 = vcombine.low %v2420, %v2436
        %v2445 = vcombine.high %v2420, %v2436
        %v2447 = vunpack.c.l.s4 1934713408
        %v2448 = vunpack.c.0.s8 %v2447
        %v2449 = vlaneseq
        %v2450 = vshrl.u32 %v2449, 7
        %v2451 = vsub.s32 %v2448, %v2450
        %v2452 = vrot.slane %v2444, %v2451
        %v2454 = vunpack.c.l.s4 1934713408
        %v2455 = vunpack.c.0.s8 %v2454
        %v2456 = vlaneseq
        %v2457 = vshrl.u32 %v2456, 7
        %v2458 = vsub.s32 %v2455, %v2457
        %v2459 = vrot.slane %v2445, %v2458
        %v2460 = vcombine.low %v2427, %v2443
        %v2461 = vcombine.high %v2427, %v2443
        %v2463 = vunpack.c.l.s4 1934713408
        %v2464 = vunpack.c.0.s8 %v2463
        %v2465 = vlaneseq
        %v2466 = vshrl.u32 %v2465, 7
        %v2467 = vsub.s32 %v2464, %v2466
        %v2468 = vrot.slane %v2460, %v2467
        %v2470 = vunpack.c.l.s4 1934713408
        %v2471 = vunpack.c.0.s8 %v2470
        %v2472 = vlaneseq
        %v2473 = vshrl.u32 %v2472, 7
        %v2474 = vsub.s32 %v2471, %v2473
        %v2475 = vrot.slane %v2461, %v2474
        %v2476 = vcombine.high %v2452, 0.0
        %v2477 = vcombine.high %v2459, 0.0
        %v2478 = vcombine.high %v2468, 0.0
        %v2479 = vcombine.high %v2475, 0.0
        %v2480 = vcombine.low %v2452, %v2459
        %v2482 = vunpack.c.l.s4 1983009808
        %v2483 = vunpack.c.0.s8 %v2482
        %v2484 = vlaneseq
        %v2485 = vshrl.u32 %v2484, 7
        %v2486 = vsub.s32 %v2483, %v2485
        %v2487 = vrot.slane %v2480, %v2486
        %v2488 = vcombine.low %v2476, %v2477
        %v2490 = vunpack.c.l.s4 1983009808
        %v2491 = vunpack.c.0.s8 %v2490
        %v2492 = vlaneseq
        %v2493 = vshrl.u32 %v2492, 7
        %v2494 = vsub.s32 %v2491, %v2493
        %v2495 = vrot.slane %v2488, %v2494
        %v2496 = vcombine.low %v2468, %v2475
        %v2498 = vunpack.c.l.s4 1983009808
        %v2499 = vunpack.c.0.s8 %v2498
        %v2500 = vlaneseq
        %v2501 = vshrl.u32 %v2500, 7
        %v2502 = vsub.s32 %v2499, %v2501
        %v2503 = vrot.slane %v2496, %v2502
        %v2504 = vcombine.low %v2478, %v2479
        %v2506 = vunpack.c.l.s4 1983009808
        %v2507 = vunpack.c.0.s8 %v2506
        %v2508 = vlaneseq
        %v2509 = vshrl.u32 %v2508, 7
        %v2510 = vsub.s32 %v2507, %v2509
        %v2511 = vrot.slane %v2504, %v2510
        %v2512 = vcombine.low %v2487, %v2495
        %v2513 = vcombine.high %v2487, %v2495
        %v2515 = vunpack.c.l.s4 1934713408
        %v2516 = vunpack.c.0.s8 %v2515
        %v2517 = vlaneseq
        %v2518 = vshrl.u32 %v2517, 7
        %v2519 = vsub.s32 %v2516, %v2518
        %v2520 = vrot.slane %v2512, %v2519
        %v2522 = vunpack.c.l.s4 1934713408
        %v2523 = vunpack.c.0.s8 %v2522
        %v2524 = vlaneseq
        %v2525 = vshrl.u32 %v2524, 7
        %v2526 = vsub.s32 %v2523, %v2525
        %v2527 = vrot.slane %v2513, %v2526
        %v2528 = vcombine.low %v2503, %v2511
        %v2529 = vcombine.high %v2503, %v2511
        %v2531 = vunpack.c.l.s4 1934713408
        %v2532 = vunpack.c.0.s8 %v2531
        %v2533 = vlaneseq
        %v2534 = vshrl.u32 %v2533, 7
        %v2535 = vsub.s32 %v2532, %v2534
        %v2536 = vrot.slane %v2528, %v2535
        %v2538 = vunpack.c.l.s4 1934713408
        %v2539 = vunpack.c.0.s8 %v2538
        %v2540 = vlaneseq
        %v2541 = vshrl.u32 %v2540, 7
        %v2542 = vsub.s32 %v2539, %v2541
        %v2543 = vrot.slane %v2529, %v2542
        %v2544 = vcombine.low %v2520, %v2536
        %v2545 = vcombine.high %v2520, %v2536
        %v2546 = vcombine.low %v2527, %v2543
        %v2547 = vcombine.high %v2527, %v2543
        %2549 = vrot.lane.b32.xlu0 %v2545, 8
        %v2550 = vpop.permute.xlu0 %2549
        %2553 = vrot.lane.b32.xlu0 %v2546, 16
        %v2554 = vpop.permute.xlu0 %2553
        %2557 = vrot.lane.b32.xlu0 %v2547, 24
        %v2558 = vpop.permute.xlu0 %2557
        %v2560 = vsel %vm1448, %v2544, %v2550
        %vm2561 = vcmask 130048
        %v2562 = vsel %vm2561, %v2560, %v2554
        %vm2563 = vcmask 195584
        %v2564 = vsel %vm2563, %v2562, %v2558
        %v2565 = vpack.c.bf16 %v2564, %v2564
        %v2566 = vld [vmem:[%s7] sm:$0xf]
        %v2567 = vld [vmem:[%s7 + $0x4] sm:$0xf]
        %v2568 = vld [vmem:[%s7 + $0x8] sm:$0xf]
        %v2569 = vld [vmem:[%s7 + $0xc] sm:$0xf]
        %v2570 = vld [vmem:[%s8] sm:$0x1]
        %v2572 = vlaneseq
        %v2573 = vshrl.u32 %v2572, 7
        %v2574 = vsub.s32 0, %v2573
        %v2575 = vrot.slane %v2570, %v2574
        %v2581 = vunpack.c.l.b16 %v2566
        %v2582 = vunpack.c.l.b16 %v2567
        %v2583 = vunpack.c.l.b16 %v2568
        %v2584 = vunpack.c.l.b16 %v2569
        %v2585 = vpack.c.b16 %v2582, %v2581
        %v2586 = vpack.c.b16 %v2584, %v2583
        %v2590 = vsel %vm648, %v2565, 0
        %2592 = vmatprep.subr.bf16.mxu0 0
        %2593 = vmatpush1.bf16.msra.mxu0 0
        %2594 = vmatprep.subr.bf16.mxu0 0
        %2595 = vmatpush1.bf16.msra.mxu0 0
        %2596 = vmatprep.subr.bf16.mxu0 0
        %2597 = vmatpush1.bf16.msra.mxu0 0
        %2598 = vmatprep.subr.bf16.mxu0 0
        %2599 = vmatpush1.bf16.msra.mxu0 0
        %2600 = vmatprep.subr.bf16.mxu0 0
        %2601 = vmatpush1.bf16.msra.mxu0 0
        %2602 = vmatprep.subr.bf16.mxu0 0
        %2603 = vmatpush1.bf16.msra.mxu0 0
        %2604 = vmatprep.subr.bf16.mxu0 0
        %2605 = vmatpush1.bf16.msra.mxu0 %v2586
        %2606 = vmatprep.subr.bf16.mxu0 0
        %2607 = vmatpush1.bf16.msra.mxu0 %v2585
        %2608 = vmatprep.subr.bf16.mxu0 0
        %2609 = vmatpush2.bf16.msra.mxu0 0
        %2610 = vmatprep.subr.bf16.mxu0 0
        %2611 = vmatpush2.bf16.msra.mxu0 0
        %2612 = vmatprep.subr.bf16.mxu0 0
        %2613 = vmatpush2.bf16.msra.mxu0 0
        %2614 = vmatprep.subr.bf16.mxu0 0
        %2615 = vmatpush2.bf16.msra.mxu0 0
        %2616 = vmatprep.subr.bf16.mxu0 0
        %2617 = vmatpush2.bf16.msra.mxu0 0
        %2618 = vmatprep.subr.bf16.mxu0 0
        %2619 = vmatpush2.bf16.msra.mxu0 0
        %2620 = vmatprep.subr.bf16.mxu0 0
        %2621 = vmatpush2.bf16.msra.mxu0 0
        %2622 = vmatprep.subr.bf16.mxu0 0
        %2623 = vmatpush2.bf16.msra.mxu0 0
        %2624 = vmatprep.mubr.bf16.mxu0 0
        %2625 = vmatmul.mubr.bf16.gmra.mxu0 %v2590
        %v2626 = vpop.f32.mrf.mxu0
        %v2627 = vadd.f32 %v2575, %v2626
        %v2628 = vpop.f32.mrf.mxu0
        %v2629 = vpop.f32.mrf.mxu0
        %v2630 = vpop.f32.mrf.mxu0
        %2631 = vdwg.mxu0
        %v2632 = vadd.f32 %v2627, %v623
        %v2633 = vld [vmem:[%s9] sm:$0x3]
        %v2634 = vsel %vm648, %v2632, 0.0
        %2635 = vadd.xlane.f32.xlu0 %v2634
        %v2636 = vpop.xlane.xlu0 %2635
        %v2637 = vrcp.pop 32.0
        %v2638 = vmul.f32 %v2636, %v2637
        %v2639 = vmul.f32 %v2632, %v2632
        %v2640 = vsel %vm648, %v2639, 0.0
        %2641 = vadd.xlane.f32.xlu0 %v2640
        %v2642 = vpop.xlane.xlu0 %2641
        %v2643 = vmul.f32 %v2642, %v2637
        %v2644 = vmul.f32 %v2638, %v2638
        %v2645 = vsub.f32 %v2643, %v2644
        %v2646 = vmax.f32 %v2645, 0.0
        %v2647 = vsub.f32 %v2632, %v2638
        %v2648 = vadd.f32 %v2646, 1e-06
        %v2649 = vrsqrt.pop %v2648
        %v2650 = vmul.f32 %v2647, %v2649
        %v2651 = vlaneseq
        %v2652 = vshrl.u32 %v2651, 7
        %v2653 = vsub.s32 0, %v2652
        %v2654 = vrot.slane %v2633, %v2653
        %v2655 = vmul.f32 %v2650, %v2654
        %v2656 = vlaneseq
        %v2657 = vshrl.u32 %v2656, 7
        %v2658 = vsub.s32 1, %v2657
        %v2659 = vrot.slane %v2633, %v2658
        %v2660 = vadd.f32 %v2655, %v2659
        %v2661 = vpack.c.bf16 %v2660, %v2660
        %v2662 = vld [vmem:[%s10] sm:$0xf]
        %v2663 = vld [vmem:[%s10 + $0x4] sm:$0xf]
        %v2664 = vld [vmem:[%s10 + $0x8] sm:$0xf]
        %v2665 = vld [vmem:[%s10 + $0xc] sm:$0xf]
        %v2666 = vld [vmem:[%s11] sm:$0x1]
        %v2668 = vlaneseq
        %v2669 = vshrl.u32 %v2668, 7
        %v2670 = vsub.s32 0, %v2669
        %v2671 = vrot.slane %v2666, %v2670
        %v2677 = vunpack.c.l.b16 %v2662
        %v2678 = vunpack.c.l.b16 %v2663
        %v2679 = vunpack.c.l.b16 %v2664
        %v2680 = vunpack.c.l.b16 %v2665
        %v2681 = vpack.c.b16 %v2678, %v2677
        %v2682 = vpack.c.b16 %v2680, %v2679
        %v2686 = vsel %vm648, %v2661, 0
        %2688 = vmatprep.subr.bf16.mxu0 0
        %2689 = vmatpush1.bf16.msra.mxu0 0
        %2690 = vmatprep.subr.bf16.mxu0 0
        %2691 = vmatpush1.bf16.msra.mxu0 0
        %2692 = vmatprep.subr.bf16.mxu0 0
        %2693 = vmatpush1.bf16.msra.mxu0 0
        %2694 = vmatprep.subr.bf16.mxu0 0
        %2695 = vmatpush1.bf16.msra.mxu0 0
        %2696 = vmatprep.subr.bf16.mxu0 0
        %2697 = vmatpush1.bf16.msra.mxu0 0
        %2698 = vmatprep.subr.bf16.mxu0 0
        %2699 = vmatpush1.bf16.msra.mxu0 0
        %2700 = vmatprep.subr.bf16.mxu0 0
        %2701 = vmatpush1.bf16.msra.mxu0 %v2682
        %2702 = vmatprep.subr.bf16.mxu0 0
        %2703 = vmatpush1.bf16.msra.mxu0 %v2681
        %2704 = vmatprep.subr.bf16.mxu0 0
        %2705 = vmatpush2.bf16.msra.mxu0 0
        %2706 = vmatprep.subr.bf16.mxu0 0
        %2707 = vmatpush2.bf16.msra.mxu0 0
        %2708 = vmatprep.subr.bf16.mxu0 0
        %2709 = vmatpush2.bf16.msra.mxu0 0
        %2710 = vmatprep.subr.bf16.mxu0 0
        %2711 = vmatpush2.bf16.msra.mxu0 0
        %2712 = vmatprep.subr.bf16.mxu0 0
        %2713 = vmatpush2.bf16.msra.mxu0 0
        %2714 = vmatprep.subr.bf16.mxu0 0
        %2715 = vmatpush2.bf16.msra.mxu0 0
        %2716 = vmatprep.subr.bf16.mxu0 0
        %2717 = vmatpush2.bf16.msra.mxu0 0
        %2718 = vmatprep.subr.bf16.mxu0 0
        %2719 = vmatpush2.bf16.msra.mxu0 0
        %2720 = vmatprep.mubr.bf16.mxu0 0
        %2721 = vmatmul.mubr.bf16.gmra.mxu0 %v2686
        %v2722 = vpop.f32.mrf.mxu0
        %v2723 = vadd.f32 %v2671, %v2722
        %v2724 = vpop.f32.mrf.mxu0
        %v2725 = vpop.f32.mrf.mxu0
        %v2726 = vpop.f32.mrf.mxu0
        %2727 = vdwg.mxu0
        %v2728 = vmul.f32 %v2723, 0.5
        %v2729 = vmul.f32 %v2723, 0.044715
        %v2730 = vmul.f32 %v2729, %v2723
        %v2731 = vmul.f32 %v2730, %v2723
        %v2732 = vadd.f32 %v2723, %v2731
        %v2733 = vmul.f32 %v2732, 0.7978846
        %v2734 = vtanh.pop %v2733
        %v2735 = vadd.f32 %v2734, 1.0
        %v2736 = vmul.f32 %v2728, %v2735
        %v2737 = vpack.c.bf16 %v2736, %v2736
        %v2738 = vld [vmem:[%s12] sm:$0xf]
        %v2739 = vld [vmem:[%s12 + $0x4] sm:$0xf]
        %v2740 = vld [vmem:[%s12 + $0x8] sm:$0xf]
        %v2741 = vld [vmem:[%s12 + $0xc] sm:$0xf]
        %v2742 = vld [vmem:[%s12 + $0x10] sm:$0xf]
        %v2743 = vld [vmem:[%s12 + $0x14] sm:$0xf]
        %v2744 = vld [vmem:[%s12 + $0x18] sm:$0xf]
        %v2745 = vld [vmem:[%s12 + $0x1c] sm:$0xf]
        %v2746 = vld [vmem:[%s13] sm:$0x1]
        %v2748 = vlaneseq
        %v2749 = vshrl.u32 %v2748, 7
        %v2750 = vsub.s32 0, %v2749
        %v2751 = vrot.slane %v2746, %v2750
        %v2761 = vunpack.c.l.b16 %v2738
        %v2762 = vunpack.c.l.b16 %v2739
        %v2763 = vunpack.c.l.b16 %v2740
        %v2764 = vunpack.c.l.b16 %v2741
        %v2765 = vunpack.c.l.b16 %v2742
        %v2766 = vunpack.c.l.b16 %v2743
        %v2767 = vunpack.c.l.b16 %v2744
        %v2768 = vunpack.c.l.b16 %v2745
        %v2769 = vpack.c.b16 %v2762, %v2761
        %v2770 = vpack.c.b16 %v2764, %v2763
        %v2771 = vpack.c.b16 %v2766, %v2765
        %v2772 = vpack.c.b16 %v2768, %v2767
        %vm2777 = vcmask 523264
        %v2779 = vsel %vm2777, %v2737, 0
        %2781 = vmatprep.subr.bf16.mxu0 0
        %2782 = vmatpush1.bf16.msra.mxu0 0
        %2783 = vmatprep.subr.bf16.mxu0 0
        %2784 = vmatpush1.bf16.msra.mxu0 0
        %2785 = vmatprep.subr.bf16.mxu0 0
        %2786 = vmatpush1.bf16.msra.mxu0 0
        %2787 = vmatprep.subr.bf16.mxu0 0
        %2788 = vmatpush1.bf16.msra.mxu0 0
        %2789 = vmatprep.subr.bf16.mxu0 0
        %2790 = vmatpush1.bf16.msra.mxu0 %v2772
        %2791 = vmatprep.subr.bf16.mxu0 0
        %2792 = vmatpush1.bf16.msra.mxu0 %v2771
        %2793 = vmatprep.subr.bf16.mxu0 0
        %2794 = vmatpush1.bf16.msra.mxu0 %v2770
        %2795 = vmatprep.subr.bf16.mxu0 0
        %2796 = vmatpush1.bf16.msra.mxu0 %v2769
        %2797 = vmatprep.subr.bf16.mxu0 0
        %2798 = vmatpush2.bf16.msra.mxu0 0
        %2799 = vmatprep.subr.bf16.mxu0 0
        %2800 = vmatpush2.bf16.msra.mxu0 0
        %2801 = vmatprep.subr.bf16.mxu0 0
        %2802 = vmatpush2.bf16.msra.mxu0 0
        %2803 = vmatprep.subr.bf16.mxu0 0
        %2804 = vmatpush2.bf16.msra.mxu0 0
        %2805 = vmatprep.subr.bf16.mxu0 0
        %2806 = vmatpush2.bf16.msra.mxu0 0
        %2807 = vmatprep.subr.bf16.mxu0 0
        %2808 = vmatpush2.bf16.msra.mxu0 0
        %2809 = vmatprep.subr.bf16.mxu0 0
        %2810 = vmatpush2.bf16.msra.mxu0 0
        %2811 = vmatprep.subr.bf16.mxu0 0
        %2812 = vmatpush2.bf16.msra.mxu0 0
        %2813 = vmatprep.mubr.bf16.mxu0 0
        %2814 = vmatmul.mubr.bf16.gmra.mxu0 %v2779
        %v2815 = vpop.f32.mrf.mxu0
        %v2816 = vadd.f32 %v2751, %v2815
        %v2817 = vpop.f32.mrf.mxu0
        %v2818 = vpop.f32.mrf.mxu0
        %v2819 = vpop.f32.mrf.mxu0
        %2820 = vdwg.mxu0
        %v2821 = vadd.f32 %v2816, %v2632
        %s2822 = scalar_lea.vmem %s4, 2
        %v2823 = vld [vmem:[%s2822] sm:$0x3]
        %v2824 = vsel %vm648, %v2821, 0.0
        %2825 = vadd.xlane.f32.xlu0 %v2824
        %v2826 = vpop.xlane.xlu0 %2825
        %v2827 = vmul.f32 %v2826, %v2637
        %v2828 = vmul.f32 %v2821, %v2821
        %v2829 = vsel %vm648, %v2828, 0.0
        %2830 = vadd.xlane.f32.xlu0 %v2829
        %v2831 = vpop.xlane.xlu0 %2830
        %v2832 = vmul.f32 %v2831, %v2637
        %v2833 = vmul.f32 %v2827, %v2827
        %v2834 = vsub.f32 %v2832, %v2833
        %v2835 = vmax.f32 %v2834, 0.0
        %v2836 = vsub.f32 %v2821, %v2827
        %v2837 = vadd.f32 %v2835, 1e-06
        %v2838 = vrsqrt.pop %v2837
        %v2839 = vmul.f32 %v2836, %v2838
        %v2840 = vlaneseq
        %v2841 = vshrl.u32 %v2840, 7
        %v2842 = vsub.s32 0, %v2841
        %v2843 = vrot.slane %v2823, %v2842
        %v2844 = vmul.f32 %v2839, %v2843
        %v2845 = vlaneseq
        %v2846 = vshrl.u32 %v2845, 7
        %v2847 = vsub.s32 1, %v2846
        %v2848 = vrot.slane %v2823, %v2847
        %v2849 = vadd.f32 %v2844, %v2848
        %v2850 = vpack.c.bf16 %v2849, %v2849
        %s2851 = scalar_lea.vmem %s5, 16
        %v2852 = vld [vmem:[%s2851] sm:$0xf]
        %v2853 = vld [vmem:[%s2851 + $0x4] sm:$0xf]
        %v2854 = vld [vmem:[%s2851 + $0x8] sm:$0xf]
        %v2855 = vld [vmem:[%s2851 + $0xc] sm:$0xf]
        %s2856 = scalar_lea.vmem [#allocation5], 1
        %v2857 = vld [vmem:[%s2856] sm:$0x1]
        %v2859 = vlaneseq
        %v2860 = vshrl.u32 %v2859, 7
        %v2861 = vsub.s32 0, %v2860
        %v2862 = vrot.slane %v2857, %v2861
        %v2868 = vunpack.c.l.b16 %v2852
        %v2869 = vunpack.c.l.b16 %v2853
        %v2870 = vunpack.c.l.b16 %v2854
        %v2871 = vunpack.c.l.b16 %v2855
        %v2872 = vpack.c.b16 %v2869, %v2868
        %v2873 = vpack.c.b16 %v2871, %v2870
        %v2877 = vsel %vm648, %v2850, 0
        %2879 = vmatprep.subr.bf16.mxu0 0
        %2880 = vmatpush1.bf16.msra.mxu0 0
        %2881 = vmatprep.subr.bf16.mxu0 0
        %2882 = vmatpush1.bf16.msra.mxu0 0
        %2883 = vmatprep.subr.bf16.mxu0 0
        %2884 = vmatpush1.bf16.msra.mxu0 0
        %2885 = vmatprep.subr.bf16.mxu0 0
        %2886 = vmatpush1.bf16.msra.mxu0 0
        %2887 = vmatprep.subr.bf16.mxu0 0
        %2888 = vmatpush1.bf16.msra.mxu0 0
        %2889 = vmatprep.subr.bf16.mxu0 0
        %2890 = vmatpush1.bf16.msra.mxu0 0
        %2891 = vmatprep.subr.bf16.mxu0 0
        %2892 = vmatpush1.bf16.msra.mxu0 %v2873
        %2893 = vmatprep.subr.bf16.mxu0 0
        %2894 = vmatpush1.bf16.msra.mxu0 %v2872
        %2895 = vmatprep.subr.bf16.mxu0 0
        %2896 = vmatpush2.bf16.msra.mxu0 0
        %2897 = vmatprep.subr.bf16.mxu0 0
        %2898 = vmatpush2.bf16.msra.mxu0 0
        %2899 = vmatprep.subr.bf16.mxu0 0
        %2900 = vmatpush2.bf16.msra.mxu0 0
        %2901 = vmatprep.subr.bf16.mxu0 0
        %2902 = vmatpush2.bf16.msra.mxu0 0
        %2903 = vmatprep.subr.bf16.mxu0 0
        %2904 = vmatpush2.bf16.msra.mxu0 0
        %2905 = vmatprep.subr.bf16.mxu0 0
        %2906 = vmatpush2.bf16.msra.mxu0 0
        %2907 = vmatprep.subr.bf16.mxu0 0
        %2908 = vmatpush2.bf16.msra.mxu0 0
        %2909 = vmatprep.subr.bf16.mxu0 0
        %2910 = vmatpush2.bf16.msra.mxu0 0
        %2911 = vmatprep.mubr.bf16.mxu0 0
        %2912 = vmatmul.mubr.bf16.gmra.mxu0 %v2877
        %v2913 = vpop.f32.mrf.mxu0
        %v2914 = vadd.f32 %v2862, %v2913
        %v2915 = vpop.f32.mrf.mxu0
        %v2916 = vpop.f32.mrf.mxu0
        %v2917 = vpop.f32.mrf.mxu0
        %2918 = vdwg.mxu0
        %v2919 = vmul.f32 %v2914, 0.35355338
        %2921 = vrot.lane.b32.xlu0 %v2919, 120
        %v2922 = vpop.permute.xlu0 %2921
        %2924 = vrot.lane.b32.xlu0 %v2919, 112
        %v2925 = vpop.permute.xlu0 %2924
        %2927 = vrot.lane.b32.xlu0 %v2919, 104
        %v2928 = vpop.permute.xlu0 %2927
        %v2930 = vcombine.low %v2919, %v2925
        %v2931 = vcombine.high %v2919, %v2925
        %v2933 = vunpack.c.l.s4 1983009808
        %v2934 = vunpack.c.0.s8 %v2933
        %v2935 = vlaneseq
        %v2936 = vshrl.u32 %v2935, 7
        %v2937 = vsub.s32 %v2934, %v2936
        %v2938 = vrot.slane %v2930, %v2937
        %v2940 = vunpack.c.l.s4 1983009808
        %v2941 = vunpack.c.0.s8 %v2940
        %v2942 = vlaneseq
        %v2943 = vshrl.u32 %v2942, 7
        %v2944 = vsub.s32 %v2941, %v2943
        %v2945 = vrot.slane %v2931, %v2944
        %v2946 = vcombine.low %v2922, %v2928
        %v2947 = vcombine.high %v2922, %v2928
        %v2949 = vunpack.c.l.s4 1983009808
        %v2950 = vunpack.c.0.s8 %v2949
        %v2951 = vlaneseq
        %v2952 = vshrl.u32 %v2951, 7
        %v2953 = vsub.s32 %v2950, %v2952
        %v2954 = vrot.slane %v2946, %v2953
        %v2956 = vunpack.c.l.s4 1983009808
        %v2957 = vunpack.c.0.s8 %v2956
        %v2958 = vlaneseq
        %v2959 = vshrl.u32 %v2958, 7
        %v2960 = vsub.s32 %v2957, %v2959
        %v2961 = vrot.slane %v2947, %v2960
        %v2962 = vcombine.low %v2938, %v2954
        %v2963 = vcombine.high %v2938, %v2954
        %v2965 = vunpack.c.l.s4 1934713408
        %v2966 = vunpack.c.0.s8 %v2965
        %v2967 = vlaneseq
        %v2968 = vshrl.u32 %v2967, 7
        %v2969 = vsub.s32 %v2966, %v2968
        %v2970 = vrot.slane %v2962, %v2969
        %v2972 = vunpack.c.l.s4 1934713408
        %v2973 = vunpack.c.0.s8 %v2972
        %v2974 = vlaneseq
        %v2975 = vshrl.u32 %v2974, 7
        %v2976 = vsub.s32 %v2973, %v2975
        %v2977 = vrot.slane %v2963, %v2976
        %v2978 = vcombine.low %v2945, %v2961
        %v2979 = vcombine.high %v2945, %v2961
        %v2981 = vunpack.c.l.s4 1934713408
        %v2982 = vunpack.c.0.s8 %v2981
        %v2983 = vlaneseq
        %v2984 = vshrl.u32 %v2983, 7
        %v2985 = vsub.s32 %v2982, %v2984
        %v2986 = vrot.slane %v2978, %v2985
        %v2988 = vunpack.c.l.s4 1934713408
        %v2989 = vunpack.c.0.s8 %v2988
        %v2990 = vlaneseq
        %v2991 = vshrl.u32 %v2990, 7
        %v2992 = vsub.s32 %v2989, %v2991
        %v2993 = vrot.slane %v2979, %v2992
        %v2994 = vcombine.high %v2970, 0.0
        %v2995 = vcombine.high %v2977, 0.0
        %v2996 = vcombine.high %v2986, 0.0
        %v2997 = vcombine.high %v2993, 0.0
        %v2998 = vpack.c.bf16 %v2970, %v2970
        %v2999 = vpack.c.bf16 %v2994, %v2994
        %v3000 = vpack.c.bf16 %v2977, %v2977
        %v3001 = vpack.c.bf16 %v2995, %v2995
        %v3002 = vpack.c.bf16 %v2986, %v2986
        %v3003 = vpack.c.bf16 %v2996, %v2996
        %v3004 = vpack.c.bf16 %v2993, %v2993
        %v3005 = vpack.c.bf16 %v2997, %v2997
        %3007 = vrot.lane.b32.xlu0 %v2914, 120
        %v3008 = vpop.permute.xlu0 %3007
        %3009 = vrot.lane.b32.xlu0 %v2914, 112
        %v3010 = vpop.permute.xlu0 %3009
        %3011 = vrot.lane.b32.xlu0 %v2914, 104
        %v3012 = vpop.permute.xlu0 %3011
        %3013 = vrot.lane.b32.xlu0 %v2914, 96
        %v3014 = vpop.permute.xlu0 %3013
        %3015 = vrot.lane.b32.xlu0 %v3008, 96
        %v3016 = vpop.permute.xlu0 %3015
        %3017 = vrot.lane.b32.xlu0 %v3010, 96
        %v3018 = vpop.permute.xlu0 %3017
        %3019 = vrot.lane.b32.xlu0 %v3012, 96
        %v3020 = vpop.permute.xlu0 %3019
        %v3025 = vcombine.low %v3014, %v3018
        %v3026 = vcombine.high %v3014, %v3018
        %v3028 = vunpack.c.l.s4 1983009808
        %v3029 = vunpack.c.0.s8 %v3028
        %v3030 = vlaneseq
        %v3031 = vshrl.u32 %v3030, 7
        %v3032 = vsub.s32 %v3029, %v3031
        %v3033 = vrot.slane %v3025, %v3032
        %v3035 = vunpack.c.l.s4 1983009808
        %v3036 = vunpack.c.0.s8 %v3035
        %v3037 = vlaneseq
        %v3038 = vshrl.u32 %v3037, 7
        %v3039 = vsub.s32 %v3036, %v3038
        %v3040 = vrot.slane %v3026, %v3039
        %v3041 = vcombine.low %v3016, %v3020
        %v3042 = vcombine.high %v3016, %v3020
        %v3044 = vunpack.c.l.s4 1983009808
        %v3045 = vunpack.c.0.s8 %v3044
        %v3046 = vlaneseq
        %v3047 = vshrl.u32 %v3046, 7
        %v3048 = vsub.s32 %v3045, %v3047
        %v3049 = vrot.slane %v3041, %v3048
        %v3051 = vunpack.c.l.s4 1983009808
        %v3052 = vunpack.c.0.s8 %v3051
        %v3053 = vlaneseq
        %v3054 = vshrl.u32 %v3053, 7
        %v3055 = vsub.s32 %v3052, %v3054
        %v3056 = vrot.slane %v3042, %v3055
        %v3057 = vcombine.low %v3033, %v3049
        %v3058 = vcombine.high %v3033, %v3049
        %v3060 = vunpack.c.l.s4 1934713408
        %v3061 = vunpack.c.0.s8 %v3060
        %v3062 = vlaneseq
        %v3063 = vshrl.u32 %v3062, 7
        %v3064 = vsub.s32 %v3061, %v3063
        %v3065 = vrot.slane %v3057, %v3064
        %v3067 = vunpack.c.l.s4 1934713408
        %v3068 = vunpack.c.0.s8 %v3067
        %v3069 = vlaneseq
        %v3070 = vshrl.u32 %v3069, 7
        %v3071 = vsub.s32 %v3068, %v3070
        %v3072 = vrot.slane %v3058, %v3071
        %v3073 = vcombine.low %v3040, %v3056
        %v3074 = vcombine.high %v3040, %v3056
        %v3076 = vunpack.c.l.s4 1934713408
        %v3077 = vunpack.c.0.s8 %v3076
        %v3078 = vlaneseq
        %v3079 = vshrl.u32 %v3078, 7
        %v3080 = vsub.s32 %v3077, %v3079
        %v3081 = vrot.slane %v3073, %v3080
        %v3083 = vunpack.c.l.s4 1934713408
        %v3084 = vunpack.c.0.s8 %v3083
        %v3085 = vlaneseq
        %v3086 = vshrl.u32 %v3085, 7
        %v3087 = vsub.s32 %v3084, %v3086
        %v3088 = vrot.slane %v3074, %v3087
        %v3089 = vcombine.high %v3065, 0.0
        %v3090 = vcombine.high %v3072, 0.0
        %v3091 = vcombine.high %v3081, 0.0
        %v3092 = vcombine.high %v3088, 0.0
        %v3093 = vpack.c.bf16 %v3065, %v3065
        %v3094 = vpack.c.bf16 %v3089, %v3089
        %v3095 = vpack.c.bf16 %v3072, %v3072
        %v3096 = vpack.c.bf16 %v3090, %v3090
        %v3097 = vpack.c.bf16 %v3081, %v3081
        %v3098 = vpack.c.bf16 %v3091, %v3091
        %v3099 = vpack.c.bf16 %v3088, %v3088
        %v3100 = vpack.c.bf16 %v3092, %v3092
        %3101 = vrot.lane.b32.xlu0 %v2914, 64
        %v3102 = vpop.permute.xlu0 %3101
        %3103 = vrot.lane.b32.xlu0 %v3008, 64
        %v3104 = vpop.permute.xlu0 %3103
        %3105 = vrot.lane.b32.xlu0 %v3010, 64
        %v3106 = vpop.permute.xlu0 %3105
        %3107 = vrot.lane.b32.xlu0 %v3012, 64
        %v3108 = vpop.permute.xlu0 %3107
        %v3113 = vcombine.low %v3102, %v3106
        %v3114 = vcombine.high %v3102, %v3106
        %v3116 = vunpack.c.l.s4 1983009808
        %v3117 = vunpack.c.0.s8 %v3116
        %v3118 = vlaneseq
        %v3119 = vshrl.u32 %v3118, 7
        %v3120 = vsub.s32 %v3117, %v3119
        %v3121 = vrot.slane %v3113, %v3120
        %v3123 = vunpack.c.l.s4 1983009808
        %v3124 = vunpack.c.0.s8 %v3123
        %v3125 = vlaneseq
        %v3126 = vshrl.u32 %v3125, 7
        %v3127 = vsub.s32 %v3124, %v3126
        %v3128 = vrot.slane %v3114, %v3127
        %v3129 = vcombine.low %v3104, %v3108
        %v3130 = vcombine.high %v3104, %v3108
        %v3132 = vunpack.c.l.s4 1983009808
        %v3133 = vunpack.c.0.s8 %v3132
        %v3134 = vlaneseq
        %v3135 = vshrl.u32 %v3134, 7
        %v3136 = vsub.s32 %v3133, %v3135
        %v3137 = vrot.slane %v3129, %v3136
        %v3139 = vunpack.c.l.s4 1983009808
        %v3140 = vunpack.c.0.s8 %v3139
        %v3141 = vlaneseq
        %v3142 = vshrl.u32 %v3141, 7
        %v3143 = vsub.s32 %v3140, %v3142
        %v3144 = vrot.slane %v3130, %v3143
        %v3145 = vcombine.low %v3121, %v3137
        %v3146 = vcombine.high %v3121, %v3137
        %v3148 = vunpack.c.l.s4 1934713408
        %v3149 = vunpack.c.0.s8 %v3148
        %v3150 = vlaneseq
        %v3151 = vshrl.u32 %v3150, 7
        %v3152 = vsub.s32 %v3149, %v3151
        %v3153 = vrot.slane %v3145, %v3152
        %v3155 = vunpack.c.l.s4 1934713408
        %v3156 = vunpack.c.0.s8 %v3155
        %v3157 = vlaneseq
        %v3158 = vshrl.u32 %v3157, 7
        %v3159 = vsub.s32 %v3156, %v3158
        %v3160 = vrot.slane %v3146, %v3159
        %v3161 = vcombine.low %v3128, %v3144
        %v3162 = vcombine.high %v3128, %v3144
        %v3164 = vunpack.c.l.s4 1934713408
        %v3165 = vunpack.c.0.s8 %v3164
        %v3166 = vlaneseq
        %v3167 = vshrl.u32 %v3166, 7
        %v3168 = vsub.s32 %v3165, %v3167
        %v3169 = vrot.slane %v3161, %v3168
        %v3171 = vunpack.c.l.s4 1934713408
        %v3172 = vunpack.c.0.s8 %v3171
        %v3173 = vlaneseq
        %v3174 = vshrl.u32 %v3173, 7
        %v3175 = vsub.s32 %v3172, %v3174
        %v3176 = vrot.slane %v3162, %v3175
        %v3177 = vcombine.high %v3153, 0.0
        %v3178 = vcombine.high %v3160, 0.0
        %v3179 = vcombine.high %v3169, 0.0
        %v3180 = vcombine.high %v3176, 0.0
        %v3181 = vpack.c.bf16 %v3153, %v3153
        %v3182 = vpack.c.bf16 %v3177, %v3177
        %v3183 = vpack.c.bf16 %v3160, %v3160
        %v3184 = vpack.c.bf16 %v3178, %v3178
        %v3185 = vpack.c.bf16 %v3169, %v3169
        %v3186 = vpack.c.bf16 %v3179, %v3179
        %v3187 = vpack.c.bf16 %v3176, %v3176
        %v3188 = vpack.c.bf16 %v3180, %v3180
        %v3189 = vcombine.low %v2998, %v3002
        %v3191 = vunpack.c.l.s4 1983009808
        %v3192 = vunpack.c.0.s8 %v3191
        %v3193 = vlaneseq
        %v3194 = vshrl.u32 %v3193, 7
        %v3195 = vsub.s32 %v3192, %v3194
        %v3196 = vrot.slane %v3189, %v3195
        %v3197 = vcombine.low %v3000, %v3004
        %v3199 = vunpack.c.l.s4 1983009808
        %v3200 = vunpack.c.0.s8 %v3199
        %v3201 = vlaneseq
        %v3202 = vshrl.u32 %v3201, 7
        %v3203 = vsub.s32 %v3200, %v3202
        %v3204 = vrot.slane %v3197, %v3203
        %v3205 = vcombine.low %v3196, %v3204
        %v3207 = vunpack.c.l.s4 1934713408
        %v3208 = vunpack.c.0.s8 %v3207
        %v3209 = vlaneseq
        %v3210 = vshrl.u32 %v3209, 7
        %v3211 = vsub.s32 %v3208, %v3210
        %v3212 = vrot.slane %v3205, %v3211
        %v3213 = vcombine.high %v3212, 0
        %v3214 = vcombine.low %v2999, %v3003
        %v3216 = vunpack.c.l.s4 1983009808
        %v3217 = vunpack.c.0.s8 %v3216
        %v3218 = vlaneseq
        %v3219 = vshrl.u32 %v3218, 7
        %v3220 = vsub.s32 %v3217, %v3219
        %v3221 = vrot.slane %v3214, %v3220
        %v3222 = vcombine.low %v3001, %v3005
        %v3224 = vunpack.c.l.s4 1983009808
        %v3225 = vunpack.c.0.s8 %v3224
        %v3226 = vlaneseq
        %v3227 = vshrl.u32 %v3226, 7
        %v3228 = vsub.s32 %v3225, %v3227
        %v3229 = vrot.slane %v3222, %v3228
        %v3230 = vcombine.low %v3221, %v3229
        %v3232 = vunpack.c.l.s4 1934713408
        %v3233 = vunpack.c.0.s8 %v3232
        %v3234 = vlaneseq
        %v3235 = vshrl.u32 %v3234, 7
        %v3236 = vsub.s32 %v3233, %v3235
        %v3237 = vrot.slane %v3230, %v3236
        %v3238 = vcombine.high %v3237, 0
        %v3241 = vpack.i.b16 %v3237, %v3212
        %v3242 = vshrl.u32 %v3212, 16
        %v3243 = vshrl.u32 %v3237, 16
        %v3244 = vpack.i.b16 %v3243, %v3242
        %v3247 = vpack.i.b16 %v3238, %v3213
        %v3248 = vshrl.u32 %v3213, 16
        %v3249 = vshrl.u32 %v3238, 16
        %v3250 = vpack.i.b16 %v3249, %v3248
        %3251 = vxpose.xlu0.c.b16.start [1/8] %v3093, 128
        %3252 = vxpose.xlu0.c.b16.cont [2/8] 0, 128
        %3253 = vxpose.xlu0.c.b16.cont [3/8] 0, 128
        %3254 = vxpose.xlu0.c.b16.cont [4/8] 0, 128
        %3255 = vxpose.xlu0.c.b16.cont [5/8] 0, 128
        %3256 = vxpose.xlu0.c.b16.cont [6/8] 0, 128
        %3257 = vxpose.xlu0.c.b16.cont [7/8] 0, 128
        %3258 = vxpose.xlu0.c.b16.end [8/8] 0, 128
        %v3259 = vpop.trf.xlu0
        %v3260 = vpop.trf.xlu0
        %v3261 = vpop.trf.xlu0
        %v3262 = vpop.trf.xlu0
        %v3263 = vpop.trf.xlu0
        %v3264 = vpop.trf.xlu0
        %v3265 = vpop.trf.xlu0
        %v3266 = vpop.trf.xlu0
        %3267 = vxpose.xlu0.c.b16.start [1/8] %v3094, 128
        %3268 = vxpose.xlu0.c.b16.cont [2/8] 0, 128
        %3269 = vxpose.xlu0.c.b16.cont [3/8] 0, 128
        %3270 = vxpose.xlu0.c.b16.cont [4/8] 0, 128
        %3271 = vxpose.xlu0.c.b16.cont [5/8] 0, 128
        %3272 = vxpose.xlu0.c.b16.cont [6/8] 0, 128
        %3273 = vxpose.xlu0.c.b16.cont [7/8] 0, 128
        %3274 = vxpose.xlu0.c.b16.end [8/8] 0, 128
        %v3275 = vpop.trf.xlu0
        %v3276 = vpop.trf.xlu0
        %v3277 = vpop.trf.xlu0
        %v3278 = vpop.trf.xlu0
        %v3279 = vpop.trf.xlu0
        %v3280 = vpop.trf.xlu0
        %v3281 = vpop.trf.xlu0
        %v3282 = vpop.trf.xlu0
        %3283 = vxpose.xlu0.c.b16.start [1/8] %v3095, 128
        %3284 = vxpose.xlu0.c.b16.cont [2/8] 0, 128
        %3285 = vxpose.xlu0.c.b16.cont [3/8] 0, 128
        %3286 = vxpose.xlu0.c.b16.cont [4/8] 0, 128
        %3287 = vxpose.xlu0.c.b16.cont [5/8] 0, 128
        %3288 = vxpose.xlu0.c.b16.cont [6/8] 0, 128
        %3289 = vxpose.xlu0.c.b16.cont [7/8] 0, 128
        %3290 = vxpose.xlu0.c.b16.end [8/8] 0, 128
        %v3291 = vpop.trf.xlu0
        %v3292 = vpop.trf.xlu0
        %v3293 = vpop.trf.xlu0
        %v3294 = vpop.trf.xlu0
        %v3295 = vpop.trf.xlu0
        %v3296 = vpop.trf.xlu0
        %v3297 = vpop.trf.xlu0
        %v3298 = vpop.trf.xlu0
        %3299 = vxpose.xlu0.c.b16.start [1/8] %v3096, 128
        %3300 = vxpose.xlu0.c.b16.cont [2/8] 0, 128
        %3301 = vxpose.xlu0.c.b16.cont [3/8] 0, 128
        %3302 = vxpose.xlu0.c.b16.cont [4/8] 0, 128
        %3303 = vxpose.xlu0.c.b16.cont [5/8] 0, 128
        %3304 = vxpose.xlu0.c.b16.cont [6/8] 0, 128
        %3305 = vxpose.xlu0.c.b16.cont [7/8] 0, 128
        %3306 = vxpose.xlu0.c.b16.end [8/8] 0, 128
        %v3307 = vpop.trf.xlu0
        %v3308 = vpop.trf.xlu0
        %v3309 = vpop.trf.xlu0
        %v3310 = vpop.trf.xlu0
        %v3311 = vpop.trf.xlu0
        %v3312 = vpop.trf.xlu0
        %v3313 = vpop.trf.xlu0
        %v3314 = vpop.trf.xlu0
        %3315 = vxpose.xlu0.c.b16.start [1/8] %v3097, 128
        %3316 = vxpose.xlu0.c.b16.cont [2/8] 0, 128
        %3317 = vxpose.xlu0.c.b16.cont [3/8] 0, 128
        %3318 = vxpose.xlu0.c.b16.cont [4/8] 0, 128
        %3319 = vxpose.xlu0.c.b16.cont [5/8] 0, 128
        %3320 = vxpose.xlu0.c.b16.cont [6/8] 0, 128
        %3321 = vxpose.xlu0.c.b16.cont [7/8] 0, 128
        %3322 = vxpose.xlu0.c.b16.end [8/8] 0, 128
        %v3323 = vpop.trf.xlu0
        %v3324 = vpop.trf.xlu0
        %v3325 = vpop.trf.xlu0
        %v3326 = vpop.trf.xlu0
        %v3327 = vpop.trf.xlu0
        %v3328 = vpop.trf.xlu0
        %v3329 = vpop.trf.xlu0
        %v3330 = vpop.trf.xlu0
        %3331 = vxpose.xlu0.c.b16.start [1/8] %v3098, 128
        %3332 = vxpose.xlu0.c.b16.cont [2/8] 0, 128
        %3333 = vxpose.xlu0.c.b16.cont [3/8] 0, 128
        %3334 = vxpose.xlu0.c.b16.cont [4/8] 0, 128
        %3335 = vxpose.xlu0.c.b16.cont [5/8] 0, 128
        %3336 = vxpose.xlu0.c.b16.cont [6/8] 0, 128
        %3337 = vxpose.xlu0.c.b16.cont [7/8] 0, 128
        %3338 = vxpose.xlu0.c.b16.end [8/8] 0, 128
        %v3339 = vpop.trf.xlu0
        %v3340 = vpop.trf.xlu0
        %v3341 = vpop.trf.xlu0
        %v3342 = vpop.trf.xlu0
        %v3343 = vpop.trf.xlu0
        %v3344 = vpop.trf.xlu0
        %v3345 = vpop.trf.xlu0
        %v3346 = vpop.trf.xlu0
        %3347 = vxpose.xlu0.c.b16.start [1/8] %v3099, 128
        %3348 = vxpose.xlu0.c.b16.cont [2/8] 0, 128
        %3349 = vxpose.xlu0.c.b16.cont [3/8] 0, 128
        %3350 = vxpose.xlu0.c.b16.cont [4/8] 0, 128
        %3351 = vxpose.xlu0.c.b16.cont [5/8] 0, 128
        %3352 = vxpose.xlu0.c.b16.cont [6/8] 0, 128
        %3353 = vxpose.xlu0.c.b16.cont [7/8] 0, 128
        %3354 = vxpose.xlu0.c.b16.end [8/8] 0, 128
        %v3355 = vpop.trf.xlu0
        %v3356 = vpop.trf.xlu0
        %v3357 = vpop.trf.xlu0
        %v3358 = vpop.trf.xlu0
        %v3359 = vpop.trf.xlu0
        %v3360 = vpop.trf.xlu0
        %v3361 = vpop.trf.xlu0
        %v3362 = vpop.trf.xlu0
        %3363 = vxpose.xlu0.c.b16.start [1/8] %v3100, 128
        %3364 = vxpose.xlu0.c.b16.cont [2/8] 0, 128
        %3365 = vxpose.xlu0.c.b16.cont [3/8] 0, 128
        %3366 = vxpose.xlu0.c.b16.cont [4/8] 0, 128
        %3367 = vxpose.xlu0.c.b16.cont [5/8] 0, 128
        %3368 = vxpose.xlu0.c.b16.cont [6/8] 0, 128
        %3369 = vxpose.xlu0.c.b16.cont [7/8] 0, 128
        %3370 = vxpose.xlu0.c.b16.end [8/8] 0, 128
        %v3371 = vpop.trf.xlu0
        %v3372 = vpop.trf.xlu0
        %v3373 = vpop.trf.xlu0
        %v3374 = vpop.trf.xlu0
        %v3375 = vpop.trf.xlu0
        %v3376 = vpop.trf.xlu0
        %v3377 = vpop.trf.xlu0
        %v3378 = vpop.trf.xlu0
        %v3379 = vcombine.low %v3259, %v3323
        %v3381 = vunpack.c.l.s4 1983009808
        %v3382 = vunpack.c.0.s8 %v3381
        %v3383 = vlaneseq
        %v3384 = vshrl.u32 %v3383, 7
        %v3385 = vsub.s32 %v3382, %v3384
        %v3386 = vrot.slane %v3379, %v3385
        %v3387 = vcombine.low %v3291, %v3355
        %v3389 = vunpack.c.l.s4 1983009808
        %v3390 = vunpack.c.0.s8 %v3389
        %v3391 = vlaneseq
        %v3392 = vshrl.u32 %v3391, 7
        %v3393 = vsub.s32 %v3390, %v3392
        %v3394 = vrot.slane %v3387, %v3393
        %v3395 = vcombine.low %v3386, %v3394
        %v3396 = vcombine.high %v3386, %v3394
        %v3398 = vunpack.c.l.s4 1934713408
        %v3399 = vunpack.c.0.s8 %v3398
        %v3400 = vlaneseq
        %v3401 = vshrl.u32 %v3400, 7
        %v3402 = vsub.s32 %v3399, %v3401
        %v3403 = vrot.slane %v3395, %v3402
        %v3405 = vunpack.c.l.s4 1934713408
        %v3406 = vunpack.c.0.s8 %v3405
        %v3407 = vlaneseq
        %v3408 = vshrl.u32 %v3407, 7
        %v3409 = vsub.s32 %v3406, %v3408
        %v3410 = vrot.slane %v3396, %v3409
        %v3411 = vcombine.high %v3403, 0
        %v3412 = vcombine.high %v3410, 0
        %v3413 = vcombine.low %v3275, %v3339
        %v3415 = vunpack.c.l.s4 1983009808
        %v3416 = vunpack.c.0.s8 %v3415
        %v3417 = vlaneseq
        %v3418 = vshrl.u32 %v3417, 7
        %v3419 = vsub.s32 %v3416, %v3418
        %v3420 = vrot.slane %v3413, %v3419
        %v3421 = vcombine.low %v3307, %v3371
        %v3423 = vunpack.c.l.s4 1983009808
        %v3424 = vunpack.c.0.s8 %v3423
        %v3425 = vlaneseq
        %v3426 = vshrl.u32 %v3425, 7
        %v3427 = vsub.s32 %v3424, %v3426
        %v3428 = vrot.slane %v3421, %v3427
        %v3429 = vcombine.low %v3420, %v3428
        %v3430 = vcombine.high %v3420, %v3428
        %v3432 = vunpack.c.l.s4 1934713408
        %v3433 = vunpack.c.0.s8 %v3432
        %v3434 = vlaneseq
        %v3435 = vshrl.u32 %v3434, 7
        %v3436 = vsub.s32 %v3433, %v3435
        %v3437 = vrot.slane %v3429, %v3436
        %v3439 = vunpack.c.l.s4 1934713408
        %v3440 = vunpack.c.0.s8 %v3439
        %v3441 = vlaneseq
        %v3442 = vshrl.u32 %v3441, 7
        %v3443 = vsub.s32 %v3440, %v3442
        %v3444 = vrot.slane %v3430, %v3443
        %v3445 = vcombine.high %v3437, 0
        %v3446 = vcombine.high %v3444, 0
        %v3449 = vpack.i.b16 %v3437, %v3403
        %v3451 = vshrl.u32 %v3403, 16
        %v3452 = vshrl.u32 %v3437, 16
        %v3453 = vpack.i.b16 %v3452, %v3451
        %v3457 = vpack.i.b16 %v3445, %v3411
        %v3459 = vshrl.u32 %v3411, 16
        %v3460 = vshrl.u32 %v3445, 16
        %v3461 = vpack.i.b16 %v3460, %v3459
        %v3465 = vpack.i.b16 %v3444, %v3410
        %v3467 = vshrl.u32 %v3410, 16
        %v3468 = vshrl.u32 %v3444, 16
        %v3469 = vpack.i.b16 %v3468, %v3467
        %v3473 = vpack.i.b16 %v3446, %v3412
        %v3475 = vshrl.u32 %v3412, 16
        %v3476 = vshrl.u32 %v3446, 16
        %v3477 = vpack.i.b16 %v3476, %v3475
        %3479 = vxpose.xlu0.c.b16.start [1/8] %v3449, 128
        %3480 = vxpose.xlu0.c.b16.cont [2/8] 0, 128
        %3481 = vxpose.xlu0.c.b16.cont [3/8] 0, 128
        %3482 = vxpose.xlu0.c.b16.cont [4/8] 0, 128
        %3483 = vxpose.xlu0.c.b16.cont [5/8] 0, 128
        %3484 = vxpose.xlu0.c.b16.cont [6/8] 0, 128
        %3485 = vxpose.xlu0.c.b16.cont [7/8] 0, 128
        %3486 = vxpose.xlu0.c.b16.end [8/8] 0, 128
        %v3487 = vpop.trf.xlu0
        %v3488 = vpop.trf.xlu0
        %v3489 = vpop.trf.xlu0
        %v3490 = vpop.trf.xlu0
        %v3491 = vpop.trf.xlu0
        %v3492 = vpop.trf.xlu0
        %v3493 = vpop.trf.xlu0
        %v3494 = vpop.trf.xlu0
        %3495 = vxpose.xlu0.c.b16.start [1/8] %v3453, 128
        %3496 = vxpose.xlu0.c.b16.cont [2/8] 0, 128
        %3497 = vxpose.xlu0.c.b16.cont [3/8] 0, 128
        %3498 = vxpose.xlu0.c.b16.cont [4/8] 0, 128
        %3499 = vxpose.xlu0.c.b16.cont [5/8] 0, 128
        %3500 = vxpose.xlu0.c.b16.cont [6/8] 0, 128
        %3501 = vxpose.xlu0.c.b16.cont [7/8] 0, 128
        %3502 = vxpose.xlu0.c.b16.end [8/8] 0, 128
        %v3503 = vpop.trf.xlu0
        %v3504 = vpop.trf.xlu0
        %v3505 = vpop.trf.xlu0
        %v3506 = vpop.trf.xlu0
        %v3507 = vpop.trf.xlu0
        %v3508 = vpop.trf.xlu0
        %v3509 = vpop.trf.xlu0
        %v3510 = vpop.trf.xlu0
        %3511 = vxpose.xlu0.c.b16.start [1/8] %v3457, 128
        %3512 = vxpose.xlu0.c.b16.cont [2/8] 0, 128
        %3513 = vxpose.xlu0.c.b16.cont [3/8] 0, 128
        %3514 = vxpose.xlu0.c.b16.cont [4/8] 0, 128
        %3515 = vxpose.xlu0.c.b16.cont [5/8] 0, 128
        %3516 = vxpose.xlu0.c.b16.cont [6/8] 0, 128
        %3517 = vxpose.xlu0.c.b16.cont [7/8] 0, 128
        %3518 = vxpose.xlu0.c.b16.end [8/8] 0, 128
        %v3519 = vpop.trf.xlu0
        %v3520 = vpop.trf.xlu0
        %v3521 = vpop.trf.xlu0
        %v3522 = vpop.trf.xlu0
        %v3523 = vpop.trf.xlu0
        %v3524 = vpop.trf.xlu0
        %v3525 = vpop.trf.xlu0
        %v3526 = vpop.trf.xlu0
        %3527 = vxpose.xlu0.c.b16.start [1/8] %v3461, 128
        %3528 = vxpose.xlu0.c.b16.cont [2/8] 0, 128
        %3529 = vxpose.xlu0.c.b16.cont [3/8] 0, 128
        %3530 = vxpose.xlu0.c.b16.cont [4/8] 0, 128
        %3531 = vxpose.xlu0.c.b16.cont [5/8] 0, 128
        %3532 = vxpose.xlu0.c.b16.cont [6/8] 0, 128
        %3533 = vxpose.xlu0.c.b16.cont [7/8] 0, 128
        %3534 = vxpose.xlu0.c.b16.end [8/8] 0, 128
        %v3535 = vpop.trf.xlu0
        %v3536 = vpop.trf.xlu0
        %v3537 = vpop.trf.xlu0
        %v3538 = vpop.trf.xlu0
        %v3539 = vpop.trf.xlu0
        %v3540 = vpop.trf.xlu0
        %v3541 = vpop.trf.xlu0
        %v3542 = vpop.trf.xlu0
        %3543 = vxpose.xlu0.c.b16.start [1/8] %v3465, 128
        %3544 = vxpose.xlu0.c.b16.cont [2/8] 0, 128
        %3545 = vxpose.xlu0.c.b16.cont [3/8] 0, 128
        %3546 = vxpose.xlu0.c.b16.cont [4/8] 0, 128
        %3547 = vxpose.xlu0.c.b16.cont [5/8] 0, 128
        %3548 = vxpose.xlu0.c.b16.cont [6/8] 0, 128
        %3549 = vxpose.xlu0.c.b16.cont [7/8] 0, 128
        %3550 = vxpose.xlu0.c.b16.end [8/8] 0, 128
        %v3551 = vpop.trf.xlu0
        %v3552 = vpop.trf.xlu0
        %v3553 = vpop.trf.xlu0
        %v3554 = vpop.trf.xlu0
        %v3555 = vpop.trf.xlu0
        %v3556 = vpop.trf.xlu0
        %v3557 = vpop.trf.xlu0
        %v3558 = vpop.trf.xlu0
        %3559 = vxpose.xlu0.c.b16.start [1/8] %v3469, 128
        %3560 = vxpose.xlu0.c.b16.cont [2/8] 0, 128
        %3561 = vxpose.xlu0.c.b16.cont [3/8] 0, 128
        %3562 = vxpose.xlu0.c.b16.cont [4/8] 0, 128
        %3563 = vxpose.xlu0.c.b16.cont [5/8] 0, 128
        %3564 = vxpose.xlu0.c.b16.cont [6/8] 0, 128
        %3565 = vxpose.xlu0.c.b16.cont [7/8] 0, 128
        %3566 = vxpose.xlu0.c.b16.end [8/8] 0, 128
        %v3567 = vpop.trf.xlu0
        %v3568 = vpop.trf.xlu0
        %v3569 = vpop.trf.xlu0
        %v3570 = vpop.trf.xlu0
        %v3571 = vpop.trf.xlu0
        %v3572 = vpop.trf.xlu0
        %v3573 = vpop.trf.xlu0
        %v3574 = vpop.trf.xlu0
        %3575 = vxpose.xlu0.c.b16.start [1/8] %v3473, 128
        %3576 = vxpose.xlu0.c.b16.cont [2/8] 0, 128
        %3577 = vxpose.xlu0.c.b16.cont [3/8] 0, 128
        %3578 = vxpose.xlu0.c.b16.cont [4/8] 0, 128
        %3579 = vxpose.xlu0.c.b16.cont [5/8] 0, 128
        %3580 = vxpose.xlu0.c.b16.cont [6/8] 0, 128
        %3581 = vxpose.xlu0.c.b16.cont [7/8] 0, 128
        %3582 = vxpose.xlu0.c.b16.end [8/8] 0, 128
        %v3583 = vpop.trf.xlu0
        %v3584 = vpop.trf.xlu0
        %v3585 = vpop.trf.xlu0
        %v3586 = vpop.trf.xlu0
        %v3587 = vpop.trf.xlu0
        %v3588 = vpop.trf.xlu0
        %v3589 = vpop.trf.xlu0
        %v3590 = vpop.trf.xlu0
        %3591 = vxpose.xlu0.c.b16.start [1/8] %v3477, 128
        %3592 = vxpose.xlu0.c.b16.cont [2/8] 0, 128
        %3593 = vxpose.xlu0.c.b16.cont [3/8] 0, 128
        %3594 = vxpose.xlu0.c.b16.cont [4/8] 0, 128
        %3595 = vxpose.xlu0.c.b16.cont [5/8] 0, 128
        %3596 = vxpose.xlu0.c.b16.cont [6/8] 0, 128
        %3597 = vxpose.xlu0.c.b16.cont [7/8] 0, 128
        %3598 = vxpose.xlu0.c.b16.end [8/8] 0, 128
        %v3599 = vpop.trf.xlu0
        %v3600 = vpop.trf.xlu0
        %v3601 = vpop.trf.xlu0
        %v3602 = vpop.trf.xlu0
        %v3603 = vpop.trf.xlu0
        %v3604 = vpop.trf.xlu0
        %v3605 = vpop.trf.xlu0
        %v3606 = vpop.trf.xlu0
        %v3607 = vcombine.low %v3487, %v3551
        %v3609 = vunpack.c.l.s4 1983009808
        %v3610 = vunpack.c.0.s8 %v3609
        %v3611 = vlaneseq
        %v3612 = vshrl.u32 %v3611, 7
        %v3613 = vsub.s32 %v3610, %v3612
        %v3614 = vrot.slane %v3607, %v3613
        %v3615 = vcombine.low %v3519, %v3583
        %v3617 = vunpack.c.l.s4 1983009808
        %v3618 = vunpack.c.0.s8 %v3617
        %v3619 = vlaneseq
        %v3620 = vshrl.u32 %v3619, 7
        %v3621 = vsub.s32 %v3618, %v3620
        %v3622 = vrot.slane %v3615, %v3621
        %v3623 = vcombine.low %v3614, %v3622
        %v3625 = vunpack.c.l.s4 1934713408
        %v3626 = vunpack.c.0.s8 %v3625
        %v3627 = vlaneseq
        %v3628 = vshrl.u32 %v3627, 7
        %v3629 = vsub.s32 %v3626, %v3628
        %v3630 = vrot.slane %v3623, %v3629
        %v3631 = vcombine.high %v3630, 0
        %v3632 = vcombine.low %v3503, %v3567
        %v3634 = vunpack.c.l.s4 1983009808
        %v3635 = vunpack.c.0.s8 %v3634
        %v3636 = vlaneseq
        %v3637 = vshrl.u32 %v3636, 7
        %v3638 = vsub.s32 %v3635, %v3637
        %v3639 = vrot.slane %v3632, %v3638
        %v3640 = vcombine.low %v3535, %v3599
        %v3642 = vunpack.c.l.s4 1983009808
        %v3643 = vunpack.c.0.s8 %v3642
        %v3644 = vlaneseq
        %v3645 = vshrl.u32 %v3644, 7
        %v3646 = vsub.s32 %v3643, %v3645
        %v3647 = vrot.slane %v3640, %v3646
        %v3648 = vcombine.low %v3639, %v3647
        %v3650 = vunpack.c.l.s4 1934713408
        %v3651 = vunpack.c.0.s8 %v3650
        %v3652 = vlaneseq
        %v3653 = vshrl.u32 %v3652, 7
        %v3654 = vsub.s32 %v3651, %v3653
        %v3655 = vrot.slane %v3648, %v3654
        %v3656 = vcombine.high %v3655, 0
        %v3659 = vpack.i.b16 %v3655, %v3630
        %v3660 = vshrl.u32 %v3630, 16
        %v3661 = vshrl.u32 %v3655, 16
        %v3662 = vpack.i.b16 %v3661, %v3660
        %v3665 = vpack.i.b16 %v3656, %v3631
        %v3666 = vshrl.u32 %v3631, 16
        %v3667 = vshrl.u32 %v3656, 16
        %v3668 = vpack.i.b16 %v3667, %v3666
        %v3670 = vsel %vm1448, %v3241, 0
        %v3673 = vsel %vm1452, %v3659, 0
        %3675 = vmatprep.subr.bf16.mxu0 0
        %3676 = vmatpush1.bf16.msra.mxu0 0
        %3677 = vmatprep.subr.bf16.mxu0 0
        %3678 = vmatpush1.bf16.msra.mxu0 0
        %3679 = vmatprep.subr.bf16.mxu0 0
        %3680 = vmatpush1.bf16.msra.mxu0 0
        %3681 = vmatprep.subr.bf16.mxu0 0
        %3682 = vmatpush1.bf16.msra.mxu0 0
        %3683 = vmatprep.subr.bf16.mxu0 0
        %3684 = vmatpush1.bf16.msra.mxu0 0
        %3685 = vmatprep.subr.bf16.mxu0 0
        %3686 = vmatpush1.bf16.msra.mxu0 0
        %3687 = vmatprep.subr.bf16.mxu0 0
        %3688 = vmatpush1.bf16.msra.mxu0 0
        %3689 = vmatprep.subr.bf16.mxu0 0
        %3690 = vmatpush1.bf16.msra.mxu0 %v3673
        %3691 = vmatprep.subr.bf16.mxu0 0
        %3692 = vmatpush2.bf16.msra.mxu0 0
        %3693 = vmatprep.subr.bf16.mxu0 0
        %3694 = vmatpush2.bf16.msra.mxu0 0
        %3695 = vmatprep.subr.bf16.mxu0 0
        %3696 = vmatpush2.bf16.msra.mxu0 0
        %3697 = vmatprep.subr.bf16.mxu0 0
        %3698 = vmatpush2.bf16.msra.mxu0 0
        %3699 = vmatprep.subr.bf16.mxu0 0
        %3700 = vmatpush2.bf16.msra.mxu0 0
        %3701 = vmatprep.subr.bf16.mxu0 0
        %3702 = vmatpush2.bf16.msra.mxu0 0
        %3703 = vmatprep.subr.bf16.mxu0 0
        %3704 = vmatpush2.bf16.msra.mxu0 0
        %3705 = vmatprep.subr.bf16.mxu0 0
        %3706 = vmatpush2.bf16.msra.mxu0 0
        %3707 = vmatprep.mubr.bf16.mxu0 0
        %3708 = vmatmul.mubr.bf16.gmra.mxu0 %v3670
        %v3709 = vpop.f32.mrf.mxu0
        %v3710 = vadd.f32 %v966, %v3709
        %v3711 = vpop.f32.mrf.mxu0
        %v3712 = vpop.f32.mrf.mxu0
        %v3713 = vpop.f32.mrf.mxu0
        %3714 = vdwg.mxu0
        %v3716 = vsel %vm1448, %v3244, 0
        %v3719 = vsel %vm1452, %v3662, 0
        %3721 = vmatprep.subr.bf16.mxu0 0
        %3722 = vmatpush1.bf16.msra.mxu0 0
        %3723 = vmatprep.subr.bf16.mxu0 0
        %3724 = vmatpush1.bf16.msra.mxu0 0
        %3725 = vmatprep.subr.bf16.mxu0 0
        %3726 = vmatpush1.bf16.msra.mxu0 0
        %3727 = vmatprep.subr.bf16.mxu0 0
        %3728 = vmatpush1.bf16.msra.mxu0 0
        %3729 = vmatprep.subr.bf16.mxu0 0
        %3730 = vmatpush1.bf16.msra.mxu0 0
        %3731 = vmatprep.subr.bf16.mxu0 0
        %3732 = vmatpush1.bf16.msra.mxu0 0
        %3733 = vmatprep.subr.bf16.mxu0 0
        %3734 = vmatpush1.bf16.msra.mxu0 0
        %3735 = vmatprep.subr.bf16.mxu0 0
        %3736 = vmatpush1.bf16.msra.mxu0 %v3719
        %3737 = vmatprep.subr.bf16.mxu0 0
        %3738 = vmatpush2.bf16.msra.mxu0 0
        %3739 = vmatprep.subr.bf16.mxu0 0
        %3740 = vmatpush2.bf16.msra.mxu0 0
        %3741 = vmatprep.subr.bf16.mxu0 0
        %3742 = vmatpush2.bf16.msra.mxu0 0
        %3743 = vmatprep.subr.bf16.mxu0 0
        %3744 = vmatpush2.bf16.msra.mxu0 0
        %3745 = vmatprep.subr.bf16.mxu0 0
        %3746 = vmatpush2.bf16.msra.mxu0 0
        %3747 = vmatprep.subr.bf16.mxu0 0
        %3748 = vmatpush2.bf16.msra.mxu0 0
        %3749 = vmatprep.subr.bf16.mxu0 0
        %3750 = vmatpush2.bf16.msra.mxu0 0
        %3751 = vmatprep.subr.bf16.mxu0 0
        %3752 = vmatpush2.bf16.msra.mxu0 0
        %3753 = vmatprep.mubr.bf16.mxu0 0
        %3754 = vmatmul.mubr.bf16.gmra.mxu0 %v3716
        %v3755 = vpop.f32.mrf.mxu0
        %v3756 = vadd.f32 %v966, %v3755
        %v3757 = vpop.f32.mrf.mxu0
        %v3758 = vpop.f32.mrf.mxu0
        %v3759 = vpop.f32.mrf.mxu0
        %3760 = vdwg.mxu0
        %v3762 = vsel %vm1448, %v3247, 0
        %v3765 = vsel %vm1452, %v3665, 0
        %3767 = vmatprep.subr.bf16.mxu0 0
        %3768 = vmatpush1.bf16.msra.mxu0 0
        %3769 = vmatprep.subr.bf16.mxu0 0
        %3770 = vmatpush1.bf16.msra.mxu0 0
        %3771 = vmatprep.subr.bf16.mxu0 0
        %3772 = vmatpush1.bf16.msra.mxu0 0
        %3773 = vmatprep.subr.bf16.mxu0 0
        %3774 = vmatpush1.bf16.msra.mxu0 0
        %3775 = vmatprep.subr.bf16.mxu0 0
        %3776 = vmatpush1.bf16.msra.mxu0 0
        %3777 = vmatprep.subr.bf16.mxu0 0
        %3778 = vmatpush1.bf16.msra.mxu0 0
        %3779 = vmatprep.subr.bf16.mxu0 0
        %3780 = vmatpush1.bf16.msra.mxu0 0
        %3781 = vmatprep.subr.bf16.mxu0 0
        %3782 = vmatpush1.bf16.msra.mxu0 %v3765
        %3783 = vmatprep.subr.bf16.mxu0 0
        %3784 = vmatpush2.bf16.msra.mxu0 0
        %3785 = vmatprep.subr.bf16.mxu0 0
        %3786 = vmatpush2.bf16.msra.mxu0 0
        %3787 = vmatprep.subr.bf16.mxu0 0
        %3788 = vmatpush2.bf16.msra.mxu0 0
        %3789 = vmatprep.subr.bf16.mxu0 0
        %3790 = vmatpush2.bf16.msra.mxu0 0
        %3791 = vmatprep.subr.bf16.mxu0 0
        %3792 = vmatpush2.bf16.msra.mxu0 0
        %3793 = vmatprep.subr.bf16.mxu0 0
        %3794 = vmatpush2.bf16.msra.mxu0 0
        %3795 = vmatprep.subr.bf16.mxu0 0
        %3796 = vmatpush2.bf16.msra.mxu0 0
        %3797 = vmatprep.subr.bf16.mxu0 0
        %3798 = vmatpush2.bf16.msra.mxu0 0
        %3799 = vmatprep.mubr.bf16.mxu0 0
        %3800 = vmatmul.mubr.bf16.gmra.mxu0 %v3762
        %v3801 = vpop.f32.mrf.mxu0
        %v3802 = vadd.f32 %v966, %v3801
        %v3803 = vpop.f32.mrf.mxu0
        %v3804 = vpop.f32.mrf.mxu0
        %v3805 = vpop.f32.mrf.mxu0
        %3806 = vdwg.mxu0
        %v3808 = vsel %vm1448, %v3250, 0
        %v3811 = vsel %vm1452, %v3668, 0
        %3813 = vmatprep.subr.bf16.mxu0 0
        %3814 = vmatpush1.bf16.msra.mxu0 0
        %3815 = vmatprep.subr.bf16.mxu0 0
        %3816 = vmatpush1.bf16.msra.mxu0 0
        %3817 = vmatprep.subr.bf16.mxu0 0
        %3818 = vmatpush1.bf16.msra.mxu0 0
        %3819 = vmatprep.subr.bf16.mxu0 0
        %3820 = vmatpush1.bf16.msra.mxu0 0
        %3821 = vmatprep.subr.bf16.mxu0 0
        %3822 = vmatpush1.bf16.msra.mxu0 0
        %3823 = vmatprep.subr.bf16.mxu0 0
        %3824 = vmatpush1.bf16.msra.mxu0 0
        %3825 = vmatprep.subr.bf16.mxu0 0
        %3826 = vmatpush1.bf16.msra.mxu0 0
        %3827 = vmatprep.subr.bf16.mxu0 0
        %3828 = vmatpush1.bf16.msra.mxu0 %v3811
        %3829 = vmatprep.subr.bf16.mxu0 0
        %3830 = vmatpush2.bf16.msra.mxu0 0
        %3831 = vmatprep.subr.bf16.mxu0 0
        %3832 = vmatpush2.bf16.msra.mxu0 0
        %3833 = vmatprep.subr.bf16.mxu0 0
        %3834 = vmatpush2.bf16.msra.mxu0 0
        %3835 = vmatprep.subr.bf16.mxu0 0
        %3836 = vmatpush2.bf16.msra.mxu0 0
        %3837 = vmatprep.subr.bf16.mxu0 0
        %3838 = vmatpush2.bf16.msra.mxu0 0
        %3839 = vmatprep.subr.bf16.mxu0 0
        %3840 = vmatpush2.bf16.msra.mxu0 0
        %3841 = vmatprep.subr.bf16.mxu0 0
        %3842 = vmatpush2.bf16.msra.mxu0 0
        %3843 = vmatprep.subr.bf16.mxu0 0
        %3844 = vmatpush2.bf16.msra.mxu0 0
        %3845 = vmatprep.mubr.bf16.mxu0 0
        %3846 = vmatmul.mubr.bf16.gmra.mxu0 %v3808
        %v3847 = vpop.f32.mrf.mxu0
        %v3848 = vadd.f32 %v966, %v3847
        %v3849 = vpop.f32.mrf.mxu0
        %v3850 = vpop.f32.mrf.mxu0
        %v3851 = vpop.f32.mrf.mxu0
        %3852 = vdwg.mxu0
        %v3853 = vsel %vm1448, %v3710, -inf
        %3854 = vmax.xlane.f32.xlu0 %v3853
        %v3855 = vpop.xlane.xlu0 %3854
        %v3856 = vsel %vm1448, %v3756, -inf
        %3857 = vmax.xlane.f32.xlu0 %v3856
        %v3858 = vpop.xlane.xlu0 %3857
        %v3859 = vsel %vm1448, %v3802, -inf
        %3860 = vmax.xlane.f32.xlu0 %v3859
        %v3861 = vpop.xlane.xlu0 %3860
        %v3862 = vsel %vm1448, %v3848, -inf
        %3863 = vmax.xlane.f32.xlu0 %v3862
        %v3864 = vpop.xlane.xlu0 %3863
        %v3865 = vsub.f32 %v3710, %v3855
        %v3866 = vsub.f32 %v3756, %v3858
        %v3867 = vsub.f32 %v3802, %v3861
        %v3868 = vsub.f32 %v3848, %v3864
        %v3869 = vmul.f32 %v3865, 1.442695
        %v3870 = vpow.pop %v3869
        %v3871 = vmul.f32 %v3866, 1.442695
        %v3872 = vpow.pop %v3871
        %v3873 = vmul.f32 %v3867, 1.442695
        %v3874 = vpow.pop %v3873
        %v3875 = vmul.f32 %v3868, 1.442695
        %v3876 = vpow.pop %v3875
        %v3877 = vsel %vm1448, %v3870, 0.0
        %3878 = vadd.xlane.f32.xlu0 %v3877
        %v3879 = vpop.xlane.xlu0 %3878
        %v3880 = vsel %vm1448, %v3872, 0.0
        %3881 = vadd.xlane.f32.xlu0 %v3880
        %v3882 = vpop.xlane.xlu0 %3881
        %v3883 = vsel %vm1448, %v3874, 0.0
        %3884 = vadd.xlane.f32.xlu0 %v3883
        %v3885 = vpop.xlane.xlu0 %3884
        %v3886 = vsel %vm1448, %v3876, 0.0
        %3887 = vadd.xlane.f32.xlu0 %v3886
        %v3888 = vpop.xlane.xlu0 %3887
        %v3889 = vrcp.pop %v3879
        %v3890 = vrcp.pop %v3882
        %v3891 = vrcp.pop %v3885
        %v3892 = vrcp.pop %v3888
        %v3893 = vmul.f32 %v3870, %v3889
        %v3894 = vmul.f32 %v3872, %v3890
        %v3895 = vmul.f32 %v3874, %v3891
        %v3896 = vmul.f32 %v3876, %v3892
        %v3897 = vpack.c.bf16 %v3893, %v3893
        %v3898 = vpack.c.bf16 %v3894, %v3894
        %v3899 = vpack.c.bf16 %v3895, %v3895
        %v3900 = vpack.c.bf16 %v3896, %v3896
        %3901 = vxpose.xlu0.c.b16.start [1/8] %v3181, 128
        %3902 = vxpose.xlu0.c.b16.cont [2/8] 0, 128
        %3903 = vxpose.xlu0.c.b16.cont [3/8] 0, 128
        %3904 = vxpose.xlu0.c.b16.cont [4/8] 0, 128
        %3905 = vxpose.xlu0.c.b16.cont [5/8] 0, 128
        %3906 = vxpose.xlu0.c.b16.cont [6/8] 0, 128
        %3907 = vxpose.xlu0.c.b16.cont [7/8] 0, 128
        %3908 = vxpose.xlu0.c.b16.end [8/8] 0, 128
        %v3909 = vpop.trf.xlu0
        %v3910 = vpop.trf.xlu0
        %v3911 = vpop.trf.xlu0
        %v3912 = vpop.trf.xlu0
        %v3913 = vpop.trf.xlu0
        %v3914 = vpop.trf.xlu0
        %v3915 = vpop.trf.xlu0
        %v3916 = vpop.trf.xlu0
        %3917 = vxpose.xlu0.c.b16.start [1/8] %v3182, 128
        %3918 = vxpose.xlu0.c.b16.cont [2/8] 0, 128
        %3919 = vxpose.xlu0.c.b16.cont [3/8] 0, 128
        %3920 = vxpose.xlu0.c.b16.cont [4/8] 0, 128
        %3921 = vxpose.xlu0.c.b16.cont [5/8] 0, 128
        %3922 = vxpose.xlu0.c.b16.cont [6/8] 0, 128
        %3923 = vxpose.xlu0.c.b16.cont [7/8] 0, 128
        %3924 = vxpose.xlu0.c.b16.end [8/8] 0, 128
        %v3925 = vpop.trf.xlu0
        %v3926 = vpop.trf.xlu0
        %v3927 = vpop.trf.xlu0
        %v3928 = vpop.trf.xlu0
        %v3929 = vpop.trf.xlu0
        %v3930 = vpop.trf.xlu0
        %v3931 = vpop.trf.xlu0
        %v3932 = vpop.trf.xlu0
        %3933 = vxpose.xlu0.c.b16.start [1/8] %v3183, 128
        %3934 = vxpose.xlu0.c.b16.cont [2/8] 0, 128
        %3935 = vxpose.xlu0.c.b16.cont [3/8] 0, 128
        %3936 = vxpose.xlu0.c.b16.cont [4/8] 0, 128
        %3937 = vxpose.xlu0.c.b16.cont [5/8] 0, 128
        %3938 = vxpose.xlu0.c.b16.cont [6/8] 0, 128
        %3939 = vxpose.xlu0.c.b16.cont [7/8] 0, 128
        %3940 = vxpose.xlu0.c.b16.end [8/8] 0, 128
        %v3941 = vpop.trf.xlu0
        %v3942 = vpop.trf.xlu0
        %v3943 = vpop.trf.xlu0
        %v3944 = vpop.trf.xlu0
        %v3945 = vpop.trf.xlu0
        %v3946 = vpop.trf.xlu0
        %v3947 = vpop.trf.xlu0
        %v3948 = vpop.trf.xlu0
        %3949 = vxpose.xlu0.c.b16.start [1/8] %v3184, 128
        %3950 = vxpose.xlu0.c.b16.cont [2/8] 0, 128
        %3951 = vxpose.xlu0.c.b16.cont [3/8] 0, 128
        %3952 = vxpose.xlu0.c.b16.cont [4/8] 0, 128
        %3953 = vxpose.xlu0.c.b16.cont [5/8] 0, 128
        %3954 = vxpose.xlu0.c.b16.cont [6/8] 0, 128
        %3955 = vxpose.xlu0.c.b16.cont [7/8] 0, 128
        %3956 = vxpose.xlu0.c.b16.end [8/8] 0, 128
        %v3957 = vpop.trf.xlu0
        %v3958 = vpop.trf.xlu0
        %v3959 = vpop.trf.xlu0
        %v3960 = vpop.trf.xlu0
        %v3961 = vpop.trf.xlu0
        %v3962 = vpop.trf.xlu0
        %v3963 = vpop.trf.xlu0
        %v3964 = vpop.trf.xlu0
        %3965 = vxpose.xlu0.c.b16.start [1/8] %v3185, 128
        %3966 = vxpose.xlu0.c.b16.cont [2/8] 0, 128
        %3967 = vxpose.xlu0.c.b16.cont [3/8] 0, 128
        %3968 = vxpose.xlu0.c.b16.cont [4/8] 0, 128
        %3969 = vxpose.xlu0.c.b16.cont [5/8] 0, 128
        %3970 = vxpose.xlu0.c.b16.cont [6/8] 0, 128
        %3971 = vxpose.xlu0.c.b16.cont [7/8] 0, 128
        %3972 = vxpose.xlu0.c.b16.end [8/8] 0, 128
        %v3973 = vpop.trf.xlu0
        %v3974 = vpop.trf.xlu0
        %v3975 = vpop.trf.xlu0
        %v3976 = vpop.trf.xlu0
        %v3977 = vpop.trf.xlu0
        %v3978 = vpop.trf.xlu0
        %v3979 = vpop.trf.xlu0
        %v3980 = vpop.trf.xlu0
        %3981 = vxpose.xlu0.c.b16.start [1/8] %v3186, 128
        %3982 = vxpose.xlu0.c.b16.cont [2/8] 0, 128
        %3983 = vxpose.xlu0.c.b16.cont [3/8] 0, 128
        %3984 = vxpose.xlu0.c.b16.cont [4/8] 0, 128
        %3985 = vxpose.xlu0.c.b16.cont [5/8] 0, 128
        %3986 = vxpose.xlu0.c.b16.cont [6/8] 0, 128
        %3987 = vxpose.xlu0.c.b16.cont [7/8] 0, 128
        %3988 = vxpose.xlu0.c.b16.end [8/8] 0, 128
        %v3989 = vpop.trf.xlu0
        %v3990 = vpop.trf.xlu0
        %v3991 = vpop.trf.xlu0
        %v3992 = vpop.trf.xlu0
        %v3993 = vpop.trf.xlu0
        %v3994 = vpop.trf.xlu0
        %v3995 = vpop.trf.xlu0
        %v3996 = vpop.trf.xlu0
        %3997 = vxpose.xlu0.c.b16.start [1/8] %v3187, 128
        %3998 = vxpose.xlu0.c.b16.cont [2/8] 0, 128
        %3999 = vxpose.xlu0.c.b16.cont [3/8] 0, 128
        %4000 = vxpose.xlu0.c.b16.cont [4/8] 0, 128
        %4001 = vxpose.xlu0.c.b16.cont [5/8] 0, 128
        %4002 = vxpose.xlu0.c.b16.cont [6/8] 0, 128
        %4003 = vxpose.xlu0.c.b16.cont [7/8] 0, 128
        %4004 = vxpose.xlu0.c.b16.end [8/8] 0, 128
        %v4005 = vpop.trf.xlu0
        %v4006 = vpop.trf.xlu0
        %v4007 = vpop.trf.xlu0
        %v4008 = vpop.trf.xlu0
        %v4009 = vpop.trf.xlu0
        %v4010 = vpop.trf.xlu0
        %v4011 = vpop.trf.xlu0
        %v4012 = vpop.trf.xlu0
        %4013 = vxpose.xlu0.c.b16.start [1/8] %v3188, 128
        %4014 = vxpose.xlu0.c.b16.cont [2/8] 0, 128
        %4015 = vxpose.xlu0.c.b16.cont [3/8] 0, 128
        %4016 = vxpose.xlu0.c.b16.cont [4/8] 0, 128
        %4017 = vxpose.xlu0.c.b16.cont [5/8] 0, 128
        %4018 = vxpose.xlu0.c.b16.cont [6/8] 0, 128
        %4019 = vxpose.xlu0.c.b16.cont [7/8] 0, 128
        %4020 = vxpose.xlu0.c.b16.end [8/8] 0, 128
        %v4021 = vpop.trf.xlu0
        %v4022 = vpop.trf.xlu0
        %v4023 = vpop.trf.xlu0
        %v4024 = vpop.trf.xlu0
        %v4025 = vpop.trf.xlu0
        %v4026 = vpop.trf.xlu0
        %v4027 = vpop.trf.xlu0
        %v4028 = vpop.trf.xlu0
        %v4029 = vcombine.low %v3909, %v3973
        %v4031 = vunpack.c.l.s4 1983009808
        %v4032 = vunpack.c.0.s8 %v4031
        %v4033 = vlaneseq
        %v4034 = vshrl.u32 %v4033, 7
        %v4035 = vsub.s32 %v4032, %v4034
        %v4036 = vrot.slane %v4029, %v4035
        %v4037 = vcombine.low %v3941, %v4005
        %v4039 = vunpack.c.l.s4 1983009808
        %v4040 = vunpack.c.0.s8 %v4039
        %v4041 = vlaneseq
        %v4042 = vshrl.u32 %v4041, 7
        %v4043 = vsub.s32 %v4040, %v4042
        %v4044 = vrot.slane %v4037, %v4043
        %v4045 = vcombine.low %v4036, %v4044
        %v4046 = vcombine.high %v4036, %v4044
        %v4048 = vunpack.c.l.s4 1934713408
        %v4049 = vunpack.c.0.s8 %v4048
        %v4050 = vlaneseq
        %v4051 = vshrl.u32 %v4050, 7
        %v4052 = vsub.s32 %v4049, %v4051
        %v4053 = vrot.slane %v4045, %v4052
        %v4055 = vunpack.c.l.s4 1934713408
        %v4056 = vunpack.c.0.s8 %v4055
        %v4057 = vlaneseq
        %v4058 = vshrl.u32 %v4057, 7
        %v4059 = vsub.s32 %v4056, %v4058
        %v4060 = vrot.slane %v4046, %v4059
        %v4061 = vcombine.high %v4053, 0
        %v4062 = vcombine.high %v4060, 0
        %v4063 = vcombine.low %v3925, %v3989
        %v4065 = vunpack.c.l.s4 1983009808
        %v4066 = vunpack.c.0.s8 %v4065
        %v4067 = vlaneseq
        %v4068 = vshrl.u32 %v4067, 7
        %v4069 = vsub.s32 %v4066, %v4068
        %v4070 = vrot.slane %v4063, %v4069
        %v4071 = vcombine.low %v3957, %v4021
        %v4073 = vunpack.c.l.s4 1983009808
        %v4074 = vunpack.c.0.s8 %v4073
        %v4075 = vlaneseq
        %v4076 = vshrl.u32 %v4075, 7
        %v4077 = vsub.s32 %v4074, %v4076
        %v4078 = vrot.slane %v4071, %v4077
        %v4079 = vcombine.low %v4070, %v4078
        %v4080 = vcombine.high %v4070, %v4078
        %v4082 = vunpack.c.l.s4 1934713408
        %v4083 = vunpack.c.0.s8 %v4082
        %v4084 = vlaneseq
        %v4085 = vshrl.u32 %v4084, 7
        %v4086 = vsub.s32 %v4083, %v4085
        %v4087 = vrot.slane %v4079, %v4086
        %v4089 = vunpack.c.l.s4 1934713408
        %v4090 = vunpack.c.0.s8 %v4089
        %v4091 = vlaneseq
        %v4092 = vshrl.u32 %v4091, 7
        %v4093 = vsub.s32 %v4090, %v4092
        %v4094 = vrot.slane %v4080, %v4093
        %v4095 = vcombine.high %v4087, 0
        %v4096 = vcombine.high %v4094, 0
        %v4099 = vpack.i.b16 %v4087, %v4053
        %v4101 = vshrl.u32 %v4053, 16
        %v4102 = vshrl.u32 %v4087, 16
        %v4103 = vpack.i.b16 %v4102, %v4101
        %v4107 = vpack.i.b16 %v4095, %v4061
        %v4109 = vshrl.u32 %v4061, 16
        %v4110 = vshrl.u32 %v4095, 16
        %v4111 = vpack.i.b16 %v4110, %v4109
        %v4115 = vpack.i.b16 %v4094, %v4060
        %v4117 = vshrl.u32 %v4060, 16
        %v4118 = vshrl.u32 %v4094, 16
        %v4119 = vpack.i.b16 %v4118, %v4117
        %v4123 = vpack.i.b16 %v4096, %v4062
        %v4125 = vshrl.u32 %v4062, 16
        %v4126 = vshrl.u32 %v4096, 16
        %v4127 = vpack.i.b16 %v4126, %v4125
        %4129 = vxpose.xlu0.c.b16.start [1/8] %v4099, 128
        %4130 = vxpose.xlu0.c.b16.cont [2/8] 0, 128
        %4131 = vxpose.xlu0.c.b16.cont [3/8] 0, 128
        %4132 = vxpose.xlu0.c.b16.cont [4/8] 0, 128
        %4133 = vxpose.xlu0.c.b16.cont [5/8] 0, 128
        %4134 = vxpose.xlu0.c.b16.cont [6/8] 0, 128
        %4135 = vxpose.xlu0.c.b16.cont [7/8] 0, 128
        %4136 = vxpose.xlu0.c.b16.end [8/8] 0, 128
        %v4137 = vpop.trf.xlu0
        %v4138 = vpop.trf.xlu0
        %v4139 = vpop.trf.xlu0
        %v4140 = vpop.trf.xlu0
        %v4141 = vpop.trf.xlu0
        %v4142 = vpop.trf.xlu0
        %v4143 = vpop.trf.xlu0
        %v4144 = vpop.trf.xlu0
        %4145 = vxpose.xlu0.c.b16.start [1/8] %v4103, 128
        %4146 = vxpose.xlu0.c.b16.cont [2/8] 0, 128
        %4147 = vxpose.xlu0.c.b16.cont [3/8] 0, 128
        %4148 = vxpose.xlu0.c.b16.cont [4/8] 0, 128
        %4149 = vxpose.xlu0.c.b16.cont [5/8] 0, 128
        %4150 = vxpose.xlu0.c.b16.cont [6/8] 0, 128
        %4151 = vxpose.xlu0.c.b16.cont [7/8] 0, 128
        %4152 = vxpose.xlu0.c.b16.end [8/8] 0, 128
        %v4153 = vpop.trf.xlu0
        %v4154 = vpop.trf.xlu0
        %v4155 = vpop.trf.xlu0
        %v4156 = vpop.trf.xlu0
        %v4157 = vpop.trf.xlu0
        %v4158 = vpop.trf.xlu0
        %v4159 = vpop.trf.xlu0
        %v4160 = vpop.trf.xlu0
        %4161 = vxpose.xlu0.c.b16.start [1/8] %v4107, 128
        %4162 = vxpose.xlu0.c.b16.cont [2/8] 0, 128
        %4163 = vxpose.xlu0.c.b16.cont [3/8] 0, 128
        %4164 = vxpose.xlu0.c.b16.cont [4/8] 0, 128
        %4165 = vxpose.xlu0.c.b16.cont [5/8] 0, 128
        %4166 = vxpose.xlu0.c.b16.cont [6/8] 0, 128
        %4167 = vxpose.xlu0.c.b16.cont [7/8] 0, 128
        %4168 = vxpose.xlu0.c.b16.end [8/8] 0, 128
        %v4169 = vpop.trf.xlu0
        %v4170 = vpop.trf.xlu0
        %v4171 = vpop.trf.xlu0
        %v4172 = vpop.trf.xlu0
        %v4173 = vpop.trf.xlu0
        %v4174 = vpop.trf.xlu0
        %v4175 = vpop.trf.xlu0
        %v4176 = vpop.trf.xlu0
        %4177 = vxpose.xlu0.c.b16.start [1/8] %v4111, 128
        %4178 = vxpose.xlu0.c.b16.cont [2/8] 0, 128
        %4179 = vxpose.xlu0.c.b16.cont [3/8] 0, 128
        %4180 = vxpose.xlu0.c.b16.cont [4/8] 0, 128
        %4181 = vxpose.xlu0.c.b16.cont [5/8] 0, 128
        %4182 = vxpose.xlu0.c.b16.cont [6/8] 0, 128
        %4183 = vxpose.xlu0.c.b16.cont [7/8] 0, 128
        %4184 = vxpose.xlu0.c.b16.end [8/8] 0, 128
        %v4185 = vpop.trf.xlu0
        %v4186 = vpop.trf.xlu0
        %v4187 = vpop.trf.xlu0
        %v4188 = vpop.trf.xlu0
        %v4189 = vpop.trf.xlu0
        %v4190 = vpop.trf.xlu0
        %v4191 = vpop.trf.xlu0
        %v4192 = vpop.trf.xlu0
        %4193 = vxpose.xlu0.c.b16.start [1/8] %v4115, 128
        %4194 = vxpose.xlu0.c.b16.cont [2/8] 0, 128
        %4195 = vxpose.xlu0.c.b16.cont [3/8] 0, 128
        %4196 = vxpose.xlu0.c.b16.cont [4/8] 0, 128
        %4197 = vxpose.xlu0.c.b16.cont [5/8] 0, 128
        %4198 = vxpose.xlu0.c.b16.cont [6/8] 0, 128
        %4199 = vxpose.xlu0.c.b16.cont [7/8] 0, 128
        %4200 = vxpose.xlu0.c.b16.end [8/8] 0, 128
        %v4201 = vpop.trf.xlu0
        %v4202 = vpop.trf.xlu0
        %v4203 = vpop.trf.xlu0
        %v4204 = vpop.trf.xlu0
        %v4205 = vpop.trf.xlu0
        %v4206 = vpop.trf.xlu0
        %v4207 = vpop.trf.xlu0
        %v4208 = vpop.trf.xlu0
        %4209 = vxpose.xlu0.c.b16.start [1/8] %v4119, 128
        %4210 = vxpose.xlu0.c.b16.cont [2/8] 0, 128
        %4211 = vxpose.xlu0.c.b16.cont [3/8] 0, 128
        %4212 = vxpose.xlu0.c.b16.cont [4/8] 0, 128
        %4213 = vxpose.xlu0.c.b16.cont [5/8] 0, 128
        %4214 = vxpose.xlu0.c.b16.cont [6/8] 0, 128
        %4215 = vxpose.xlu0.c.b16.cont [7/8] 0, 128
        %4216 = vxpose.xlu0.c.b16.end [8/8] 0, 128
        %v4217 = vpop.trf.xlu0
        %v4218 = vpop.trf.xlu0
        %v4219 = vpop.trf.xlu0
        %v4220 = vpop.trf.xlu0
        %v4221 = vpop.trf.xlu0
        %v4222 = vpop.trf.xlu0
        %v4223 = vpop.trf.xlu0
        %v4224 = vpop.trf.xlu0
        %4225 = vxpose.xlu0.c.b16.start [1/8] %v4123, 128
        %4226 = vxpose.xlu0.c.b16.cont [2/8] 0, 128
        %4227 = vxpose.xlu0.c.b16.cont [3/8] 0, 128
        %4228 = vxpose.xlu0.c.b16.cont [4/8] 0, 128
        %4229 = vxpose.xlu0.c.b16.cont [5/8] 0, 128
        %4230 = vxpose.xlu0.c.b16.cont [6/8] 0, 128
        %4231 = vxpose.xlu0.c.b16.cont [7/8] 0, 128
        %4232 = vxpose.xlu0.c.b16.end [8/8] 0, 128
        %v4233 = vpop.trf.xlu0
        %v4234 = vpop.trf.xlu0
        %v4235 = vpop.trf.xlu0
        %v4236 = vpop.trf.xlu0
        %v4237 = vpop.trf.xlu0
        %v4238 = vpop.trf.xlu0
        %v4239 = vpop.trf.xlu0
        %v4240 = vpop.trf.xlu0
        %4241 = vxpose.xlu0.c.b16.start [1/8] %v4127, 128
        %4242 = vxpose.xlu0.c.b16.cont [2/8] 0, 128
        %4243 = vxpose.xlu0.c.b16.cont [3/8] 0, 128
        %4244 = vxpose.xlu0.c.b16.cont [4/8] 0, 128
        %4245 = vxpose.xlu0.c.b16.cont [5/8] 0, 128
        %4246 = vxpose.xlu0.c.b16.cont [6/8] 0, 128
        %4247 = vxpose.xlu0.c.b16.cont [7/8] 0, 128
        %4248 = vxpose.xlu0.c.b16.end [8/8] 0, 128
        %v4249 = vpop.trf.xlu0
        %v4250 = vpop.trf.xlu0
        %v4251 = vpop.trf.xlu0
        %v4252 = vpop.trf.xlu0
        %v4253 = vpop.trf.xlu0
        %v4254 = vpop.trf.xlu0
        %v4255 = vpop.trf.xlu0
        %v4256 = vpop.trf.xlu0
        %v4257 = vcombine.low %v4137, %v4201
        %v4259 = vunpack.c.l.s4 1983009808
        %v4260 = vunpack.c.0.s8 %v4259
        %v4261 = vlaneseq
        %v4262 = vshrl.u32 %v4261, 7
        %v4263 = vsub.s32 %v4260, %v4262
        %v4264 = vrot.slane %v4257, %v4263
        %v4265 = vcombine.low %v4169, %v4233
        %v4267 = vunpack.c.l.s4 1983009808
        %v4268 = vunpack.c.0.s8 %v4267
        %v4269 = vlaneseq
        %v4270 = vshrl.u32 %v4269, 7
        %v4271 = vsub.s32 %v4268, %v4270
        %v4272 = vrot.slane %v4265, %v4271
        %v4273 = vcombine.low %v4264, %v4272
        %v4275 = vunpack.c.l.s4 1934713408
        %v4276 = vunpack.c.0.s8 %v4275
        %v4277 = vlaneseq
        %v4278 = vshrl.u32 %v4277, 7
        %v4279 = vsub.s32 %v4276, %v4278
        %v4280 = vrot.slane %v4273, %v4279
        %v4281 = vcombine.high %v4280, 0
        %v4282 = vcombine.low %v4153, %v4217
        %v4284 = vunpack.c.l.s4 1983009808
        %v4285 = vunpack.c.0.s8 %v4284
        %v4286 = vlaneseq
        %v4287 = vshrl.u32 %v4286, 7
        %v4288 = vsub.s32 %v4285, %v4287
        %v4289 = vrot.slane %v4282, %v4288
        %v4290 = vcombine.low %v4185, %v4249
        %v4292 = vunpack.c.l.s4 1983009808
        %v4293 = vunpack.c.0.s8 %v4292
        %v4294 = vlaneseq
        %v4295 = vshrl.u32 %v4294, 7
        %v4296 = vsub.s32 %v4293, %v4295
        %v4297 = vrot.slane %v4290, %v4296
        %v4298 = vcombine.low %v4289, %v4297
        %v4300 = vunpack.c.l.s4 1934713408
        %v4301 = vunpack.c.0.s8 %v4300
        %v4302 = vlaneseq
        %v4303 = vshrl.u32 %v4302, 7
        %v4304 = vsub.s32 %v4301, %v4303
        %v4305 = vrot.slane %v4298, %v4304
        %v4306 = vcombine.high %v4305, 0
        %v4309 = vpack.i.b16 %v4305, %v4280
        %v4310 = vshrl.u32 %v4280, 16
        %v4311 = vshrl.u32 %v4305, 16
        %v4312 = vpack.i.b16 %v4311, %v4310
        %v4315 = vpack.i.b16 %v4306, %v4281
        %v4316 = vshrl.u32 %v4281, 16
        %v4317 = vshrl.u32 %v4306, 16
        %v4318 = vpack.i.b16 %v4317, %v4316
        %v4320 = vsel %vm1448, %v4309, 0
        %v4323 = vsel %vm1448, %v3897, 0
        %4325 = vmatprep.subr.bf16.mxu0 0
        %4326 = vmatpush1.bf16.xpose.msra.mxu0 0
        %4327 = vmatprep.subr.bf16.mxu0 0
        %4328 = vmatpush1.bf16.xpose.msra.mxu0 0
        %4329 = vmatprep.subr.bf16.mxu0 0
        %4330 = vmatpush1.bf16.xpose.msra.mxu0 0
        %4331 = vmatprep.subr.bf16.mxu0 0
        %4332 = vmatpush1.bf16.xpose.msra.mxu0 0
        %4333 = vmatprep.subr.bf16.mxu0 0
        %4334 = vmatpush1.bf16.xpose.msra.mxu0 0
        %4335 = vmatprep.subr.bf16.mxu0 0
        %4336 = vmatpush1.bf16.xpose.msra.mxu0 0
        %4337 = vmatprep.subr.bf16.mxu0 0
        %4338 = vmatpush1.bf16.xpose.msra.mxu0 0
        %4339 = vmatprep.subr.bf16.mxu0 0
        %4340 = vmatpush1.bf16.xpose.msra.mxu0 %v4323
        %4341 = vmatprep.subr.bf16.mxu0 0
        %4342 = vmatpush2.bf16.xpose.msra.mxu0 0
        %4343 = vmatprep.subr.bf16.mxu0 0
        %4344 = vmatpush2.bf16.xpose.msra.mxu0 0
        %4345 = vmatprep.subr.bf16.mxu0 0
        %4346 = vmatpush2.bf16.xpose.msra.mxu0 0
        %4347 = vmatprep.subr.bf16.mxu0 0
        %4348 = vmatpush2.bf16.xpose.msra.mxu0 0
        %4349 = vmatprep.subr.bf16.mxu0 0
        %4350 = vmatpush2.bf16.xpose.msra.mxu0 0
        %4351 = vmatprep.subr.bf16.mxu0 0
        %4352 = vmatpush2.bf16.xpose.msra.mxu0 0
        %4353 = vmatprep.subr.bf16.mxu0 0
        %4354 = vmatpush2.bf16.xpose.msra.mxu0 0
        %4355 = vmatprep.subr.bf16.mxu0 0
        %4356 = vmatpush2.bf16.xpose.msra.mxu0 0
        %4357 = vmatprep.mubr.bf16.mxu0 0
        %4358 = vmatmul.mubr.bf16.gmra.mxu0 %v4320
        %v4359 = vpop.f32.mrf.mxu0
        %v4360 = vadd.f32 0.0, %v4359
        %v4361 = vpop.f32.mrf.mxu0
        %v4362 = vpop.f32.mrf.mxu0
        %v4363 = vpop.f32.mrf.mxu0
        %4364 = vdwg.mxu0
        %v4366 = vsel %vm1448, %v4312, 0
        %v4369 = vsel %vm1448, %v3898, 0
        %4371 = vmatprep.subr.bf16.mxu0 0
        %4372 = vmatpush1.bf16.xpose.msra.mxu0 0
        %4373 = vmatprep.subr.bf16.mxu0 0
        %4374 = vmatpush1.bf16.xpose.msra.mxu0 0
        %4375 = vmatprep.subr.bf16.mxu0 0
        %4376 = vmatpush1.bf16.xpose.msra.mxu0 0
        %4377 = vmatprep.subr.bf16.mxu0 0
        %4378 = vmatpush1.bf16.xpose.msra.mxu0 0
        %4379 = vmatprep.subr.bf16.mxu0 0
        %4380 = vmatpush1.bf16.xpose.msra.mxu0 0
        %4381 = vmatprep.subr.bf16.mxu0 0
        %4382 = vmatpush1.bf16.xpose.msra.mxu0 0
        %4383 = vmatprep.subr.bf16.mxu0 0
        %4384 = vmatpush1.bf16.xpose.msra.mxu0 0
        %4385 = vmatprep.subr.bf16.mxu0 0
        %4386 = vmatpush1.bf16.xpose.msra.mxu0 %v4369
        %4387 = vmatprep.subr.bf16.mxu0 0
        %4388 = vmatpush2.bf16.xpose.msra.mxu0 0
        %4389 = vmatprep.subr.bf16.mxu0 0
        %4390 = vmatpush2.bf16.xpose.msra.mxu0 0
        %4391 = vmatprep.subr.bf16.mxu0 0
        %4392 = vmatpush2.bf16.xpose.msra.mxu0 0
        %4393 = vmatprep.subr.bf16.mxu0 0
        %4394 = vmatpush2.bf16.xpose.msra.mxu0 0
        %4395 = vmatprep.subr.bf16.mxu0 0
        %4396 = vmatpush2.bf16.xpose.msra.mxu0 0
        %4397 = vmatprep.subr.bf16.mxu0 0
        %4398 = vmatpush2.bf16.xpose.msra.mxu0 0
        %4399 = vmatprep.subr.bf16.mxu0 0
        %4400 = vmatpush2.bf16.xpose.msra.mxu0 0
        %4401 = vmatprep.subr.bf16.mxu0 0
        %4402 = vmatpush2.bf16.xpose.msra.mxu0 0
        %4403 = vmatprep.mubr.bf16.mxu0 0
        %4404 = vmatmul.mubr.bf16.gmra.mxu0 %v4366
        %v4405 = vpop.f32.mrf.mxu0
        %v4406 = vadd.f32 0.0, %v4405
        %v4407 = vpop.f32.mrf.mxu0
        %v4408 = vpop.f32.mrf.mxu0
        %v4409 = vpop.f32.mrf.mxu0
        %4410 = vdwg.mxu0
        %v4412 = vsel %vm1448, %v4315, 0
        %v4415 = vsel %vm1448, %v3899, 0
        %4417 = vmatprep.subr.bf16.mxu0 0
        %4418 = vmatpush1.bf16.xpose.msra.mxu0 0
        %4419 = vmatprep.subr.bf16.mxu0 0
        %4420 = vmatpush1.bf16.xpose.msra.mxu0 0
        %4421 = vmatprep.subr.bf16.mxu0 0
        %4422 = vmatpush1.bf16.xpose.msra.mxu0 0
        %4423 = vmatprep.subr.bf16.mxu0 0
        %4424 = vmatpush1.bf16.xpose.msra.mxu0 0
        %4425 = vmatprep.subr.bf16.mxu0 0
        %4426 = vmatpush1.bf16.xpose.msra.mxu0 0
        %4427 = vmatprep.subr.bf16.mxu0 0
        %4428 = vmatpush1.bf16.xpose.msra.mxu0 0
        %4429 = vmatprep.subr.bf16.mxu0 0
        %4430 = vmatpush1.bf16.xpose.msra.mxu0 0
        %4431 = vmatprep.subr.bf16.mxu0 0
        %4432 = vmatpush1.bf16.xpose.msra.mxu0 %v4415
        %4433 = vmatprep.subr.bf16.mxu0 0
        %4434 = vmatpush2.bf16.xpose.msra.mxu0 0
        %4435 = vmatprep.subr.bf16.mxu0 0
        %4436 = vmatpush2.bf16.xpose.msra.mxu0 0
        %4437 = vmatprep.subr.bf16.mxu0 0
        %4438 = vmatpush2.bf16.xpose.msra.mxu0 0
        %4439 = vmatprep.subr.bf16.mxu0 0
        %4440 = vmatpush2.bf16.xpose.msra.mxu0 0
        %4441 = vmatprep.subr.bf16.mxu0 0
        %4442 = vmatpush2.bf16.xpose.msra.mxu0 0
        %4443 = vmatprep.subr.bf16.mxu0 0
        %4444 = vmatpush2.bf16.xpose.msra.mxu0 0
        %4445 = vmatprep.subr.bf16.mxu0 0
        %4446 = vmatpush2.bf16.xpose.msra.mxu0 0
        %4447 = vmatprep.subr.bf16.mxu0 0
        %4448 = vmatpush2.bf16.xpose.msra.mxu0 0
        %4449 = vmatprep.mubr.bf16.mxu0 0
        %4450 = vmatmul.mubr.bf16.gmra.mxu0 %v4412
        %v4451 = vpop.f32.mrf.mxu0
        %v4452 = vadd.f32 0.0, %v4451
        %v4453 = vpop.f32.mrf.mxu0
        %v4454 = vpop.f32.mrf.mxu0
        %v4455 = vpop.f32.mrf.mxu0
        %4456 = vdwg.mxu0
        %v4458 = vsel %vm1448, %v4318, 0
        %v4461 = vsel %vm1448, %v3900, 0
        %4463 = vmatprep.subr.bf16.mxu0 0
        %4464 = vmatpush1.bf16.xpose.msra.mxu0 0
        %4465 = vmatprep.subr.bf16.mxu0 0
        %4466 = vmatpush1.bf16.xpose.msra.mxu0 0
        %4467 = vmatprep.subr.bf16.mxu0 0
        %4468 = vmatpush1.bf16.xpose.msra.mxu0 0
        %4469 = vmatprep.subr.bf16.mxu0 0
        %4470 = vmatpush1.bf16.xpose.msra.mxu0 0
        %4471 = vmatprep.subr.bf16.mxu0 0
        %4472 = vmatpush1.bf16.xpose.msra.mxu0 0
        %4473 = vmatprep.subr.bf16.mxu0 0
        %4474 = vmatpush1.bf16.xpose.msra.mxu0 0
        %4475 = vmatprep.subr.bf16.mxu0 0
        %4476 = vmatpush1.bf16.xpose.msra.mxu0 0
        %4477 = vmatprep.subr.bf16.mxu0 0
        %4478 = vmatpush1.bf16.xpose.msra.mxu0 %v4461
        %4479 = vmatprep.subr.bf16.mxu0 0
        %4480 = vmatpush2.bf16.xpose.msra.mxu0 0
        %4481 = vmatprep.subr.bf16.mxu0 0
        %4482 = vmatpush2.bf16.xpose.msra.mxu0 0
        %4483 = vmatprep.subr.bf16.mxu0 0
        %4484 = vmatpush2.bf16.xpose.msra.mxu0 0
        %4485 = vmatprep.subr.bf16.mxu0 0
        %4486 = vmatpush2.bf16.xpose.msra.mxu0 0
        %4487 = vmatprep.subr.bf16.mxu0 0
        %4488 = vmatpush2.bf16.xpose.msra.mxu0 0
        %4489 = vmatprep.subr.bf16.mxu0 0
        %4490 = vmatpush2.bf16.xpose.msra.mxu0 0
        %4491 = vmatprep.subr.bf16.mxu0 0
        %4492 = vmatpush2.bf16.xpose.msra.mxu0 0
        %4493 = vmatprep.subr.bf16.mxu0 0
        %4494 = vmatpush2.bf16.xpose.msra.mxu0 0
        %4495 = vmatprep.mubr.bf16.mxu0 0
        %4496 = vmatmul.mubr.bf16.gmra.mxu0 %v4458
        %v4497 = vpop.f32.mrf.mxu0
        %v4498 = vadd.f32 0.0, %v4497
        %v4499 = vpop.f32.mrf.mxu0
        %v4500 = vpop.f32.mrf.mxu0
        %v4501 = vpop.f32.mrf.mxu0
        %4502 = vdwg.mxu0
        %4503 = vxpose.xlu0.b32.start [1/16] %v4360, 128
        %4504 = vxpose.xlu0.b32.cont [2/16] 0.0, 128
        %4505 = vxpose.xlu0.b32.cont [3/16] 0.0, 128
        %4506 = vxpose.xlu0.b32.cont [4/16] 0.0, 128
        %4507 = vxpose.xlu0.b32.cont [5/16] 0.0, 128
        %4508 = vxpose.xlu0.b32.cont [6/16] 0.0, 128
        %4509 = vxpose.xlu0.b32.cont [7/16] 0.0, 128
        %4510 = vxpose.xlu0.b32.cont [8/16] 0.0, 128
        %4511 = vxpose.xlu0.b32.cont [9/16] 0.0, 128
        %4512 = vxpose.xlu0.b32.cont [10/16] 0.0, 128
        %4513 = vxpose.xlu0.b32.cont [11/16] 0.0, 128
        %4514 = vxpose.xlu0.b32.cont [12/16] 0.0, 128
        %4515 = vxpose.xlu0.b32.cont [13/16] 0.0, 128
        %4516 = vxpose.xlu0.b32.cont [14/16] 0.0, 128
        %4517 = vxpose.xlu0.b32.cont [15/16] 0.0, 128
        %4518 = vxpose.xlu0.b32.end [16/16] 0.0, 128
        %v4519 = vpop.trf.xlu0
        %v4520 = vpop.trf.xlu0
        %v4521 = vpop.trf.xlu0
        %v4522 = vpop.trf.xlu0
        %v4523 = vpop.trf.xlu0
        %v4524 = vpop.trf.xlu0
        %v4525 = vpop.trf.xlu0
        %v4526 = vpop.trf.xlu0
        %v4527 = vpop.trf.xlu0
        %v4528 = vpop.trf.xlu0
        %v4529 = vpop.trf.xlu0
        %v4530 = vpop.trf.xlu0
        %v4531 = vpop.trf.xlu0
        %v4532 = vpop.trf.xlu0
        %v4533 = vpop.trf.xlu0
        %v4534 = vpop.trf.xlu0
        %4535 = vxpose.xlu0.b32.start [1/16] %v4406, 128
        %4536 = vxpose.xlu0.b32.cont [2/16] 0.0, 128
        %4537 = vxpose.xlu0.b32.cont [3/16] 0.0, 128
        %4538 = vxpose.xlu0.b32.cont [4/16] 0.0, 128
        %4539 = vxpose.xlu0.b32.cont [5/16] 0.0, 128
        %4540 = vxpose.xlu0.b32.cont [6/16] 0.0, 128
        %4541 = vxpose.xlu0.b32.cont [7/16] 0.0, 128
        %4542 = vxpose.xlu0.b32.cont [8/16] 0.0, 128
        %4543 = vxpose.xlu0.b32.cont [9/16] 0.0, 128
        %4544 = vxpose.xlu0.b32.cont [10/16] 0.0, 128
        %4545 = vxpose.xlu0.b32.cont [11/16] 0.0, 128
        %4546 = vxpose.xlu0.b32.cont [12/16] 0.0, 128
        %4547 = vxpose.xlu0.b32.cont [13/16] 0.0, 128
        %4548 = vxpose.xlu0.b32.cont [14/16] 0.0, 128
        %4549 = vxpose.xlu0.b32.cont [15/16] 0.0, 128
        %4550 = vxpose.xlu0.b32.end [16/16] 0.0, 128
        %v4551 = vpop.trf.xlu0
        %v4552 = vpop.trf.xlu0
        %v4553 = vpop.trf.xlu0
        %v4554 = vpop.trf.xlu0
        %v4555 = vpop.trf.xlu0
        %v4556 = vpop.trf.xlu0
        %v4557 = vpop.trf.xlu0
        %v4558 = vpop.trf.xlu0
        %v4559 = vpop.trf.xlu0
        %v4560 = vpop.trf.xlu0
        %v4561 = vpop.trf.xlu0
        %v4562 = vpop.trf.xlu0
        %v4563 = vpop.trf.xlu0
        %v4564 = vpop.trf.xlu0
        %v4565 = vpop.trf.xlu0
        %v4566 = vpop.trf.xlu0
        %4567 = vxpose.xlu0.b32.start [1/16] %v4452, 128
        %4568 = vxpose.xlu0.b32.cont [2/16] 0.0, 128
        %4569 = vxpose.xlu0.b32.cont [3/16] 0.0, 128
        %4570 = vxpose.xlu0.b32.cont [4/16] 0.0, 128
        %4571 = vxpose.xlu0.b32.cont [5/16] 0.0, 128
        %4572 = vxpose.xlu0.b32.cont [6/16] 0.0, 128
        %4573 = vxpose.xlu0.b32.cont [7/16] 0.0, 128
        %4574 = vxpose.xlu0.b32.cont [8/16] 0.0, 128
        %4575 = vxpose.xlu0.b32.cont [9/16] 0.0, 128
        %4576 = vxpose.xlu0.b32.cont [10/16] 0.0, 128
        %4577 = vxpose.xlu0.b32.cont [11/16] 0.0, 128
        %4578 = vxpose.xlu0.b32.cont [12/16] 0.0, 128
        %4579 = vxpose.xlu0.b32.cont [13/16] 0.0, 128
        %4580 = vxpose.xlu0.b32.cont [14/16] 0.0, 128
        %4581 = vxpose.xlu0.b32.cont [15/16] 0.0, 128
        %4582 = vxpose.xlu0.b32.end [16/16] 0.0, 128
        %v4583 = vpop.trf.xlu0
        %v4584 = vpop.trf.xlu0
        %v4585 = vpop.trf.xlu0
        %v4586 = vpop.trf.xlu0
        %v4587 = vpop.trf.xlu0
        %v4588 = vpop.trf.xlu0
        %v4589 = vpop.trf.xlu0
        %v4590 = vpop.trf.xlu0
        %v4591 = vpop.trf.xlu0
        %v4592 = vpop.trf.xlu0
        %v4593 = vpop.trf.xlu0
        %v4594 = vpop.trf.xlu0
        %v4595 = vpop.trf.xlu0
        %v4596 = vpop.trf.xlu0
        %v4597 = vpop.trf.xlu0
        %v4598 = vpop.trf.xlu0
        %4599 = vxpose.xlu0.b32.start [1/16] %v4498, 128
        %4600 = vxpose.xlu0.b32.cont [2/16] 0.0, 128
        %4601 = vxpose.xlu0.b32.cont [3/16] 0.0, 128
        %4602 = vxpose.xlu0.b32.cont [4/16] 0.0, 128
        %4603 = vxpose.xlu0.b32.cont [5/16] 0.0, 128
        %4604 = vxpose.xlu0.b32.cont [6/16] 0.0, 128
        %4605 = vxpose.xlu0.b32.cont [7/16] 0.0, 128
        %4606 = vxpose.xlu0.b32.cont [8/16] 0.0, 128
        %4607 = vxpose.xlu0.b32.cont [9/16] 0.0, 128
        %4608 = vxpose.xlu0.b32.cont [10/16] 0.0, 128
        %4609 = vxpose.xlu0.b32.cont [11/16] 0.0, 128
        %4610 = vxpose.xlu0.b32.cont [12/16] 0.0, 128
        %4611 = vxpose.xlu0.b32.cont [13/16] 0.0, 128
        %4612 = vxpose.xlu0.b32.cont [14/16] 0.0, 128
        %4613 = vxpose.xlu0.b32.cont [15/16] 0.0, 128
        %4614 = vxpose.xlu0.b32.end [16/16] 0.0, 128
        %v4615 = vpop.trf.xlu0
        %v4616 = vpop.trf.xlu0
        %v4617 = vpop.trf.xlu0
        %v4618 = vpop.trf.xlu0
        %v4619 = vpop.trf.xlu0
        %v4620 = vpop.trf.xlu0
        %v4621 = vpop.trf.xlu0
        %v4622 = vpop.trf.xlu0
        %v4623 = vpop.trf.xlu0
        %v4624 = vpop.trf.xlu0
        %v4625 = vpop.trf.xlu0
        %v4626 = vpop.trf.xlu0
        %v4627 = vpop.trf.xlu0
        %v4628 = vpop.trf.xlu0
        %v4629 = vpop.trf.xlu0
        %v4630 = vpop.trf.xlu0
        %v4631 = vcombine.low %v4519, %v4583
        %v4632 = vcombine.high %v4519, %v4583
        %v4634 = vunpack.c.l.s4 1983009808
        %v4635 = vunpack.c.0.s8 %v4634
        %v4636 = vlaneseq
        %v4637 = vshrl.u32 %v4636, 7
        %v4638 = vsub.s32 %v4635, %v4637
        %v4639 = vrot.slane %v4631, %v4638
        %v4641 = vunpack.c.l.s4 1983009808
        %v4642 = vunpack.c.0.s8 %v4641
        %v4643 = vlaneseq
        %v4644 = vshrl.u32 %v4643, 7
        %v4645 = vsub.s32 %v4642, %v4644
        %v4646 = vrot.slane %v4632, %v4645
        %v4647 = vcombine.low %v4551, %v4615
        %v4648 = vcombine.high %v4551, %v4615
        %v4650 = vunpack.c.l.s4 1983009808
        %v4651 = vunpack.c.0.s8 %v4650
        %v4652 = vlaneseq
        %v4653 = vshrl.u32 %v4652, 7
        %v4654 = vsub.s32 %v4651, %v4653
        %v4655 = vrot.slane %v4647, %v4654
        %v4657 = vunpack.c.l.s4 1983009808
        %v4658 = vunpack.c.0.s8 %v4657
        %v4659 = vlaneseq
        %v4660 = vshrl.u32 %v4659, 7
        %v4661 = vsub.s32 %v4658, %v4660
        %v4662 = vrot.slane %v4648, %v4661
        %v4663 = vcombine.low %v4639, %v4655
        %v4664 = vcombine.high %v4639, %v4655
        %v4666 = vunpack.c.l.s4 1934713408
        %v4667 = vunpack.c.0.s8 %v4666
        %v4668 = vlaneseq
        %v4669 = vshrl.u32 %v4668, 7
        %v4670 = vsub.s32 %v4667, %v4669
        %v4671 = vrot.slane %v4663, %v4670
        %v4673 = vunpack.c.l.s4 1934713408
        %v4674 = vunpack.c.0.s8 %v4673
        %v4675 = vlaneseq
        %v4676 = vshrl.u32 %v4675, 7
        %v4677 = vsub.s32 %v4674, %v4676
        %v4678 = vrot.slane %v4664, %v4677
        %v4679 = vcombine.low %v4646, %v4662
        %v4680 = vcombine.high %v4646, %v4662
        %v4682 = vunpack.c.l.s4 1934713408
        %v4683 = vunpack.c.0.s8 %v4682
        %v4684 = vlaneseq
        %v4685 = vshrl.u32 %v4684, 7
        %v4686 = vsub.s32 %v4683, %v4685
        %v4687 = vrot.slane %v4679, %v4686
        %v4689 = vunpack.c.l.s4 1934713408
        %v4690 = vunpack.c.0.s8 %v4689
        %v4691 = vlaneseq
        %v4692 = vshrl.u32 %v4691, 7
        %v4693 = vsub.s32 %v4690, %v4692
        %v4694 = vrot.slane %v4680, %v4693
        %v4695 = vcombine.high %v4671, 0.0
        %v4696 = vcombine.high %v4678, 0.0
        %v4697 = vcombine.high %v4687, 0.0
        %v4698 = vcombine.high %v4694, 0.0
        %v4699 = vcombine.low %v4671, %v4678
        %v4701 = vunpack.c.l.s4 1983009808
        %v4702 = vunpack.c.0.s8 %v4701
        %v4703 = vlaneseq
        %v4704 = vshrl.u32 %v4703, 7
        %v4705 = vsub.s32 %v4702, %v4704
        %v4706 = vrot.slane %v4699, %v4705
        %v4707 = vcombine.low %v4695, %v4696
        %v4709 = vunpack.c.l.s4 1983009808
        %v4710 = vunpack.c.0.s8 %v4709
        %v4711 = vlaneseq
        %v4712 = vshrl.u32 %v4711, 7
        %v4713 = vsub.s32 %v4710, %v4712
        %v4714 = vrot.slane %v4707, %v4713
        %v4715 = vcombine.low %v4687, %v4694
        %v4717 = vunpack.c.l.s4 1983009808
        %v4718 = vunpack.c.0.s8 %v4717
        %v4719 = vlaneseq
        %v4720 = vshrl.u32 %v4719, 7
        %v4721 = vsub.s32 %v4718, %v4720
        %v4722 = vrot.slane %v4715, %v4721
        %v4723 = vcombine.low %v4697, %v4698
        %v4725 = vunpack.c.l.s4 1983009808
        %v4726 = vunpack.c.0.s8 %v4725
        %v4727 = vlaneseq
        %v4728 = vshrl.u32 %v4727, 7
        %v4729 = vsub.s32 %v4726, %v4728
        %v4730 = vrot.slane %v4723, %v4729
        %v4731 = vcombine.low %v4706, %v4714
        %v4732 = vcombine.high %v4706, %v4714
        %v4734 = vunpack.c.l.s4 1934713408
        %v4735 = vunpack.c.0.s8 %v4734
        %v4736 = vlaneseq
        %v4737 = vshrl.u32 %v4736, 7
        %v4738 = vsub.s32 %v4735, %v4737
        %v4739 = vrot.slane %v4731, %v4738
        %v4741 = vunpack.c.l.s4 1934713408
        %v4742 = vunpack.c.0.s8 %v4741
        %v4743 = vlaneseq
        %v4744 = vshrl.u32 %v4743, 7
        %v4745 = vsub.s32 %v4742, %v4744
        %v4746 = vrot.slane %v4732, %v4745
        %v4747 = vcombine.low %v4722, %v4730
        %v4748 = vcombine.high %v4722, %v4730
        %v4750 = vunpack.c.l.s4 1934713408
        %v4751 = vunpack.c.0.s8 %v4750
        %v4752 = vlaneseq
        %v4753 = vshrl.u32 %v4752, 7
        %v4754 = vsub.s32 %v4751, %v4753
        %v4755 = vrot.slane %v4747, %v4754
        %v4757 = vunpack.c.l.s4 1934713408
        %v4758 = vunpack.c.0.s8 %v4757
        %v4759 = vlaneseq
        %v4760 = vshrl.u32 %v4759, 7
        %v4761 = vsub.s32 %v4758, %v4760
        %v4762 = vrot.slane %v4748, %v4761
        %v4763 = vcombine.low %v4739, %v4755
        %v4764 = vcombine.high %v4739, %v4755
        %v4765 = vcombine.low %v4746, %v4762
        %v4766 = vcombine.high %v4746, %v4762
        %4768 = vrot.lane.b32.xlu0 %v4764, 8
        %v4769 = vpop.permute.xlu0 %4768
        %4772 = vrot.lane.b32.xlu0 %v4765, 16
        %v4773 = vpop.permute.xlu0 %4772
        %4776 = vrot.lane.b32.xlu0 %v4766, 24
        %v4777 = vpop.permute.xlu0 %4776
        %v4779 = vsel %vm1448, %v4763, %v4769
        %v4780 = vsel %vm2561, %v4779, %v4773
        %v4781 = vsel %vm2563, %v4780, %v4777
        %v4782 = vpack.c.bf16 %v4781, %v4781
        %s4783 = scalar_lea.vmem %s7, 16
        %v4784 = vld [vmem:[%s4783] sm:$0xf]
        %v4785 = vld [vmem:[%s4783 + $0x4] sm:$0xf]
        %v4786 = vld [vmem:[%s4783 + $0x8] sm:$0xf]
        %v4787 = vld [vmem:[%s4783 + $0xc] sm:$0xf]
        %s4788 = scalar_lea.vmem %s8, 1
        %v4789 = vld [vmem:[%s4788] sm:$0x1]
        %v4791 = vlaneseq
        %v4792 = vshrl.u32 %v4791, 7
        %v4793 = vsub.s32 0, %v4792
        %v4794 = vrot.slane %v4789, %v4793
        %v4800 = vunpack.c.l.b16 %v4784
        %v4801 = vunpack.c.l.b16 %v4785
        %v4802 = vunpack.c.l.b16 %v4786
        %v4803 = vunpack.c.l.b16 %v4787
        %v4804 = vpack.c.b16 %v4801, %v4800
        %v4805 = vpack.c.b16 %v4803, %v4802
        %v4809 = vsel %vm648, %v4782, 0
        %4811 = vmatprep.subr.bf16.mxu0 0
        %4812 = vmatpush1.bf16.msra.mxu0 0
        %4813 = vmatprep.subr.bf16.mxu0 0
        %4814 = vmatpush1.bf16.msra.mxu0 0
        %4815 = vmatprep.subr.bf16.mxu0 0
        %4816 = vmatpush1.bf16.msra.mxu0 0
        %4817 = vmatprep.subr.bf16.mxu0 0
        %4818 = vmatpush1.bf16.msra.mxu0 0
        %4819 = vmatprep.subr.bf16.mxu0 0
        %4820 = vmatpush1.bf16.msra.mxu0 0
        %4821 = vmatprep.subr.bf16.mxu0 0
        %4822 = vmatpush1.bf16.msra.mxu0 0
        %4823 = vmatprep.subr.bf16.mxu0 0
        %4824 = vmatpush1.bf16.msra.mxu0 %v4805
        %4825 = vmatprep.subr.bf16.mxu0 0
        %4826 = vmatpush1.bf16.msra.mxu0 %v4804
        %4827 = vmatprep.subr.bf16.mxu0 0
        %4828 = vmatpush2.bf16.msra.mxu0 0
        %4829 = vmatprep.subr.bf16.mxu0 0
        %4830 = vmatpush2.bf16.msra.mxu0 0
        %4831 = vmatprep.subr.bf16.mxu0 0
        %4832 = vmatpush2.bf16.msra.mxu0 0
        %4833 = vmatprep.subr.bf16.mxu0 0
        %4834 = vmatpush2.bf16.msra.mxu0 0
        %4835 = vmatprep.subr.bf16.mxu0 0
        %4836 = vmatpush2.bf16.msra.mxu0 0
        %4837 = vmatprep.subr.bf16.mxu0 0
        %4838 = vmatpush2.bf16.msra.mxu0 0
        %4839 = vmatprep.subr.bf16.mxu0 0
        %4840 = vmatpush2.bf16.msra.mxu0 0
        %4841 = vmatprep.subr.bf16.mxu0 0
        %4842 = vmatpush2.bf16.msra.mxu0 0
        %4843 = vmatprep.mubr.bf16.mxu0 0
        %4844 = vmatmul.mubr.bf16.gmra.mxu0 %v4809
        %v4845 = vpop.f32.mrf.mxu0
        %v4846 = vadd.f32 %v4794, %v4845
        %v4847 = vpop.f32.mrf.mxu0
        %v4848 = vpop.f32.mrf.mxu0
        %v4849 = vpop.f32.mrf.mxu0
        %4850 = vdwg.mxu0
        %v4851 = vadd.f32 %v4846, %v2821
        %s4852 = scalar_lea.vmem %s9, 2
        %v4853 = vld [vmem:[%s4852] sm:$0x3]
        %v4854 = vsel %vm648, %v4851, 0.0
        %4855 = vadd.xlane.f32.xlu0 %v4854
        %v4856 = vpop.xlane.xlu0 %4855
        %v4857 = vmul.f32 %v4856, %v2637
        %v4858 = vmul.f32 %v4851, %v4851
        %v4859 = vsel %vm648, %v4858, 0.0
        %4860 = vadd.xlane.f32.xlu0 %v4859
        %v4861 = vpop.xlane.xlu0 %4860
        %v4862 = vmul.f32 %v4861, %v2637
        %v4863 = vmul.f32 %v4857, %v4857
        %v4864 = vsub.f32 %v4862, %v4863
        %v4865 = vmax.f32 %v4864, 0.0
        %v4866 = vsub.f32 %v4851, %v4857
        %v4867 = vadd.f32 %v4865, 1e-06
        %v4868 = vrsqrt.pop %v4867
        %v4869 = vmul.f32 %v4866, %v4868
        %v4870 = vlaneseq
        %v4871 = vshrl.u32 %v4870, 7
        %v4872 = vsub.s32 0, %v4871
        %v4873 = vrot.slane %v4853, %v4872
        %v4874 = vmul.f32 %v4869, %v4873
        %v4875 = vlaneseq
        %v4876 = vshrl.u32 %v4875, 7
        %v4877 = vsub.s32 1, %v4876
        %v4878 = vrot.slane %v4853, %v4877
        %v4879 = vadd.f32 %v4874, %v4878
        %v4880 = vpack.c.bf16 %v4879, %v4879
        %s4881 = scalar_lea.vmem %s10, 16
        %v4882 = vld [vmem:[%s4881] sm:$0xf]
        %v4883 = vld [vmem:[%s4881 + $0x4] sm:$0xf]
        %v4884 = vld [vmem:[%s4881 + $0x8] sm:$0xf]
        %v4885 = vld [vmem:[%s4881 + $0xc] sm:$0xf]
        %s4886 = scalar_lea.vmem %s11, 1
        %v4887 = vld [vmem:[%s4886] sm:$0x1]
        %v4889 = vlaneseq
        %v4890 = vshrl.u32 %v4889, 7
        %v4891 = vsub.s32 0, %v4890
        %v4892 = vrot.slane %v4887, %v4891
        %v4898 = vunpack.c.l.b16 %v4882
        %v4899 = vunpack.c.l.b16 %v4883
        %v4900 = vunpack.c.l.b16 %v4884
        %v4901 = vunpack.c.l.b16 %v4885
        %v4902 = vpack.c.b16 %v4899, %v4898
        %v4903 = vpack.c.b16 %v4901, %v4900
        %v4907 = vsel %vm648, %v4880, 0
        %4909 = vmatprep.subr.bf16.mxu0 0
        %4910 = vmatpush1.bf16.msra.mxu0 0
        %4911 = vmatprep.subr.bf16.mxu0 0
        %4912 = vmatpush1.bf16.msra.mxu0 0
        %4913 = vmatprep.subr.bf16.mxu0 0
        %4914 = vmatpush1.bf16.msra.mxu0 0
        %4915 = vmatprep.subr.bf16.mxu0 0
        %4916 = vmatpush1.bf16.msra.mxu0 0
        %4917 = vmatprep.subr.bf16.mxu0 0
        %4918 = vmatpush1.bf16.msra.mxu0 0
        %4919 = vmatprep.subr.bf16.mxu0 0
        %4920 = vmatpush1.bf16.msra.mxu0 0
        %4921 = vmatprep.subr.bf16.mxu0 0
        %4922 = vmatpush1.bf16.msra.mxu0 %v4903
        %4923 = vmatprep.subr.bf16.mxu0 0
        %4924 = vmatpush1.bf16.msra.mxu0 %v4902
        %4925 = vmatprep.subr.bf16.mxu0 0
        %4926 = vmatpush2.bf16.msra.mxu0 0
        %4927 = vmatprep.subr.bf16.mxu0 0
        %4928 = vmatpush2.bf16.msra.mxu0 0
        %4929 = vmatprep.subr.bf16.mxu0 0
        %4930 = vmatpush2.bf16.msra.mxu0 0
        %4931 = vmatprep.subr.bf16.mxu0 0
        %4932 = vmatpush2.bf16.msra.mxu0 0
        %4933 = vmatprep.subr.bf16.mxu0 0
        %4934 = vmatpush2.bf16.msra.mxu0 0
        %4935 = vmatprep.subr.bf16.mxu0 0
        %4936 = vmatpush2.bf16.msra.mxu0 0
        %4937 = vmatprep.subr.bf16.mxu0 0
        %4938 = vmatpush2.bf16.msra.mxu0 0
        %4939 = vmatprep.subr.bf16.mxu0 0
        %4940 = vmatpush2.bf16.msra.mxu0 0
        %4941 = vmatprep.mubr.bf16.mxu0 0
        %4942 = vmatmul.mubr.bf16.gmra.mxu0 %v4907
        %v4943 = vpop.f32.mrf.mxu0
        %v4944 = vadd.f32 %v4892, %v4943
        %v4945 = vpop.f32.mrf.mxu0
        %v4946 = vpop.f32.mrf.mxu0
        %v4947 = vpop.f32.mrf.mxu0
        %4948 = vdwg.mxu0
        %v4949 = vmul.f32 %v4944, 0.5
        %v4950 = vmul.f32 %v4944, 0.044715
        %v4951 = vmul.f32 %v4950, %v4944
        %v4952 = vmul.f32 %v4951, %v4944
        %v4953 = vadd.f32 %v4944, %v4952
        %v4954 = vmul.f32 %v4953, 0.7978846
        %v4955 = vtanh.pop %v4954
        %v4956 = vadd.f32 %v4955, 1.0
        %v4957 = vmul.f32 %v4949, %v4956
        %v4958 = vpack.c.bf16 %v4957, %v4957
        %s4959 = scalar_lea.vmem %s12, 32
        %v4960 = vld [vmem:[%s4959] sm:$0xf]
        %v4961 = vld [vmem:[%s4959 + $0x4] sm:$0xf]
        %v4962 = vld [vmem:[%s4959 + $0x8] sm:$0xf]
        %v4963 = vld [vmem:[%s4959 + $0xc] sm:$0xf]
        %v4964 = vld [vmem:[%s4959 + $0x10] sm:$0xf]
        %v4965 = vld [vmem:[%s4959 + $0x14] sm:$0xf]
        %v4966 = vld [vmem:[%s4959 + $0x18] sm:$0xf]
        %v4967 = vld [vmem:[%s4959 + $0x1c] sm:$0xf]
        %s4968 = scalar_lea.vmem %s13, 1
        %v4969 = vld [vmem:[%s4968] sm:$0x1]
        %v4971 = vlaneseq
        %v4972 = vshrl.u32 %v4971, 7
        %v4973 = vsub.s32 0, %v4972
        %v4974 = vrot.slane %v4969, %v4973
        %v4984 = vunpack.c.l.b16 %v4960
        %v4985 = vunpack.c.l.b16 %v4961
        %v4986 = vunpack.c.l.b16 %v4962
        %v4987 = vunpack.c.l.b16 %v4963
        %v4988 = vunpack.c.l.b16 %v4964
        %v4989 = vunpack.c.l.b16 %v4965
        %v4990 = vunpack.c.l.b16 %v4966
        %v4991 = vunpack.c.l.b16 %v4967
        %v4992 = vpack.c.b16 %v4985, %v4984
        %v4993 = vpack.c.b16 %v4987, %v4986
        %v4994 = vpack.c.b16 %v4989, %v4988
        %v4995 = vpack.c.b16 %v4991, %v4990
        %v5001 = vsel %vm2777, %v4958, 0
        %5003 = vmatprep.subr.bf16.mxu0 0
        %5004 = vmatpush1.bf16.msra.mxu0 0
        %5005 = vmatprep.subr.bf16.mxu0 0
        %5006 = vmatpush1.bf16.msra.mxu0 0
        %5007 = vmatprep.subr.bf16.mxu0 0
        %5008 = vmatpush1.bf16.msra.mxu0 0
        %5009 = vmatprep.subr.bf16.mxu0 0
        %5010 = vmatpush1.bf16.msra.mxu0 0
        %5011 = vmatprep.subr.bf16.mxu0 0
        %5012 = vmatpush1.bf16.msra.mxu0 %v4995
        %5013 = vmatprep.subr.bf16.mxu0 0
        %5014 = vmatpush1.bf16.msra.mxu0 %v4994
        %5015 = vmatprep.subr.bf16.mxu0 0
        %5016 = vmatpush1.bf16.msra.mxu0 %v4993
        %5017 = vmatprep.subr.bf16.mxu0 0
        %5018 = vmatpush1.bf16.msra.mxu0 %v4992
        %5019 = vmatprep.subr.bf16.mxu0 0
        %5020 = vmatpush2.bf16.msra.mxu0 0
        %5021 = vmatprep.subr.bf16.mxu0 0
        %5022 = vmatpush2.bf16.msra.mxu0 0
        %5023 = vmatprep.subr.bf16.mxu0 0
        %5024 = vmatpush2.bf16.msra.mxu0 0
        %5025 = vmatprep.subr.bf16.mxu0 0
        %5026 = vmatpush2.bf16.msra.mxu0 0
        %5027 = vmatprep.subr.bf16.mxu0 0
        %5028 = vmatpush2.bf16.msra.mxu0 0
        %5029 = vmatprep.subr.bf16.mxu0 0
        %5030 = vmatpush2.bf16.msra.mxu0 0
        %5031 = vmatprep.subr.bf16.mxu0 0
        %5032 = vmatpush2.bf16.msra.mxu0 0
        %5033 = vmatprep.subr.bf16.mxu0 0
        %5034 = vmatpush2.bf16.msra.mxu0 0
        %5035 = vmatprep.mubr.bf16.mxu0 0
        %5036 = vmatmul.mubr.bf16.gmra.mxu0 %v5001
        %v5037 = vpop.f32.mrf.mxu0
        %v5038 = vadd.f32 %v4974, %v5037
        %v5039 = vpop.f32.mrf.mxu0
        %v5040 = vpop.f32.mrf.mxu0
        %v5041 = vpop.f32.mrf.mxu0
        %5042 = vdwg.mxu0
        %v5043 = vadd.f32 %v5038, %v4851
        %v5044 = vld [vmem:[%s14] sm:$0x3]
        %v5045 = vsel %vm648, %v5043, 0.0
        %5046 = vadd.xlane.f32.xlu0 %v5045
        %v5047 = vpop.xlane.xlu0 %5046
        %v5048 = vmul.f32 %v5047, %v2637
        %v5049 = vmul.f32 %v5043, %v5043
        %v5050 = vsel %vm648, %v5049, 0.0
        %5051 = vadd.xlane.f32.xlu0 %v5050
        %v5052 = vpop.xlane.xlu0 %5051
        %v5053 = vmul.f32 %v5052, %v2637
        %v5054 = vmul.f32 %v5048, %v5048
        %v5055 = vsub.f32 %v5053, %v5054
        %v5056 = vmax.f32 %v5055, 0.0
        %v5057 = vsub.f32 %v5043, %v5048
        %v5058 = vadd.f32 %v5056, 1e-06
        %v5059 = vrsqrt.pop %v5058
        %v5060 = vmul.f32 %v5057, %v5059
        %v5061 = vlaneseq
        %v5062 = vshrl.u32 %v5061, 7
        %v5063 = vsub.s32 0, %v5062
        %v5064 = vrot.slane %v5044, %v5063
        %v5065 = vmul.f32 %v5060, %v5064
        %v5066 = vlaneseq
        %v5067 = vshrl.u32 %v5066, 7
        %v5068 = vsub.s32 1, %v5067
        %v5069 = vrot.slane %v5044, %v5068
        %v5070 = vadd.f32 %v5065, %v5069
        %v5071 = vld [vmem:[%s15] sm:$0xff]
        %v5072 = vld [vmem:[%s15 + $0x8] sm:$0xff]
        %v5073 = vld [vmem:[%s15 + $0x10] sm:$0xff]
        %v5074 = vld [vmem:[%s15 + $0x18] sm:$0xff]
        %v5075 = vld [vmem:[#allocation2] sm:$0x1]
        %v5077 = vlaneseq
        %v5078 = vshrl.u32 %v5077, 7
        %v5079 = vsub.s32 0, %v5078
        %v5080 = vrot.slane %v5075, %v5079
        %v5083 = vsel %vm648, %v5070, 0
        %5085 = vmatprep.subr.mxu0 0.0
        %5086 = vmatpush1.msra.mxu0 0.0
        %5087 = vmatprep.subr.mxu0 0.0
        %5088 = vmatpush1.msra.mxu0 0.0
        %5089 = vmatprep.subr.mxu0 0.0
        %5090 = vmatpush1.msra.mxu0 0.0
        %5091 = vmatprep.subr.mxu0 0.0
        %5092 = vmatpush1.msra.mxu0 0.0
        %5093 = vmatprep.subr.mxu0 0.0
        %5094 = vmatpush1.msra.mxu0 0.0
        %5095 = vmatprep.subr.mxu0 0.0
        %5096 = vmatpush1.msra.mxu0 0.0
        %5097 = vmatprep.subr.mxu0 0.0
        %5098 = vmatpush1.msra.mxu0 0.0
        %5099 = vmatprep.subr.mxu0 0.0
        %5100 = vmatpush1.msra.mxu0 0.0
        %5101 = vmatprep.subr.mxu0 0.0
        %5102 = vmatpush1.msra.mxu0 0.0
        %5103 = vmatprep.subr.mxu0 0.0
        %5104 = vmatpush1.msra.mxu0 0.0
        %5105 = vmatprep.subr.mxu0 0.0
        %5106 = vmatpush1.msra.mxu0 0.0
        %5107 = vmatprep.subr.mxu0 0.0
        %5108 = vmatpush1.msra.mxu0 0.0
        %5109 = vmatprep.subr.mxu0 0.0
        %5110 = vmatpush1.msra.mxu0 %v5074
        %5111 = vmatprep.subr.mxu0 0.0
        %5112 = vmatpush1.msra.mxu0 %v5073
        %5113 = vmatprep.subr.mxu0 0.0
        %5114 = vmatpush1.msra.mxu0 %v5072
        %5115 = vmatprep.subr.mxu0 0.0
        %5116 = vmatpush1.msra.mxu0 %v5071
        %5117 = vmatprep.subr.mxu0 0.0
        %5118 = vmatpush2.msra.mxu0 0.0
        %5119 = vmatprep.subr.mxu0 0.0
        %5120 = vmatpush2.msra.mxu0 0.0
        %5121 = vmatprep.subr.mxu0 0.0
        %5122 = vmatpush2.msra.mxu0 0.0
        %5123 = vmatprep.subr.mxu0 0.0
        %5124 = vmatpush2.msra.mxu0 0.0
        %5125 = vmatprep.subr.mxu0 0.0
        %5126 = vmatpush2.msra.mxu0 0.0
        %5127 = vmatprep.subr.mxu0 0.0
        %5128 = vmatpush2.msra.mxu0 0.0
        %5129 = vmatprep.subr.mxu0 0.0
        %5130 = vmatpush2.msra.mxu0 0.0
        %5131 = vmatprep.subr.mxu0 0.0
        %5132 = vmatpush2.msra.mxu0 0.0
        %5133 = vmatprep.subr.mxu0 0.0
        %5134 = vmatpush2.msra.mxu0 0.0
        %5135 = vmatprep.subr.mxu0 0.0
        %5136 = vmatpush2.msra.mxu0 0.0
        %5137 = vmatprep.subr.mxu0 0.0
        %5138 = vmatpush2.msra.mxu0 0.0
        %5139 = vmatprep.subr.mxu0 0.0
        %5140 = vmatpush2.msra.mxu0 0.0
        %5141 = vmatprep.subr.mxu0 0.0
        %5142 = vmatpush2.msra.mxu0 0.0
        %5143 = vmatprep.subr.mxu0 0.0
        %5144 = vmatpush2.msra.mxu0 0.0
        %5145 = vmatprep.subr.mxu0 0.0
        %5146 = vmatpush2.msra.mxu0 0.0
        %5147 = vmatprep.subr.mxu0 0.0
        %5148 = vmatpush2.msra.mxu0 0.0
        %5149 = vmatprep.mubr.f32.mxu0 0.0
        %5150 = vmatmul.mubr.f32.gmra.mxu0 %v5083
        %v5151 = vpop.f32.mrf.mxu0
        %v5152 = vadd.f32 %v5080, %v5151
        %v5153 = vpop.f32.mrf.mxu0
        %5154 = vdwg.mxu0
        %v5155 = vsub.f32 0.0, %v5152
        %v5156 = vmul.f32 %v5155, 1.442695
        %v5157 = vpow.pop %v5156
        %v5158 = vadd.f32 %v5157, 1.0
        %v5159 = vrcp.pop %v5158
        %v5160 = vmul.f32 %v5159, %v613
        %vm5161 = vcmask 7168
        %5162 = vst.msk [vmem:[%s611] sm:$0xff] %vm5161, %v5160
        %p5163 = scmp.lt.s32.totalorder %s34, 1
        %s5164 = scalar_select %p5163, %s34, 1
        %s5165 = smul.addr %s5164, 8
        %s5166 = scalar_lea.vmem %s17, %s5165
        // Predicated region
        $region97: #{tpu_custom_call.1} parent=87 // pred_check
          %p5167 = pneg %p424
        $region98: #{tpu_custom_call.1} parent=87 // pred_check_branch
          %5169 = sbr.rel (%p5167) target = $region100
        $region99: #{tpu_custom_call.1} parent=87 // pred_region
          _
        $region100: #{tpu_custom_call.1} parent=87 // pred_fallthru
          _
      $region88: #{tpu_custom_call.1} parent=5 // pred_fallthru
        _
      %p5170 = scmp.le.s32.totalorder 2, %s29
      // Predicated region
      $region101: #{tpu_custom_call.1} parent=5 // pred_check
        %p5171 = pneg %p5170
      $region102: #{tpu_custom_call.1} parent=5 // pred_check_branch
        %5173 = sbr.rel (%p5171) target = $region104
      $region103: #{tpu_custom_call.1} parent=5 // pred_region
        %s5174 = ssub.s32 %s29, 2
        // Predicated region
        $region105: #{tpu_custom_call.1} parent=103 // pred_check
          %p5175 = pneg %p430
        $region106: #{tpu_custom_call.1} parent=103 // pred_check_branch
          %5177 = sbr.rel (%p5175) target = $region108
        $region107: #{tpu_custom_call.1} parent=103 // pred_region
          %p5178 = scmp.lt.s32.totalorder %s35, 1
          %s5179 = scalar_select %p5178, %s35, 1
          %s5180 = smul.addr %s5179, 8
          %s5181 = scalar_lea.vmem %s17, %s5180
        $region108: #{tpu_custom_call.1} parent=103 // pred_fallthru
          _
      $region104: #{tpu_custom_call.1} parent=5 // pred_fallthru
        _
    $region6: #{tpu_custom_call.1} parent=1 // loop_footer
      %s33 = sadd.s32 1, %s29
    $region7: #{tpu_custom_call.1} parent=1 // loop_footer_branch
      %28 = sbr.rel target = $region3
    $region8: #{tpu_custom_call.1} parent=1 // loop_exit
      _
    %5182 = vsyncpa [#allocation4], 1
    %s5183 = scalar_lea.sflag [#allocation4], 1
    %5184 = vsyncpa %s5183, 1
    %5185 = vsyncpa [#allocation6], 1

</llo_original>
